<compile_context>
chip_gen: v7x
topology: tpu7x:2x2x1
jax: 0.10.0
libtpu: 0.0.40
codegen_flags: <defaults>
</compile_context>

<pallas_src>
import jax
import jax.numpy as jnp
from jax.experimental import pallas as pl
from jax.experimental.pallas import tpu as pltpu

EPS = 1e-5


def fused_kernel(x159_ref, x153_ref, s_ref,
                 w1_ref, g1_ref, b1_ref,
                 w2_ref, g2_ref, b2_ref,
                 o_ref):
    # static spatial size (P = N*H*W)
    inv_p = 1.0 / float(x159_ref.shape[1])

    # ---- SE scale fused into the bf16 downcast of the activation (C,P) tile ----
    # y1 = W1 @ (s * x); the (C,P)=66K-elem activation must be downcast to bf16
    # for the MXU anyway, so the per-channel (C,1) scale rides along for free.
    xs = (x159_ref[...] * s_ref[...]).astype(jnp.bfloat16)      # (C, P) bf16

    # ---- conv2d53: 1x1 conv == channel matmul (bf16 MXU operands, f32 acc) ----
    y1 = jnp.dot(w1_ref[...], xs, preferred_element_type=jnp.float32)  # (C, P) f32

    # ---- batchnorm2d33: one-pass batch stats + fused multiply-add apply ----
    s1 = jnp.sum(y1, axis=1, keepdims=True)                     # (C, 1)
    q1 = jnp.sum(y1 * y1, axis=1, keepdims=True)                # (C, 1)
    m1 = s1 * inv_p
    v1 = q1 * inv_p - m1 * m1                                   # biased batch var
    sc1 = g1_ref[...] * jax.lax.rsqrt(v1 + EPS)
    bi1 = b1_ref[...] - m1 * sc1

    # ---- add residual + relu ----
    z = jnp.maximum(x153_ref[...] + (y1 * sc1 + bi1), 0.0)      # (C, P) f32

    # ---- conv2d54: 1x1 conv ----
    y2 = jnp.dot(w2_ref[...], z.astype(jnp.bfloat16),
                 preferred_element_type=jnp.float32)            # (C, P) f32

    # ---- batchnorm2d34 ----
    s2 = jnp.sum(y2, axis=1, keepdims=True)
    q2 = jnp.sum(y2 * y2, axis=1, keepdims=True)
    m2 = s2 * inv_p
    v2 = q2 * inv_p - m2 * m2
    sc2 = g2_ref[...] * jax.lax.rsqrt(v2 + EPS)
    bi2 = b2_ref[...] - m2 * sc2
    o_ref[...] = y2 * sc2 + bi2


def prepare_params(w1, g1, b1, w2, g2, b2):
    """One-time (parameter-init-time) conversion: conv weights cached as bf16
    (C,C), BN affine params as (C,1) f32. Not on the per-call path."""
    C = w1.shape[0]
    return (jnp.asarray(w1.reshape(C, C), jnp.bfloat16),
            jnp.asarray(g1.reshape(C, 1), jnp.float32),
            jnp.asarray(b1.reshape(C, 1), jnp.float32),
            jnp.asarray(w2.reshape(C, C), jnp.bfloat16),
            jnp.asarray(g2.reshape(C, 1), jnp.float32),
            jnp.asarray(b2.reshape(C, 1), jnp.float32))


@jax.jit
def fused_forward(x164, x159, x153, w1_bf, g1, b1, w2_bf, g2, b2):
    """Activations in NCHW f32 (PyTorch convention); params pre-prepared by
    prepare_params. Returns NCHW float32."""
    N, C, H, W = x159.shape
    assert N == 1, "module is defined for batch size 1"
    P = N * H * W

    # zero-copy views: NCHW (N=1) is already (C, H*W) row-major
    a159 = x159.reshape(C, P)
    a153 = x153.reshape(C, P)
    s_col = x164.reshape(C, 1)                                   # per input channel

    args = (a159, a153, s_col, w1_bf, g1, b1, w2_bf, g2, b2)

    vmem = pl.BlockSpec(memory_space=pltpu.MemorySpace.VMEM)
    out = pl.pallas_call(
        fused_kernel,
        out_shape=jax.ShapeDtypeStruct((C, P), jnp.float32),
        in_specs=[vmem] * len(args),
        out_specs=vmem,
    )(*args)
    return out.reshape(N, C, H, W)


def reference_forward(x164, x159, x153, w1, g1, b1, w2, g2, b2):
    """Pure-JAX full-f32 reference (true module semantics, NCHW)."""
    hi = jax.lax.Precision.HIGHEST

    def bn(x, g, b):
        m = jnp.mean(x, axis=(0, 2, 3), keepdims=True)
        v = jnp.mean((x - m) ** 2, axis=(0, 2, 3), keepdims=True)
        return (x - m) * jax.lax.rsqrt(v + EPS) * g.reshape(1, -1, 1, 1) \
            + b.reshape(1, -1, 1, 1)

    x165 = x164 * x159
    y1 = jnp.einsum('oc,nchw->nohw', w1.reshape(w1.shape[0], w1.shape[1]),
                    x165, precision=hi)
    y1 = bn(y1, g1, b1)
    z = jnp.maximum(x153 + y1, 0.0)
    y2 = jnp.einsum('oc,nchw->nohw', w2.reshape(w2.shape[0], w2.shape[1]),
                    z, precision=hi)
    return bn(y2, g2, b2)


if __name__ == "__main__":
    C, H, W = 336, 14, 14
    key = jax.random.PRNGKey(0)
    k = jax.random.split(key, 9)

    # inputs (match module's declared shapes)
    x164 = jax.random.normal(k[0], (1, C, 1, 1), jnp.float32)
    x159 = jax.random.normal(k[1], (1, C, H, W), jnp.float32)
    x153 = jax.random.normal(k[2], (1, C, H, W), jnp.float32)

    # deterministic parameters
    w1 = jax.random.normal(k[3], (C, C, 1, 1), jnp.float32) * 0.05   # conv2d53 weight
    g1 = 1.0 + 0.1 * jax.random.normal(k[4], (C,), jnp.float32)      # bn33 gamma
    b1 = 0.1 * jax.random.normal(k[5], (C,), jnp.float32)            # bn33 beta
    w2 = jax.random.normal(k[6], (C, C, 1, 1), jnp.float32) * 0.05   # conv2d54 weight
    g2 = 1.0 + 0.1 * jax.random.normal(k[7], (C,), jnp.float32)      # bn34 gamma
    b2 = 0.1 * jax.random.normal(k[8], (C,), jnp.float32)            # bn34 beta

    # parameter-init-time caching of bf16 weights / (C,1) BN params
    params = jax.block_until_ready(prepare_params(w1, g1, b1, w2, g2, b2))

    out = jax.block_until_ready(fused_forward(x164, x159, x153, *params))
    ref = jax.block_until_ready(
        reference_forward(x164, x159, x153, w1, g1, b1, w2, g2, b2))

    assert out.shape == (1, C, H, W), out.shape
    # bf16 MXU operands give ~1e-2 max abs deviation vs the full-f32/HIGHEST
    # reference at these unit-scale, BN-normalized outputs; tolerances below
    # leave ~4x margin while still catching any structural bug.
    max_err = float(jnp.max(jnp.abs(out - ref)))
    mean_err = float(jnp.mean(jnp.abs(out - ref)))
    assert max_err < 5e-2 and mean_err < 1e-2, (max_err, mean_err)
    print("KERNEL_OK")
</pallas_src>

<mosaic_0001>
module attributes {stable_mosaic.version = 11 : i64} {
  func.func @fused_kernel(%arg0: memref<336x196xf32, #tpu.memory_space<vmem>>, %arg1: memref<336x196xf32, #tpu.memory_space<vmem>>, %arg2: memref<336x1xf32, #tpu.memory_space<vmem>>, %arg3: memref<336x336xbf16, #tpu.memory_space<vmem>>, %arg4: memref<336x1xf32, #tpu.memory_space<vmem>>, %arg5: memref<336x1xf32, #tpu.memory_space<vmem>>, %arg6: memref<336x336xbf16, #tpu.memory_space<vmem>>, %arg7: memref<336x1xf32, #tpu.memory_space<vmem>>, %arg8: memref<336x1xf32, #tpu.memory_space<vmem>>, %arg9: memref<336x196xf32, #tpu.memory_space<vmem>>) attributes {dimension_semantics = [], scalar_prefetch = 0 : i64, scratch_operands = 0 : i64, tpu.core_type = #tpu.core_type<tc>} {
    %c0 = arith.constant 0 : index
    %c0_0 = arith.constant 0 : index
    %0 = vector.load %arg0[%c0, %c0_0] : memref<336x196xf32, #tpu.memory_space<vmem>>, vector<336x196xf32>
    %c0_1 = arith.constant 0 : index
    %c0_2 = arith.constant 0 : index
    %1 = vector.load %arg2[%c0_1, %c0_2] : memref<336x1xf32, #tpu.memory_space<vmem>>, vector<336x1xf32>
    %2 = vector.broadcast %1 : vector<336x1xf32> to vector<336x196xf32>
    %3 = arith.mulf %0, %2 : vector<336x196xf32>
    %4 = arith.truncf %3 : vector<336x196xf32> to vector<336x196xbf16>
    %c0_3 = arith.constant 0 : index
    %c0_4 = arith.constant 0 : index
    %5 = vector.load %arg3[%c0_3, %c0_4] : memref<336x336xbf16, #tpu.memory_space<vmem>>, vector<336x336xbf16>
    %cst = arith.constant dense<0.000000e+00> : vector<336x196xf32>
    %6 = tpu.matmul %5, %4, %cst {dimension_numbers = #tpu.dot_dimension_numbers<[1], [0], [0], [1], [0, 0, 1, 1], [], []>} : vector<336x336xbf16>, vector<336x196xbf16>, vector<336x196xf32> -> vector<336x196xf32>
    %cst_5 = arith.constant dense<0.000000e+00> : vector<336xf32>
    %7 = vector.multi_reduction <add>, %6, %cst_5 [1] : vector<336x196xf32> to vector<336xf32>
    %8 = vector.shape_cast %7 : vector<336xf32> to vector<336x1xf32>
    %9 = arith.mulf %6, %6 : vector<336x196xf32>
    %cst_6 = arith.constant dense<0.000000e+00> : vector<336xf32>
    %10 = vector.multi_reduction <add>, %9, %cst_6 [1] : vector<336x196xf32> to vector<336xf32>
    %11 = vector.shape_cast %10 : vector<336xf32> to vector<336x1xf32>
    %cst_7 = arith.constant 0.00510204071 : f32
    %12 = vector.broadcast %cst_7 : f32 to vector<336x1xf32>
    %13 = arith.mulf %8, %12 : vector<336x1xf32>
    %cst_8 = arith.constant 0.00510204071 : f32
    %14 = vector.broadcast %cst_8 : f32 to vector<336x1xf32>
    %15 = arith.mulf %11, %14 : vector<336x1xf32>
    %16 = arith.mulf %13, %13 : vector<336x1xf32>
    %17 = arith.subf %15, %16 : vector<336x1xf32>
    %c0_9 = arith.constant 0 : index
    %c0_10 = arith.constant 0 : index
    %18 = vector.load %arg4[%c0_9, %c0_10] : memref<336x1xf32, #tpu.memory_space<vmem>>, vector<336x1xf32>
    %cst_11 = arith.constant 9.99999974E-6 : f32
    %19 = vector.broadcast %cst_11 : f32 to vector<336x1xf32>
    %20 = arith.addf %17, %19 : vector<336x1xf32>
    %21 = math.rsqrt %20 : vector<336x1xf32>
    %22 = arith.mulf %18, %21 : vector<336x1xf32>
    %c0_12 = arith.constant 0 : index
    %c0_13 = arith.constant 0 : index
    %23 = vector.load %arg5[%c0_12, %c0_13] : memref<336x1xf32, #tpu.memory_space<vmem>>, vector<336x1xf32>
    %24 = arith.mulf %13, %22 : vector<336x1xf32>
    %25 = arith.subf %23, %24 : vector<336x1xf32>
    %c0_14 = arith.constant 0 : index
    %c0_15 = arith.constant 0 : index
    %26 = vector.load %arg1[%c0_14, %c0_15] : memref<336x196xf32, #tpu.memory_space<vmem>>, vector<336x196xf32>
    %27 = vector.broadcast %22 : vector<336x1xf32> to vector<336x196xf32>
    %28 = arith.mulf %6, %27 : vector<336x196xf32>
    %29 = vector.broadcast %25 : vector<336x1xf32> to vector<336x196xf32>
    %30 = arith.addf %28, %29 : vector<336x196xf32>
    %31 = arith.addf %26, %30 : vector<336x196xf32>
    %cst_16 = arith.constant 0.000000e+00 : f32
    %32 = vector.broadcast %cst_16 : f32 to vector<336x196xf32>
    %33 = arith.maximumf %31, %32 : vector<336x196xf32>
    %c0_17 = arith.constant 0 : index
    %c0_18 = arith.constant 0 : index
    %34 = vector.load %arg6[%c0_17, %c0_18] : memref<336x336xbf16, #tpu.memory_space<vmem>>, vector<336x336xbf16>
    %35 = arith.truncf %33 : vector<336x196xf32> to vector<336x196xbf16>
    %cst_19 = arith.constant dense<0.000000e+00> : vector<336x196xf32>
    %36 = tpu.matmul %34, %35, %cst_19 {dimension_numbers = #tpu.dot_dimension_numbers<[1], [0], [0], [1], [0, 0, 1, 1], [], []>} : vector<336x336xbf16>, vector<336x196xbf16>, vector<336x196xf32> -> vector<336x196xf32>
    %cst_20 = arith.constant dense<0.000000e+00> : vector<336xf32>
    %37 = vector.multi_reduction <add>, %36, %cst_20 [1] : vector<336x196xf32> to vector<336xf32>
    %38 = vector.shape_cast %37 : vector<336xf32> to vector<336x1xf32>
    %39 = arith.mulf %36, %36 : vector<336x196xf32>
    %cst_21 = arith.constant dense<0.000000e+00> : vector<336xf32>
    %40 = vector.multi_reduction <add>, %39, %cst_21 [1] : vector<336x196xf32> to vector<336xf32>
    %41 = vector.shape_cast %40 : vector<336xf32> to vector<336x1xf32>
    %cst_22 = arith.constant 0.00510204071 : f32
    %42 = vector.broadcast %cst_22 : f32 to vector<336x1xf32>
    %43 = arith.mulf %38, %42 : vector<336x1xf32>
    %cst_23 = arith.constant 0.00510204071 : f32
    %44 = vector.broadcast %cst_23 : f32 to vector<336x1xf32>
    %45 = arith.mulf %41, %44 : vector<336x1xf32>
    %46 = arith.mulf %43, %43 : vector<336x1xf32>
    %47 = arith.subf %45, %46 : vector<336x1xf32>
    %c0_24 = arith.constant 0 : index
    %c0_25 = arith.constant 0 : index
    %48 = vector.load %arg7[%c0_24, %c0_25] : memref<336x1xf32, #tpu.memory_space<vmem>>, vector<336x1xf32>
    %cst_26 = arith.constant 9.99999974E-6 : f32
    %49 = vector.broadcast %cst_26 : f32 to vector<336x1xf32>
    %50 = arith.addf %47, %49 : vector<336x1xf32>
    %51 = math.rsqrt %50 : vector<336x1xf32>
    %52 = arith.mulf %48, %51 : vector<336x1xf32>
    %c0_27 = arith.constant 0 : index
    %c0_28 = arith.constant 0 : index
    %53 = vector.load %arg8[%c0_27, %c0_28] : memref<336x1xf32, #tpu.memory_space<vmem>>, vector<336x1xf32>
    %54 = arith.mulf %43, %52 : vector<336x1xf32>
    %55 = arith.subf %53, %54 : vector<336x1xf32>
    %56 = vector.broadcast %52 : vector<336x1xf32> to vector<336x196xf32>
    %57 = arith.mulf %36, %56 : vector<336x196xf32>
    %58 = vector.broadcast %55 : vector<336x1xf32> to vector<336x196xf32>
    %59 = arith.addf %57, %58 : vector<336x196xf32>
    %c0_29 = arith.constant 0 : index
    %c0_30 = arith.constant 0 : index
    %60 = vector.load %arg9[%c0_29, %c0_30] : memref<336x196xf32, #tpu.memory_space<vmem>>, vector<336x196xf32>
    tpu.vector_store %arg9[%c0_29, %c0_30], %59 {strides = array<i32>} : memref<336x196xf32, #tpu.memory_space<vmem>>, vector<336x196xf32>,
    return
  }
}

</mosaic_0001>

<llo_original>
// kernel: fused_forward.1
$region0: #{fused_forward.1}
  #allocation0 [shape = 'u32[]', space=smem, size = 0x4, offset = 0x4, fixed_abs, tag = 'smem constant byte address 0x4 - core index']
  #allocation1 [shape = 'u32[144,128]{1,0:T(1,128)}', space=vmem, size = 0x12000, scoped, tag = 'internal scratch']
  %s0 = inlined_call_operand.vmem [shape: f32[336,196], index: 0, kind: input, shape index: {}]
  %s1 = inlined_call_operand.vmem [shape: f32[336,196], index: 1, kind: input, shape index: {}]
  %s2 = inlined_call_operand.vmem [shape: f32[336,1], index: 2, kind: input, shape index: {}]
  %s3 = inlined_call_operand.vmem [shape: bf16[336,336], index: 3, kind: input, shape index: {}]
  %s4 = inlined_call_operand.vmem [shape: f32[336,1], index: 4, kind: input, shape index: {}]
  %s5 = inlined_call_operand.vmem [shape: f32[336,1], index: 5, kind: input, shape index: {}]
  %s6 = inlined_call_operand.vmem [shape: bf16[336,336], index: 6, kind: input, shape index: {}]
  %s7 = inlined_call_operand.vmem [shape: f32[336,1], index: 7, kind: input, shape index: {}]
  %s8 = inlined_call_operand.vmem [shape: f32[336,1], index: 8, kind: input, shape index: {}]
  %s9 = inlined_call_operand.vmem [shape: f32[336,196], index: 9, kind: output, shape index: {}]
  %s10 = sld [smem:[#allocation0]]
  $region46: #{fused_forward.1} parent=0
    _
  %s12 = ssub.s32 1, %s10
  %s13 = scalar_select 0, %s12, %s10
  // Predicated region
  $region2: #{fused_forward.1} parent=0 // pred_check
    _
  $region3: #{fused_forward.1} parent=0 // pred_check_branch
    %15 = sbr.rel (0) target = $region5
  $region4: #{fused_forward.1} parent=0 // pred_region
    _
  $region5: #{fused_forward.1} parent=0 // pred_fallthru
    _
  // Predicated region
  $region6: #{fused_forward.1} parent=0 // pred_check
    _
  $region7: #{fused_forward.1} parent=0 // pred_check_branch
    %17 = sbr.rel (0) target = $region9
  $region8: #{fused_forward.1} parent=0 // pred_region
    _
  $region9: #{fused_forward.1} parent=0 // pred_fallthru
    _
  // Predicated region
  $region10: #{fused_forward.1} parent=0 // pred_check
    _
  $region11: #{fused_forward.1} parent=0 // pred_check_branch
    %19 = sbr.rel (0) target = $region13
  $region12: #{fused_forward.1} parent=0 // pred_region
    _
  $region13: #{fused_forward.1} parent=0 // pred_fallthru
    _
  // Predicated region
  $region14: #{fused_forward.1} parent=0 // pred_check
    _
  $region15: #{fused_forward.1} parent=0 // pred_check_branch
    %21 = sbr.rel (0) target = $region17
  $region16: #{fused_forward.1} parent=0 // pred_region
    _
  $region17: #{fused_forward.1} parent=0 // pred_fallthru
    _
  // Predicated region
  $region18: #{fused_forward.1} parent=0 // pred_check
    _
  $region19: #{fused_forward.1} parent=0 // pred_check_branch
    %23 = sbr.rel (0) target = $region21
  $region20: #{fused_forward.1} parent=0 // pred_region
    _
  $region21: #{fused_forward.1} parent=0 // pred_fallthru
    _
  // Predicated region
  $region22: #{fused_forward.1} parent=0 // pred_check
    _
  $region23: #{fused_forward.1} parent=0 // pred_check_branch
    %25 = sbr.rel (0) target = $region25
  $region24: #{fused_forward.1} parent=0 // pred_region
    _
  $region25: #{fused_forward.1} parent=0 // pred_fallthru
    _
  // Predicated region
  $region26: #{fused_forward.1} parent=0 // pred_check
    _
  $region27: #{fused_forward.1} parent=0 // pred_check_branch
    %27 = sbr.rel (0) target = $region29
  $region28: #{fused_forward.1} parent=0 // pred_region
    _
  $region29: #{fused_forward.1} parent=0 // pred_fallthru
    _
  // Predicated region
  $region30: #{fused_forward.1} parent=0 // pred_check
    _
  $region31: #{fused_forward.1} parent=0 // pred_check_branch
    %29 = sbr.rel (0) target = $region33
  $region32: #{fused_forward.1} parent=0 // pred_region
    _
  $region33: #{fused_forward.1} parent=0 // pred_fallthru
    _
  // Predicated region
  $region34: #{fused_forward.1} parent=0 // pred_check
    _
  $region35: #{fused_forward.1} parent=0 // pred_check_branch
    %31 = sbr.rel (0) target = $region37
  $region36: #{fused_forward.1} parent=0 // pred_region
    _
  $region37: #{fused_forward.1} parent=0 // pred_fallthru
    _
  %v33 = vld [vmem:[%s0] sm:$0xff]
  %v34 = vld [vmem:[%s0 + $0x8] sm:$0xff]
  %v35 = vld [vmem:[%s0 + $0x10] sm:$0xff]
  %v36 = vld [vmem:[%s0 + $0x18] sm:$0xff]
  %v37 = vld [vmem:[%s0 + $0x20] sm:$0xff]
  %v38 = vld [vmem:[%s0 + $0x28] sm:$0xff]
  %v39 = vld [vmem:[%s0 + $0x30] sm:$0xff]
  %v40 = vld [vmem:[%s0 + $0x38] sm:$0xff]
  %v41 = vld [vmem:[%s0 + $0x40] sm:$0xff]
  %v42 = vld [vmem:[%s0 + $0x48] sm:$0xff]
  %v43 = vld [vmem:[%s0 + $0x50] sm:$0xff]
  %v44 = vld [vmem:[%s0 + $0x58] sm:$0xff]
  %v45 = vld [vmem:[%s0 + $0x60] sm:$0xff]
  %v46 = vld [vmem:[%s0 + $0x68] sm:$0xff]
  %v47 = vld [vmem:[%s0 + $0x70] sm:$0xff]
  %v48 = vld [vmem:[%s0 + $0x78] sm:$0xff]
  %v49 = vld [vmem:[%s0 + $0x80] sm:$0xff]
  %v50 = vld [vmem:[%s0 + $0x88] sm:$0xff]
  %v51 = vld [vmem:[%s0 + $0x90] sm:$0xff]
  %v52 = vld [vmem:[%s0 + $0x98] sm:$0xff]
  %v53 = vld [vmem:[%s0 + $0xa0] sm:$0xff]
  %v54 = vld [vmem:[%s0 + $0xa8] sm:$0xff]
  %v55 = vld [vmem:[%s0 + $0xb0] sm:$0xff]
  %v56 = vld [vmem:[%s0 + $0xb8] sm:$0xff]
  %v57 = vld [vmem:[%s0 + $0xc0] sm:$0xff]
  %v58 = vld [vmem:[%s0 + $0xc8] sm:$0xff]
  %v59 = vld [vmem:[%s0 + $0xd0] sm:$0xff]
  %v60 = vld [vmem:[%s0 + $0xd8] sm:$0xff]
  %v61 = vld [vmem:[%s0 + $0xe0] sm:$0xff]
  %v62 = vld [vmem:[%s0 + $0xe8] sm:$0xff]
  %v63 = vld [vmem:[%s0 + $0xf0] sm:$0xff]
  %v64 = vld [vmem:[%s0 + $0xf8] sm:$0xff]
  %v65 = vld [vmem:[%s0 + $0x100] sm:$0xff]
  %v66 = vld [vmem:[%s0 + $0x108] sm:$0xff]
  %v67 = vld [vmem:[%s0 + $0x110] sm:$0xff]
  %v68 = vld [vmem:[%s0 + $0x118] sm:$0xff]
  %v69 = vld [vmem:[%s0 + $0x120] sm:$0xff]
  %v70 = vld [vmem:[%s0 + $0x128] sm:$0xff]
  %v71 = vld [vmem:[%s0 + $0x130] sm:$0xff]
  %v72 = vld [vmem:[%s0 + $0x138] sm:$0xff]
  %v73 = vld [vmem:[%s0 + $0x140] sm:$0xff]
  %v74 = vld [vmem:[%s0 + $0x148] sm:$0xff]
  %v75 = vld [vmem:[%s0 + $0x150] sm:$0xff]
  %v76 = vld [vmem:[%s0 + $0x158] sm:$0xff]
  %v77 = vld [vmem:[%s0 + $0x160] sm:$0xff]
  %v78 = vld [vmem:[%s0 + $0x168] sm:$0xff]
  %v79 = vld [vmem:[%s0 + $0x170] sm:$0xff]
  %v80 = vld [vmem:[%s0 + $0x178] sm:$0xff]
  %v81 = vld [vmem:[%s0 + $0x180] sm:$0xff]
  %v82 = vld [vmem:[%s0 + $0x188] sm:$0xff]
  %v83 = vld [vmem:[%s0 + $0x190] sm:$0xff]
  %v84 = vld [vmem:[%s0 + $0x198] sm:$0xff]
  %v85 = vld [vmem:[%s0 + $0x1a0] sm:$0xff]
  %v86 = vld [vmem:[%s0 + $0x1a8] sm:$0xff]
  %v87 = vld [vmem:[%s0 + $0x1b0] sm:$0xff]
  %v88 = vld [vmem:[%s0 + $0x1b8] sm:$0xff]
  %v89 = vld [vmem:[%s0 + $0x1c0] sm:$0xff]
  %v90 = vld [vmem:[%s0 + $0x1c8] sm:$0xff]
  %v91 = vld [vmem:[%s0 + $0x1d0] sm:$0xff]
  %v92 = vld [vmem:[%s0 + $0x1d8] sm:$0xff]
  %v93 = vld [vmem:[%s0 + $0x1e0] sm:$0xff]
  %v94 = vld [vmem:[%s0 + $0x1e8] sm:$0xff]
  %v95 = vld [vmem:[%s0 + $0x1f0] sm:$0xff]
  %v96 = vld [vmem:[%s0 + $0x1f8] sm:$0xff]
  %v97 = vld [vmem:[%s0 + $0x200] sm:$0xff]
  %v98 = vld [vmem:[%s0 + $0x208] sm:$0xff]
  %v99 = vld [vmem:[%s0 + $0x210] sm:$0xff]
  %v100 = vld [vmem:[%s0 + $0x218] sm:$0xff]
  %v101 = vld [vmem:[%s0 + $0x220] sm:$0xff]
  %v102 = vld [vmem:[%s0 + $0x228] sm:$0xff]
  %v103 = vld [vmem:[%s0 + $0x230] sm:$0xff]
  %v104 = vld [vmem:[%s0 + $0x238] sm:$0xff]
  %v105 = vld [vmem:[%s0 + $0x240] sm:$0xff]
  %v106 = vld [vmem:[%s0 + $0x248] sm:$0xff]
  %v107 = vld [vmem:[%s0 + $0x250] sm:$0xff]
  %v108 = vld [vmem:[%s0 + $0x258] sm:$0xff]
  %v109 = vld [vmem:[%s0 + $0x260] sm:$0xff]
  %v110 = vld [vmem:[%s0 + $0x268] sm:$0xff]
  %v111 = vld [vmem:[%s0 + $0x270] sm:$0xff]
  %v112 = vld [vmem:[%s0 + $0x278] sm:$0xff]
  %v113 = vld [vmem:[%s0 + $0x280] sm:$0xff]
  %v114 = vld [vmem:[%s0 + $0x288] sm:$0xff]
  %v115 = vld [vmem:[%s0 + $0x290] sm:$0xff]
  %v116 = vld [vmem:[%s0 + $0x298] sm:$0xff]
  %v117 = vld [vmem:[%s2] sm:$0xff]
  %v118 = vld [vmem:[%s2 + $0x8] sm:$0xff]
  %v119 = vld [vmem:[%s2 + $0x10] sm:$0xff]
  %v120 = vld [vmem:[%s2 + $0x18] sm:$0xff]
  %v121 = vld [vmem:[%s2 + $0x20] sm:$0xff]
  %v122 = vld [vmem:[%s2 + $0x28] sm:$0xff]
  %v123 = vld [vmem:[%s2 + $0x30] sm:$0xff]
  %v124 = vld [vmem:[%s2 + $0x38] sm:$0xff]
  %v125 = vld [vmem:[%s2 + $0x40] sm:$0xff]
  %v126 = vld [vmem:[%s2 + $0x48] sm:$0xff]
  %v127 = vld [vmem:[%s2 + $0x50] sm:$0xff]
  %v128 = vld [vmem:[%s2 + $0x58] sm:$0xff]
  %v129 = vld [vmem:[%s2 + $0x60] sm:$0xff]
  %v130 = vld [vmem:[%s2 + $0x68] sm:$0xff]
  %v131 = vld [vmem:[%s2 + $0x70] sm:$0xff]
  %v132 = vld [vmem:[%s2 + $0x78] sm:$0xff]
  %v133 = vld [vmem:[%s2 + $0x80] sm:$0xff]
  %v134 = vld [vmem:[%s2 + $0x88] sm:$0xff]
  %v135 = vld [vmem:[%s2 + $0x90] sm:$0xff]
  %v136 = vld [vmem:[%s2 + $0x98] sm:$0xff]
  %v137 = vld [vmem:[%s2 + $0xa0] sm:$0xff]
  %v138 = vld [vmem:[%s2 + $0xa8] sm:$0xff]
  %v139 = vld [vmem:[%s2 + $0xb0] sm:$0xff]
  %v140 = vld [vmem:[%s2 + $0xb8] sm:$0xff]
  %v141 = vld [vmem:[%s2 + $0xc0] sm:$0xff]
  %v142 = vld [vmem:[%s2 + $0xc8] sm:$0xff]
  %v143 = vld [vmem:[%s2 + $0xd0] sm:$0xff]
  %v144 = vld [vmem:[%s2 + $0xd8] sm:$0xff]
  %v145 = vld [vmem:[%s2 + $0xe0] sm:$0xff]
  %v146 = vld [vmem:[%s2 + $0xe8] sm:$0xff]
  %v147 = vld [vmem:[%s2 + $0xf0] sm:$0xff]
  %v148 = vld [vmem:[%s2 + $0xf8] sm:$0xff]
  %v149 = vld [vmem:[%s2 + $0x100] sm:$0xff]
  %v150 = vld [vmem:[%s2 + $0x108] sm:$0xff]
  %v151 = vld [vmem:[%s2 + $0x110] sm:$0xff]
  %v152 = vld [vmem:[%s2 + $0x118] sm:$0xff]
  %v153 = vld [vmem:[%s2 + $0x120] sm:$0xff]
  %v154 = vld [vmem:[%s2 + $0x128] sm:$0xff]
  %v155 = vld [vmem:[%s2 + $0x130] sm:$0xff]
  %v156 = vld [vmem:[%s2 + $0x138] sm:$0xff]
  %v157 = vld [vmem:[%s2 + $0x140] sm:$0xff]
  %v158 = vld [vmem:[%s2 + $0x148] sm:$0xff]
  %160 = vset.pattern.permute.xlu0 0
  %161 = vperm.xlu0 %160, %v117
  %v162 = vpop.permute.xlu0 %161
  %165 = vset.pattern.permute.xlu0 0
  %166 = vperm.xlu0 %165, %v118
  %v167 = vpop.permute.xlu0 %166
  %170 = vset.pattern.permute.xlu0 0
  %171 = vperm.xlu0 %170, %v119
  %v172 = vpop.permute.xlu0 %171
  %175 = vset.pattern.permute.xlu0 0
  %176 = vperm.xlu0 %175, %v120
  %v177 = vpop.permute.xlu0 %176
  %180 = vset.pattern.permute.xlu0 0
  %181 = vperm.xlu0 %180, %v121
  %v182 = vpop.permute.xlu0 %181
  %185 = vset.pattern.permute.xlu0 0
  %186 = vperm.xlu0 %185, %v122
  %v187 = vpop.permute.xlu0 %186
  %190 = vset.pattern.permute.xlu0 0
  %191 = vperm.xlu0 %190, %v123
  %v192 = vpop.permute.xlu0 %191
  %195 = vset.pattern.permute.xlu0 0
  %196 = vperm.xlu0 %195, %v124
  %v197 = vpop.permute.xlu0 %196
  %200 = vset.pattern.permute.xlu0 0
  %201 = vperm.xlu0 %200, %v125
  %v202 = vpop.permute.xlu0 %201
  %205 = vset.pattern.permute.xlu0 0
  %206 = vperm.xlu0 %205, %v126
  %v207 = vpop.permute.xlu0 %206
  %210 = vset.pattern.permute.xlu0 0
  %211 = vperm.xlu0 %210, %v127
  %v212 = vpop.permute.xlu0 %211
  %215 = vset.pattern.permute.xlu0 0
  %216 = vperm.xlu0 %215, %v128
  %v217 = vpop.permute.xlu0 %216
  %220 = vset.pattern.permute.xlu0 0
  %221 = vperm.xlu0 %220, %v129
  %v222 = vpop.permute.xlu0 %221
  %225 = vset.pattern.permute.xlu0 0
  %226 = vperm.xlu0 %225, %v130
  %v227 = vpop.permute.xlu0 %226
  %230 = vset.pattern.permute.xlu0 0
  %231 = vperm.xlu0 %230, %v131
  %v232 = vpop.permute.xlu0 %231
  %235 = vset.pattern.permute.xlu0 0
  %236 = vperm.xlu0 %235, %v132
  %v237 = vpop.permute.xlu0 %236
  %240 = vset.pattern.permute.xlu0 0
  %241 = vperm.xlu0 %240, %v133
  %v242 = vpop.permute.xlu0 %241
  %245 = vset.pattern.permute.xlu0 0
  %246 = vperm.xlu0 %245, %v134
  %v247 = vpop.permute.xlu0 %246
  %250 = vset.pattern.permute.xlu0 0
  %251 = vperm.xlu0 %250, %v135
  %v252 = vpop.permute.xlu0 %251
  %255 = vset.pattern.permute.xlu0 0
  %256 = vperm.xlu0 %255, %v136
  %v257 = vpop.permute.xlu0 %256
  %260 = vset.pattern.permute.xlu0 0
  %261 = vperm.xlu0 %260, %v137
  %v262 = vpop.permute.xlu0 %261
  %265 = vset.pattern.permute.xlu0 0
  %266 = vperm.xlu0 %265, %v138
  %v267 = vpop.permute.xlu0 %266
  %270 = vset.pattern.permute.xlu0 0
  %271 = vperm.xlu0 %270, %v139
  %v272 = vpop.permute.xlu0 %271
  %275 = vset.pattern.permute.xlu0 0
  %276 = vperm.xlu0 %275, %v140
  %v277 = vpop.permute.xlu0 %276
  %280 = vset.pattern.permute.xlu0 0
  %281 = vperm.xlu0 %280, %v141
  %v282 = vpop.permute.xlu0 %281
  %285 = vset.pattern.permute.xlu0 0
  %286 = vperm.xlu0 %285, %v142
  %v287 = vpop.permute.xlu0 %286
  %290 = vset.pattern.permute.xlu0 0
  %291 = vperm.xlu0 %290, %v143
  %v292 = vpop.permute.xlu0 %291
  %295 = vset.pattern.permute.xlu0 0
  %296 = vperm.xlu0 %295, %v144
  %v297 = vpop.permute.xlu0 %296
  %300 = vset.pattern.permute.xlu0 0
  %301 = vperm.xlu0 %300, %v145
  %v302 = vpop.permute.xlu0 %301
  %305 = vset.pattern.permute.xlu0 0
  %306 = vperm.xlu0 %305, %v146
  %v307 = vpop.permute.xlu0 %306
  %310 = vset.pattern.permute.xlu0 0
  %311 = vperm.xlu0 %310, %v147
  %v312 = vpop.permute.xlu0 %311
  %315 = vset.pattern.permute.xlu0 0
  %316 = vperm.xlu0 %315, %v148
  %v317 = vpop.permute.xlu0 %316
  %320 = vset.pattern.permute.xlu0 0
  %321 = vperm.xlu0 %320, %v149
  %v322 = vpop.permute.xlu0 %321
  %325 = vset.pattern.permute.xlu0 0
  %326 = vperm.xlu0 %325, %v150
  %v327 = vpop.permute.xlu0 %326
  %330 = vset.pattern.permute.xlu0 0
  %331 = vperm.xlu0 %330, %v151
  %v332 = vpop.permute.xlu0 %331
  %335 = vset.pattern.permute.xlu0 0
  %336 = vperm.xlu0 %335, %v152
  %v337 = vpop.permute.xlu0 %336
  %340 = vset.pattern.permute.xlu0 0
  %341 = vperm.xlu0 %340, %v153
  %v342 = vpop.permute.xlu0 %341
  %345 = vset.pattern.permute.xlu0 0
  %346 = vperm.xlu0 %345, %v154
  %v347 = vpop.permute.xlu0 %346
  %350 = vset.pattern.permute.xlu0 0
  %351 = vperm.xlu0 %350, %v155
  %v352 = vpop.permute.xlu0 %351
  %355 = vset.pattern.permute.xlu0 0
  %356 = vperm.xlu0 %355, %v156
  %v357 = vpop.permute.xlu0 %356
  %360 = vset.pattern.permute.xlu0 0
  %361 = vperm.xlu0 %360, %v157
  %v362 = vpop.permute.xlu0 %361
  %365 = vset.pattern.permute.xlu0 0
  %366 = vperm.xlu0 %365, %v158
  %v367 = vpop.permute.xlu0 %366
  %v369 = vmul.f32 %v33, %v162
  %v370 = vmul.f32 %v34, %v162
  %v371 = vmul.f32 %v35, %v167
  %v372 = vmul.f32 %v36, %v167
  %v373 = vmul.f32 %v37, %v172
  %v374 = vmul.f32 %v38, %v172
  %v375 = vmul.f32 %v39, %v177
  %v376 = vmul.f32 %v40, %v177
  %v377 = vmul.f32 %v41, %v182
  %v378 = vmul.f32 %v42, %v182
  %v379 = vmul.f32 %v43, %v187
  %v380 = vmul.f32 %v44, %v187
  %v381 = vmul.f32 %v45, %v192
  %v382 = vmul.f32 %v46, %v192
  %v383 = vmul.f32 %v47, %v197
  %v384 = vmul.f32 %v48, %v197
  %v385 = vmul.f32 %v49, %v202
  %v386 = vmul.f32 %v50, %v202
  %v387 = vmul.f32 %v51, %v207
  %v388 = vmul.f32 %v52, %v207
  %v389 = vmul.f32 %v53, %v212
  %v390 = vmul.f32 %v54, %v212
  %v391 = vmul.f32 %v55, %v217
  %v392 = vmul.f32 %v56, %v217
  %v393 = vmul.f32 %v57, %v222
  %v394 = vmul.f32 %v58, %v222
  %v395 = vmul.f32 %v59, %v227
  %v396 = vmul.f32 %v60, %v227
  %v397 = vmul.f32 %v61, %v232
  %v398 = vmul.f32 %v62, %v232
  %v399 = vmul.f32 %v63, %v237
  %v400 = vmul.f32 %v64, %v237
  %v401 = vmul.f32 %v65, %v242
  %v402 = vmul.f32 %v66, %v242
  %v403 = vmul.f32 %v67, %v247
  %v404 = vmul.f32 %v68, %v247
  %v405 = vmul.f32 %v69, %v252
  %v406 = vmul.f32 %v70, %v252
  %v407 = vmul.f32 %v71, %v257
  %v408 = vmul.f32 %v72, %v257
  %v409 = vmul.f32 %v73, %v262
  %v410 = vmul.f32 %v74, %v262
  %v411 = vmul.f32 %v75, %v267
  %v412 = vmul.f32 %v76, %v267
  %v413 = vmul.f32 %v77, %v272
  %v414 = vmul.f32 %v78, %v272
  %v415 = vmul.f32 %v79, %v277
  %v416 = vmul.f32 %v80, %v277
  %v417 = vmul.f32 %v81, %v282
  %v418 = vmul.f32 %v82, %v282
  %v419 = vmul.f32 %v83, %v287
  %v420 = vmul.f32 %v84, %v287
  %v421 = vmul.f32 %v85, %v292
  %v422 = vmul.f32 %v86, %v292
  %v423 = vmul.f32 %v87, %v297
  %v424 = vmul.f32 %v88, %v297
  %v425 = vmul.f32 %v89, %v302
  %v426 = vmul.f32 %v90, %v302
  %v427 = vmul.f32 %v91, %v307
  %v428 = vmul.f32 %v92, %v307
  %v429 = vmul.f32 %v93, %v312
  %v430 = vmul.f32 %v94, %v312
  %v431 = vmul.f32 %v95, %v317
  %v432 = vmul.f32 %v96, %v317
  %v433 = vmul.f32 %v97, %v322
  %v434 = vmul.f32 %v98, %v322
  %v435 = vmul.f32 %v99, %v327
  %v436 = vmul.f32 %v100, %v327
  %v437 = vmul.f32 %v101, %v332
  %v438 = vmul.f32 %v102, %v332
  %v439 = vmul.f32 %v103, %v337
  %v440 = vmul.f32 %v104, %v337
  %v441 = vmul.f32 %v105, %v342
  %v442 = vmul.f32 %v106, %v342
  %v443 = vmul.f32 %v107, %v347
  %v444 = vmul.f32 %v108, %v347
  %v445 = vmul.f32 %v109, %v352
  %v446 = vmul.f32 %v110, %v352
  %v447 = vmul.f32 %v111, %v357
  %v448 = vmul.f32 %v112, %v357
  %v449 = vmul.f32 %v113, %v362
  %v450 = vmul.f32 %v114, %v362
  %v451 = vmul.f32 %v115, %v367
  %v452 = vmul.f32 %v116, %v367
  %v453 = vpack.c.bf16 %v371, %v369
  %v454 = vpack.c.bf16 %v372, %v370
  %v455 = vpack.c.bf16 %v375, %v373
  %v456 = vpack.c.bf16 %v376, %v374
  %v457 = vpack.c.bf16 %v379, %v377
  %v458 = vpack.c.bf16 %v380, %v378
  %v459 = vpack.c.bf16 %v383, %v381
  %v460 = vpack.c.bf16 %v384, %v382
  %v461 = vpack.c.bf16 %v387, %v385
  %v462 = vpack.c.bf16 %v388, %v386
  %v463 = vpack.c.bf16 %v391, %v389
  %v464 = vpack.c.bf16 %v392, %v390
  %v465 = vpack.c.bf16 %v395, %v393
  %v466 = vpack.c.bf16 %v396, %v394
  %v467 = vpack.c.bf16 %v399, %v397
  %v468 = vpack.c.bf16 %v400, %v398
  %v469 = vpack.c.bf16 %v403, %v401
  %v470 = vpack.c.bf16 %v404, %v402
  %v471 = vpack.c.bf16 %v407, %v405
  %v472 = vpack.c.bf16 %v408, %v406
  %v473 = vpack.c.bf16 %v411, %v409
  %v474 = vpack.c.bf16 %v412, %v410
  %v475 = vpack.c.bf16 %v415, %v413
  %v476 = vpack.c.bf16 %v416, %v414
  %v477 = vpack.c.bf16 %v419, %v417
  %v478 = vpack.c.bf16 %v420, %v418
  %v479 = vpack.c.bf16 %v423, %v421
  %v480 = vpack.c.bf16 %v424, %v422
  %v481 = vpack.c.bf16 %v427, %v425
  %v482 = vpack.c.bf16 %v428, %v426
  %v483 = vpack.c.bf16 %v431, %v429
  %v484 = vpack.c.bf16 %v432, %v430
  %v485 = vpack.c.bf16 %v435, %v433
  %v486 = vpack.c.bf16 %v436, %v434
  %v487 = vpack.c.bf16 %v439, %v437
  %v488 = vpack.c.bf16 %v440, %v438
  %v489 = vpack.c.bf16 %v443, %v441
  %v490 = vpack.c.bf16 %v444, %v442
  %v491 = vpack.c.bf16 %v447, %v445
  %v492 = vpack.c.bf16 %v448, %v446
  %v493 = vpack.c.bf16 %v451, %v449
  %v494 = vpack.c.bf16 %v452, %v450
  %v495 = vld [vmem:[%s3] sm:$0xff]
  %v496 = vld [vmem:[%s3 + $0x8] sm:$0xf]
  %v497 = vld [vmem:[%s3 + $0xc] sm:$0xff]
  %v498 = vld [vmem:[%s3 + $0x14] sm:$0xf]
  %v499 = vld [vmem:[%s3 + $0x18] sm:$0xff]
  %v500 = vld [vmem:[%s3 + $0x20] sm:$0xf]
  %v501 = vld [vmem:[%s3 + $0x24] sm:$0xff]
  %v502 = vld [vmem:[%s3 + $0x2c] sm:$0xf]
  %v503 = vld [vmem:[%s3 + $0x30] sm:$0xff]
  %v504 = vld [vmem:[%s3 + $0x38] sm:$0xf]
  %v505 = vld [vmem:[%s3 + $0x3c] sm:$0xff]
  %v506 = vld [vmem:[%s3 + $0x44] sm:$0xf]
  %v507 = vld [vmem:[%s3 + $0x48] sm:$0xff]
  %v508 = vld [vmem:[%s3 + $0x50] sm:$0xf]
  %v509 = vld [vmem:[%s3 + $0x54] sm:$0xff]
  %v510 = vld [vmem:[%s3 + $0x5c] sm:$0xf]
  %v511 = vld [vmem:[%s3 + $0x60] sm:$0xff]
  %v512 = vld [vmem:[%s3 + $0x68] sm:$0xf]
  %v513 = vld [vmem:[%s3 + $0x6c] sm:$0xff]
  %v514 = vld [vmem:[%s3 + $0x74] sm:$0xf]
  %v515 = vld [vmem:[%s3 + $0x78] sm:$0xff]
  %v516 = vld [vmem:[%s3 + $0x80] sm:$0xf]
  %v517 = vld [vmem:[%s3 + $0x84] sm:$0xff]
  %v518 = vld [vmem:[%s3 + $0x8c] sm:$0xf]
  %v519 = vld [vmem:[%s3 + $0x90] sm:$0xff]
  %v520 = vld [vmem:[%s3 + $0x98] sm:$0xf]
  %v521 = vld [vmem:[%s3 + $0x9c] sm:$0xff]
  %v522 = vld [vmem:[%s3 + $0xa4] sm:$0xf]
  %v523 = vld [vmem:[%s3 + $0xa8] sm:$0xff]
  %v524 = vld [vmem:[%s3 + $0xb0] sm:$0xf]
  %v525 = vld [vmem:[%s3 + $0xb4] sm:$0xff]
  %v526 = vld [vmem:[%s3 + $0xbc] sm:$0xf]
  %v527 = vld [vmem:[%s3 + $0xc0] sm:$0xff]
  %v528 = vld [vmem:[%s3 + $0xc8] sm:$0xf]
  %v529 = vld [vmem:[%s3 + $0xcc] sm:$0xff]
  %v530 = vld [vmem:[%s3 + $0xd4] sm:$0xf]
  %v531 = vld [vmem:[%s3 + $0xd8] sm:$0xff]
  %v532 = vld [vmem:[%s3 + $0xe0] sm:$0xf]
  %v533 = vld [vmem:[%s3 + $0xe4] sm:$0xff]
  %v534 = vld [vmem:[%s3 + $0xec] sm:$0xf]
  %v535 = vld [vmem:[%s3 + $0xf0] sm:$0xff]
  %v536 = vld [vmem:[%s3 + $0xf8] sm:$0xf]
  %v537 = vld [vmem:[%s3 + $0xfc] sm:$0xff]
  %v538 = vld [vmem:[%s3 + $0x104] sm:$0xf]
  %v539 = vld [vmem:[%s3 + $0x108] sm:$0xff]
  %v540 = vld [vmem:[%s3 + $0x110] sm:$0xf]
  %v541 = vld [vmem:[%s3 + $0x114] sm:$0xff]
  %v542 = vld [vmem:[%s3 + $0x11c] sm:$0xf]
  %v543 = vld [vmem:[%s3 + $0x120] sm:$0xff]
  %v544 = vld [vmem:[%s3 + $0x128] sm:$0xf]
  %v545 = vld [vmem:[%s3 + $0x12c] sm:$0xff]
  %v546 = vld [vmem:[%s3 + $0x134] sm:$0xf]
  %v547 = vld [vmem:[%s3 + $0x138] sm:$0xff]
  %v548 = vld [vmem:[%s3 + $0x140] sm:$0xf]
  %v549 = vld [vmem:[%s3 + $0x144] sm:$0xff]
  %v550 = vld [vmem:[%s3 + $0x14c] sm:$0xf]
  %v551 = vld [vmem:[%s3 + $0x150] sm:$0xff]
  %v552 = vld [vmem:[%s3 + $0x158] sm:$0xf]
  %v553 = vld [vmem:[%s3 + $0x15c] sm:$0xff]
  %v554 = vld [vmem:[%s3 + $0x164] sm:$0xf]
  %v555 = vld [vmem:[%s3 + $0x168] sm:$0xff]
  %v556 = vld [vmem:[%s3 + $0x170] sm:$0xf]
  %v557 = vld [vmem:[%s3 + $0x174] sm:$0xff]
  %v558 = vld [vmem:[%s3 + $0x17c] sm:$0xf]
  %v559 = vld [vmem:[%s3 + $0x180] sm:$0xff]
  %v560 = vld [vmem:[%s3 + $0x188] sm:$0xf]
  %v561 = vld [vmem:[%s3 + $0x18c] sm:$0xff]
  %v562 = vld [vmem:[%s3 + $0x194] sm:$0xf]
  %v563 = vld [vmem:[%s3 + $0x198] sm:$0xff]
  %v564 = vld [vmem:[%s3 + $0x1a0] sm:$0xf]
  %v565 = vld [vmem:[%s3 + $0x1a4] sm:$0xff]
  %v566 = vld [vmem:[%s3 + $0x1ac] sm:$0xf]
  %v567 = vld [vmem:[%s3 + $0x1b0] sm:$0xff]
  %v568 = vld [vmem:[%s3 + $0x1b8] sm:$0xf]
  %v569 = vld [vmem:[%s3 + $0x1bc] sm:$0xff]
  %v570 = vld [vmem:[%s3 + $0x1c4] sm:$0xf]
  %v571 = vld [vmem:[%s3 + $0x1c8] sm:$0xff]
  %v572 = vld [vmem:[%s3 + $0x1d0] sm:$0xf]
  %v573 = vld [vmem:[%s3 + $0x1d4] sm:$0xff]
  %v574 = vld [vmem:[%s3 + $0x1dc] sm:$0xf]
  %v575 = vld [vmem:[%s3 + $0x1e0] sm:$0xff]
  %v576 = vld [vmem:[%s3 + $0x1e8] sm:$0xf]
  %v577 = vld [vmem:[%s3 + $0x1ec] sm:$0xff]
  %v578 = vld [vmem:[%s3 + $0x1f4] sm:$0xf]
  %v663 = vunpack.c.l.b16 %v495
  %v664 = vunpack.c.h.b16 %v495
  %v665 = vunpack.c.l.b16 %v496
  %v666 = vunpack.c.l.b16 %v497
  %v667 = vunpack.c.h.b16 %v497
  %v668 = vunpack.c.l.b16 %v498
  %v669 = vunpack.c.l.b16 %v499
  %v670 = vunpack.c.h.b16 %v499
  %v671 = vunpack.c.l.b16 %v500
  %v672 = vunpack.c.l.b16 %v501
  %v673 = vunpack.c.h.b16 %v501
  %v674 = vunpack.c.l.b16 %v502
  %v675 = vunpack.c.l.b16 %v503
  %v676 = vunpack.c.h.b16 %v503
  %v677 = vunpack.c.l.b16 %v504
  %v678 = vunpack.c.l.b16 %v505
  %v679 = vunpack.c.h.b16 %v505
  %v680 = vunpack.c.l.b16 %v506
  %v681 = vunpack.c.l.b16 %v507
  %v682 = vunpack.c.h.b16 %v507
  %v683 = vunpack.c.l.b16 %v508
  %v684 = vunpack.c.l.b16 %v509
  %v685 = vunpack.c.h.b16 %v509
  %v686 = vunpack.c.l.b16 %v510
  %v687 = vunpack.c.l.b16 %v511
  %v688 = vunpack.c.h.b16 %v511
  %v689 = vunpack.c.l.b16 %v512
  %v690 = vunpack.c.l.b16 %v513
  %v691 = vunpack.c.h.b16 %v513
  %v692 = vunpack.c.l.b16 %v514
  %v693 = vunpack.c.l.b16 %v515
  %v694 = vunpack.c.h.b16 %v515
  %v695 = vunpack.c.l.b16 %v516
  %v696 = vunpack.c.l.b16 %v517
  %v697 = vunpack.c.h.b16 %v517
  %v698 = vunpack.c.l.b16 %v518
  %v699 = vunpack.c.l.b16 %v519
  %v700 = vunpack.c.h.b16 %v519
  %v701 = vunpack.c.l.b16 %v520
  %v702 = vunpack.c.l.b16 %v521
  %v703 = vunpack.c.h.b16 %v521
  %v704 = vunpack.c.l.b16 %v522
  %v705 = vunpack.c.l.b16 %v523
  %v706 = vunpack.c.h.b16 %v523
  %v707 = vunpack.c.l.b16 %v524
  %v708 = vunpack.c.l.b16 %v525
  %v709 = vunpack.c.h.b16 %v525
  %v710 = vunpack.c.l.b16 %v526
  %v711 = vunpack.c.l.b16 %v527
  %v712 = vunpack.c.h.b16 %v527
  %v713 = vunpack.c.l.b16 %v528
  %v714 = vunpack.c.l.b16 %v529
  %v715 = vunpack.c.h.b16 %v529
  %v716 = vunpack.c.l.b16 %v530
  %v717 = vunpack.c.l.b16 %v531
  %v718 = vunpack.c.h.b16 %v531
  %v719 = vunpack.c.l.b16 %v532
  %v720 = vunpack.c.l.b16 %v533
  %v721 = vunpack.c.h.b16 %v533
  %v722 = vunpack.c.l.b16 %v534
  %v723 = vunpack.c.l.b16 %v535
  %v724 = vunpack.c.h.b16 %v535
  %v725 = vunpack.c.l.b16 %v536
  %v726 = vunpack.c.l.b16 %v537
  %v727 = vunpack.c.h.b16 %v537
  %v728 = vunpack.c.l.b16 %v538
  %v729 = vunpack.c.l.b16 %v539
  %v730 = vunpack.c.h.b16 %v539
  %v731 = vunpack.c.l.b16 %v540
  %v732 = vunpack.c.l.b16 %v541
  %v733 = vunpack.c.h.b16 %v541
  %v734 = vunpack.c.l.b16 %v542
  %v735 = vunpack.c.l.b16 %v543
  %v736 = vunpack.c.h.b16 %v543
  %v737 = vunpack.c.l.b16 %v544
  %v738 = vunpack.c.l.b16 %v545
  %v739 = vunpack.c.h.b16 %v545
  %v740 = vunpack.c.l.b16 %v546
  %v741 = vunpack.c.l.b16 %v547
  %v742 = vunpack.c.h.b16 %v547
  %v743 = vunpack.c.l.b16 %v548
  %v744 = vunpack.c.l.b16 %v549
  %v745 = vunpack.c.h.b16 %v549
  %v746 = vunpack.c.l.b16 %v550
  %v747 = vunpack.c.l.b16 %v551
  %v748 = vunpack.c.h.b16 %v551
  %v749 = vunpack.c.l.b16 %v552
  %v750 = vunpack.c.l.b16 %v553
  %v751 = vunpack.c.h.b16 %v553
  %v752 = vunpack.c.l.b16 %v554
  %v753 = vunpack.c.l.b16 %v555
  %v754 = vunpack.c.h.b16 %v555
  %v755 = vunpack.c.l.b16 %v556
  %v756 = vunpack.c.l.b16 %v557
  %v757 = vunpack.c.h.b16 %v557
  %v758 = vunpack.c.l.b16 %v558
  %v759 = vunpack.c.l.b16 %v559
  %v760 = vunpack.c.h.b16 %v559
  %v761 = vunpack.c.l.b16 %v560
  %v762 = vunpack.c.l.b16 %v561
  %v763 = vunpack.c.h.b16 %v561
  %v764 = vunpack.c.l.b16 %v562
  %v765 = vunpack.c.l.b16 %v563
  %v766 = vunpack.c.h.b16 %v563
  %v767 = vunpack.c.l.b16 %v564
  %v768 = vunpack.c.l.b16 %v565
  %v769 = vunpack.c.h.b16 %v565
  %v770 = vunpack.c.l.b16 %v566
  %v771 = vunpack.c.l.b16 %v567
  %v772 = vunpack.c.h.b16 %v567
  %v773 = vunpack.c.l.b16 %v568
  %v774 = vunpack.c.l.b16 %v569
  %v775 = vunpack.c.h.b16 %v569
  %v776 = vunpack.c.l.b16 %v570
  %v777 = vunpack.c.l.b16 %v571
  %v778 = vunpack.c.h.b16 %v571
  %v779 = vunpack.c.l.b16 %v572
  %v780 = vunpack.c.l.b16 %v573
  %v781 = vunpack.c.h.b16 %v573
  %v782 = vunpack.c.l.b16 %v574
  %v783 = vunpack.c.l.b16 %v575
  %v784 = vunpack.c.h.b16 %v575
  %v785 = vunpack.c.l.b16 %v576
  %v786 = vunpack.c.l.b16 %v577
  %v787 = vunpack.c.h.b16 %v577
  %v788 = vunpack.c.l.b16 %v578
  %v789 = vpack.c.b16 %v666, %v663
  %v790 = vpack.c.b16 %v667, %v664
  %v791 = vpack.c.b16 %v668, %v665
  %v792 = vpack.c.b16 %v672, %v669
  %v793 = vpack.c.b16 %v673, %v670
  %v794 = vpack.c.b16 %v674, %v671
  %v795 = vpack.c.b16 %v678, %v675
  %v796 = vpack.c.b16 %v679, %v676
  %v797 = vpack.c.b16 %v680, %v677
  %v798 = vpack.c.b16 %v684, %v681
  %v799 = vpack.c.b16 %v685, %v682
  %v800 = vpack.c.b16 %v686, %v683
  %v801 = vpack.c.b16 %v690, %v687
  %v802 = vpack.c.b16 %v691, %v688
  %v803 = vpack.c.b16 %v692, %v689
  %v804 = vpack.c.b16 %v696, %v693
  %v805 = vpack.c.b16 %v697, %v694
  %v806 = vpack.c.b16 %v698, %v695
  %v807 = vpack.c.b16 %v702, %v699
  %v808 = vpack.c.b16 %v703, %v700
  %v809 = vpack.c.b16 %v704, %v701
  %v810 = vpack.c.b16 %v708, %v705
  %v811 = vpack.c.b16 %v709, %v706
  %v812 = vpack.c.b16 %v710, %v707
  %v813 = vpack.c.b16 %v714, %v711
  %v814 = vpack.c.b16 %v715, %v712
  %v815 = vpack.c.b16 %v716, %v713
  %v816 = vpack.c.b16 %v720, %v717
  %v817 = vpack.c.b16 %v721, %v718
  %v818 = vpack.c.b16 %v722, %v719
  %v819 = vpack.c.b16 %v726, %v723
  %v820 = vpack.c.b16 %v727, %v724
  %v821 = vpack.c.b16 %v728, %v725
  %v822 = vpack.c.b16 %v732, %v729
  %v823 = vpack.c.b16 %v733, %v730
  %v824 = vpack.c.b16 %v734, %v731
  %v825 = vpack.c.b16 %v738, %v735
  %v826 = vpack.c.b16 %v739, %v736
  %v827 = vpack.c.b16 %v740, %v737
  %v828 = vpack.c.b16 %v744, %v741
  %v829 = vpack.c.b16 %v745, %v742
  %v830 = vpack.c.b16 %v746, %v743
  %v831 = vpack.c.b16 %v750, %v747
  %v832 = vpack.c.b16 %v751, %v748
  %v833 = vpack.c.b16 %v752, %v749
  %v834 = vpack.c.b16 %v756, %v753
  %v835 = vpack.c.b16 %v757, %v754
  %v836 = vpack.c.b16 %v758, %v755
  %v837 = vpack.c.b16 %v762, %v759
  %v838 = vpack.c.b16 %v763, %v760
  %v839 = vpack.c.b16 %v764, %v761
  %v840 = vpack.c.b16 %v768, %v765
  %v841 = vpack.c.b16 %v769, %v766
  %v842 = vpack.c.b16 %v770, %v767
  %v843 = vpack.c.b16 %v774, %v771
  %v844 = vpack.c.b16 %v775, %v772
  %v845 = vpack.c.b16 %v776, %v773
  %v846 = vpack.c.b16 %v780, %v777
  %v847 = vpack.c.b16 %v781, %v778
  %v848 = vpack.c.b16 %v782, %v779
  %v849 = vpack.c.b16 %v786, %v783
  %v850 = vpack.c.b16 %v787, %v784
  %v851 = vpack.c.b16 %v788, %v785
  %vm894 = vcmask 654336
  %v896 = vsel %vm894, %v791, 0
  %v899 = vsel %vm894, %v794, 0
  %v902 = vsel %vm894, %v797, 0
  %v905 = vsel %vm894, %v800, 0
  %v908 = vsel %vm894, %v803, 0
  %v911 = vsel %vm894, %v806, 0
  %v914 = vsel %vm894, %v809, 0
  %v917 = vsel %vm894, %v812, 0
  %v920 = vsel %vm894, %v815, 0
  %v923 = vsel %vm894, %v818, 0
  %v926 = vsel %vm894, %v821, 0
  %v929 = vsel %vm894, %v824, 0
  %v932 = vsel %vm894, %v827, 0
  %v935 = vsel %vm894, %v830, 0
  %v938 = vsel %vm894, %v833, 0
  %v941 = vsel %vm894, %v836, 0
  %v944 = vsel %vm894, %v839, 0
  %v947 = vsel %vm894, %v842, 0
  %v950 = vsel %vm894, %v845, 0
  %v953 = vsel %vm894, %v848, 0
  %v956 = vsel %vm894, %v851, 0
  %958 = vmatprep.subr.bf16.mxu0 %v454
  %959 = vmatpush1.bf16.msra.mxu0 %v453
  %960 = vmatprep.subr.bf16.mxu0 %v456
  %961 = vmatpush1.bf16.msra.mxu0 %v455
  %962 = vmatprep.subr.bf16.mxu0 %v458
  %963 = vmatpush1.bf16.msra.mxu0 %v457
  %964 = vmatprep.subr.bf16.mxu0 %v460
  %965 = vmatpush1.bf16.msra.mxu0 %v459
  %966 = vmatprep.subr.bf16.mxu0 %v462
  %967 = vmatpush1.bf16.msra.mxu0 %v461
  %968 = vmatprep.subr.bf16.mxu0 %v464
  %969 = vmatpush1.bf16.msra.mxu0 %v463
  %970 = vmatprep.subr.bf16.mxu0 %v466
  %971 = vmatpush1.bf16.msra.mxu0 %v465
  %972 = vmatprep.subr.bf16.mxu0 %v468
  %973 = vmatpush1.bf16.msra.mxu0 %v467
  %974 = vmatprep.subr.bf16.mxu0 %v470
  %975 = vmatpush1.bf16.msra.mxu0 %v469
  %976 = vmatprep.subr.bf16.mxu0 %v472
  %977 = vmatpush1.bf16.msra.mxu0 %v471
  %978 = vmatprep.subr.bf16.mxu0 %v474
  %979 = vmatpush1.bf16.msra.mxu0 %v473
  %980 = vmatprep.subr.bf16.mxu0 %v476
  %981 = vmatpush1.bf16.msra.mxu0 %v475
  %982 = vmatprep.subr.bf16.mxu0 %v478
  %983 = vmatpush1.bf16.msra.mxu0 %v477
  %984 = vmatprep.subr.bf16.mxu0 %v480
  %985 = vmatpush1.bf16.msra.mxu0 %v479
  %986 = vmatprep.subr.bf16.mxu0 %v482
  %987 = vmatpush1.bf16.msra.mxu0 %v481
  %988 = vmatprep.subr.bf16.mxu0 %v484
  %989 = vmatpush1.bf16.msra.mxu0 %v483
  %990 = vmatprep.mubr.bf16.mxu0 %v790
  %991 = vmatmul.mubr.bf16.gmra.mrb[0].mxu0 %v789
  %v992 = vpop.f32.mrb[0].mxu0
  %v993 = vadd.f32 0.0, %v992
  %v994 = vpop.f32.mrb[0].mxu0
  %v995 = vadd.f32 0.0, %v994
  %v996 = vpop.f32.mrb[0].mxu0
  %v997 = vadd.f32 0.0, %v996
  %v998 = vpop.f32.mrb[0].mxu0
  %v999 = vadd.f32 0.0, %v998
  %1000 = vmatprep.mubr.bf16.mxu0 %v793
  %1001 = vmatmul.mubr.bf16.gmra.mrb[0].mxu0 %v792
  %v1002 = vpop.f32.mrb[0].mxu0
  %v1003 = vadd.f32 0.0, %v1002
  %v1004 = vpop.f32.mrb[0].mxu0
  %v1005 = vadd.f32 0.0, %v1004
  %v1006 = vpop.f32.mrb[0].mxu0
  %v1007 = vadd.f32 0.0, %v1006
  %v1008 = vpop.f32.mrb[0].mxu0
  %v1009 = vadd.f32 0.0, %v1008
  %1010 = vmatprep.mubr.bf16.mxu0 %v796
  %1011 = vmatmul.mubr.bf16.gmra.mrb[0].mxu0 %v795
  %v1012 = vpop.f32.mrb[0].mxu0
  %v1013 = vadd.f32 0.0, %v1012
  %v1014 = vpop.f32.mrb[0].mxu0
  %v1015 = vadd.f32 0.0, %v1014
  %v1016 = vpop.f32.mrb[0].mxu0
  %v1017 = vadd.f32 0.0, %v1016
  %v1018 = vpop.f32.mrb[0].mxu0
  %v1019 = vadd.f32 0.0, %v1018
  %1020 = vmatprep.mubr.bf16.mxu0 %v799
  %1021 = vmatmul.mubr.bf16.gmra.mrb[0].mxu0 %v798
  %v1022 = vpop.f32.mrb[0].mxu0
  %v1023 = vadd.f32 0.0, %v1022
  %v1024 = vpop.f32.mrb[0].mxu0
  %v1025 = vadd.f32 0.0, %v1024
  %v1026 = vpop.f32.mrb[0].mxu0
  %v1027 = vadd.f32 0.0, %v1026
  %v1028 = vpop.f32.mrb[0].mxu0
  %v1029 = vadd.f32 0.0, %v1028
  %1030 = vmatprep.mubr.bf16.mxu0 %v802
  %1031 = vmatmul.mubr.bf16.gmra.mrb[0].mxu0 %v801
  %v1032 = vpop.f32.mrb[0].mxu0
  %v1033 = vadd.f32 0.0, %v1032
  %v1034 = vpop.f32.mrb[0].mxu0
  %v1035 = vadd.f32 0.0, %v1034
  %v1036 = vpop.f32.mrb[0].mxu0
  %v1037 = vadd.f32 0.0, %v1036
  %v1038 = vpop.f32.mrb[0].mxu0
  %v1039 = vadd.f32 0.0, %v1038
  %1040 = vmatprep.mubr.bf16.mxu0 %v805
  %1041 = vmatmul.mubr.bf16.gmra.mrb[0].mxu0 %v804
  %v1042 = vpop.f32.mrb[0].mxu0
  %v1043 = vadd.f32 0.0, %v1042
  %v1044 = vpop.f32.mrb[0].mxu0
  %v1045 = vadd.f32 0.0, %v1044
  %v1046 = vpop.f32.mrb[0].mxu0
  %v1047 = vadd.f32 0.0, %v1046
  %v1048 = vpop.f32.mrb[0].mxu0
  %v1049 = vadd.f32 0.0, %v1048
  %1050 = vmatprep.mubr.bf16.mxu0 %v808
  %1051 = vmatmul.mubr.bf16.gmra.mrb[0].mxu0 %v807
  %v1052 = vpop.f32.mrb[0].mxu0
  %v1053 = vadd.f32 0.0, %v1052
  %v1054 = vpop.f32.mrb[0].mxu0
  %v1055 = vadd.f32 0.0, %v1054
  %v1056 = vpop.f32.mrb[0].mxu0
  %v1057 = vadd.f32 0.0, %v1056
  %v1058 = vpop.f32.mrb[0].mxu0
  %v1059 = vadd.f32 0.0, %v1058
  %1060 = vmatprep.mubr.bf16.mxu0 %v811
  %1061 = vmatmul.mubr.bf16.gmra.mrb[0].mxu0 %v810
  %v1062 = vpop.f32.mrb[0].mxu0
  %v1063 = vadd.f32 0.0, %v1062
  %v1064 = vpop.f32.mrb[0].mxu0
  %v1065 = vadd.f32 0.0, %v1064
  %v1066 = vpop.f32.mrb[0].mxu0
  %v1067 = vadd.f32 0.0, %v1066
  %v1068 = vpop.f32.mrb[0].mxu0
  %v1069 = vadd.f32 0.0, %v1068
  %1070 = vmatprep.mubr.bf16.mxu0 %v814
  %1071 = vmatmul.mubr.bf16.gmra.mrb[0].mxu0 %v813
  %v1072 = vpop.f32.mrb[0].mxu0
  %v1073 = vadd.f32 0.0, %v1072
  %v1074 = vpop.f32.mrb[0].mxu0
  %v1075 = vadd.f32 0.0, %v1074
  %v1076 = vpop.f32.mrb[0].mxu0
  %v1077 = vadd.f32 0.0, %v1076
  %v1078 = vpop.f32.mrb[0].mxu0
  %v1079 = vadd.f32 0.0, %v1078
  %1080 = vmatprep.mubr.bf16.mxu0 %v817
  %1081 = vmatmul.mubr.bf16.gmra.mrb[0].mxu0 %v816
  %v1082 = vpop.f32.mrb[0].mxu0
  %v1083 = vadd.f32 0.0, %v1082
  %v1084 = vpop.f32.mrb[0].mxu0
  %v1085 = vadd.f32 0.0, %v1084
  %v1086 = vpop.f32.mrb[0].mxu0
  %v1087 = vadd.f32 0.0, %v1086
  %v1088 = vpop.f32.mrb[0].mxu0
  %v1089 = vadd.f32 0.0, %v1088
  %1090 = vmatprep.mubr.bf16.mxu0 %v820
  %1091 = vmatmul.mubr.bf16.gmra.mrb[0].mxu0 %v819
  %v1092 = vpop.f32.mrb[0].mxu0
  %v1093 = vadd.f32 0.0, %v1092
  %v1094 = vpop.f32.mrb[0].mxu0
  %v1095 = vadd.f32 0.0, %v1094
  %v1096 = vpop.f32.mrb[0].mxu0
  %v1097 = vadd.f32 0.0, %v1096
  %v1098 = vpop.f32.mrb[0].mxu0
  %v1099 = vadd.f32 0.0, %v1098
  %1100 = vmatprep.mubr.bf16.mxu0 %v823
  %1101 = vmatmul.mubr.bf16.gmra.mrb[0].mxu0 %v822
  %v1102 = vpop.f32.mrb[0].mxu0
  %v1103 = vadd.f32 0.0, %v1102
  %v1104 = vpop.f32.mrb[0].mxu0
  %v1105 = vadd.f32 0.0, %v1104
  %v1106 = vpop.f32.mrb[0].mxu0
  %v1107 = vadd.f32 0.0, %v1106
  %v1108 = vpop.f32.mrb[0].mxu0
  %v1109 = vadd.f32 0.0, %v1108
  %1110 = vmatprep.mubr.bf16.mxu0 %v826
  %1111 = vmatmul.mubr.bf16.gmra.mrb[0].mxu0 %v825
  %v1112 = vpop.f32.mrb[0].mxu0
  %v1113 = vadd.f32 0.0, %v1112
  %v1114 = vpop.f32.mrb[0].mxu0
  %v1115 = vadd.f32 0.0, %v1114
  %v1116 = vpop.f32.mrb[0].mxu0
  %v1117 = vadd.f32 0.0, %v1116
  %v1118 = vpop.f32.mrb[0].mxu0
  %v1119 = vadd.f32 0.0, %v1118
  %1120 = vmatprep.mubr.bf16.mxu0 %v829
  %1121 = vmatmul.mubr.bf16.gmra.mrb[0].mxu0 %v828
  %v1122 = vpop.f32.mrb[0].mxu0
  %v1123 = vadd.f32 0.0, %v1122
  %v1124 = vpop.f32.mrb[0].mxu0
  %v1125 = vadd.f32 0.0, %v1124
  %v1126 = vpop.f32.mrb[0].mxu0
  %v1127 = vadd.f32 0.0, %v1126
  %v1128 = vpop.f32.mrb[0].mxu0
  %v1129 = vadd.f32 0.0, %v1128
  %1130 = vmatprep.mubr.bf16.mxu0 %v832
  %1131 = vmatmul.mubr.bf16.gmra.mrb[0].mxu0 %v831
  %v1132 = vpop.f32.mrb[0].mxu0
  %v1133 = vadd.f32 0.0, %v1132
  %v1134 = vpop.f32.mrb[0].mxu0
  %v1135 = vadd.f32 0.0, %v1134
  %v1136 = vpop.f32.mrb[0].mxu0
  %v1137 = vadd.f32 0.0, %v1136
  %v1138 = vpop.f32.mrb[0].mxu0
  %v1139 = vadd.f32 0.0, %v1138
  %1140 = vmatprep.mubr.bf16.mxu0 %v835
  %1141 = vmatmul.mubr.bf16.gmra.mrb[0].mxu0 %v834
  %v1142 = vpop.f32.mrb[0].mxu0
  %v1143 = vadd.f32 0.0, %v1142
  %v1144 = vpop.f32.mrb[0].mxu0
  %v1145 = vadd.f32 0.0, %v1144
  %v1146 = vpop.f32.mrb[0].mxu0
  %v1147 = vadd.f32 0.0, %v1146
  %v1148 = vpop.f32.mrb[0].mxu0
  %v1149 = vadd.f32 0.0, %v1148
  %1150 = vmatprep.mubr.bf16.mxu0 %v838
  %1151 = vmatmul.mubr.bf16.gmra.mrb[0].mxu0 %v837
  %v1152 = vpop.f32.mrb[0].mxu0
  %v1153 = vadd.f32 0.0, %v1152
  %v1154 = vpop.f32.mrb[0].mxu0
  %v1155 = vadd.f32 0.0, %v1154
  %v1156 = vpop.f32.mrb[0].mxu0
  %v1157 = vadd.f32 0.0, %v1156
  %v1158 = vpop.f32.mrb[0].mxu0
  %v1159 = vadd.f32 0.0, %v1158
  %1160 = vmatprep.mubr.bf16.mxu0 %v841
  %1161 = vmatmul.mubr.bf16.gmra.mrb[0].mxu0 %v840
  %v1162 = vpop.f32.mrb[0].mxu0
  %v1163 = vadd.f32 0.0, %v1162
  %v1164 = vpop.f32.mrb[0].mxu0
  %v1165 = vadd.f32 0.0, %v1164
  %v1166 = vpop.f32.mrb[0].mxu0
  %v1167 = vadd.f32 0.0, %v1166
  %v1168 = vpop.f32.mrb[0].mxu0
  %v1169 = vadd.f32 0.0, %v1168
  %1170 = vmatprep.mubr.bf16.mxu0 %v844
  %1171 = vmatmul.mubr.bf16.gmra.mrb[0].mxu0 %v843
  %v1172 = vpop.f32.mrb[0].mxu0
  %v1173 = vadd.f32 0.0, %v1172
  %v1174 = vpop.f32.mrb[0].mxu0
  %v1175 = vadd.f32 0.0, %v1174
  %v1176 = vpop.f32.mrb[0].mxu0
  %v1177 = vadd.f32 0.0, %v1176
  %v1178 = vpop.f32.mrb[0].mxu0
  %v1179 = vadd.f32 0.0, %v1178
  %1180 = vmatprep.mubr.bf16.mxu0 %v847
  %1181 = vmatmul.mubr.bf16.gmra.mrb[0].mxu0 %v846
  %v1182 = vpop.f32.mrb[0].mxu0
  %v1183 = vadd.f32 0.0, %v1182
  %v1184 = vpop.f32.mrb[0].mxu0
  %v1185 = vadd.f32 0.0, %v1184
  %v1186 = vpop.f32.mrb[0].mxu0
  %v1187 = vadd.f32 0.0, %v1186
  %v1188 = vpop.f32.mrb[0].mxu0
  %v1189 = vadd.f32 0.0, %v1188
  %1190 = vmatprep.mubr.bf16.mxu0 %v850
  %1191 = vmatmul.mubr.bf16.gmra.mrb[0].mxu0 %v849
  %v1192 = vpop.f32.mrb[0].mxu0
  %v1193 = vadd.f32 0.0, %v1192
  %v1194 = vpop.f32.mrb[0].mxu0
  %v1195 = vadd.f32 0.0, %v1194
  %v1196 = vpop.f32.mrb[0].mxu0
  %v1197 = vadd.f32 0.0, %v1196
  %v1198 = vpop.f32.mrb[0].mxu0
  %v1199 = vadd.f32 0.0, %v1198
  %1200 = vdwg.mxu0
  %1201 = vmatprep.subr.bf16.mxu0 %v486
  %1202 = vmatpush1.bf16.msra.mxu0 %v485
  %1203 = vmatprep.subr.bf16.mxu0 %v488
  %1204 = vmatpush1.bf16.msra.mxu0 %v487
  %1205 = vmatprep.subr.bf16.mxu0 %v490
  %1206 = vmatpush1.bf16.msra.mxu0 %v489
  %1207 = vmatprep.subr.bf16.mxu0 %v492
  %1208 = vmatpush1.bf16.msra.mxu0 %v491
  %1209 = vmatprep.subr.bf16.mxu0 %v494
  %1210 = vmatpush1.bf16.msra.mxu0 %v493
  %1211 = vmatprep.subr.bf16.mxu0 0
  %1212 = vmatpush1.bf16.msra.mxu0 0
  %1213 = vmatprep.subr.bf16.mxu0 0
  %1214 = vmatpush1.bf16.msra.mxu0 0
  %1215 = vmatprep.subr.bf16.mxu0 0
  %1216 = vmatpush1.bf16.msra.mxu0 0
  %1217 = vmatprep.subr.bf16.mxu0 0
  %1218 = vmatpush1.bf16.msra.mxu0 0
  %1219 = vmatprep.subr.bf16.mxu0 0
  %1220 = vmatpush1.bf16.msra.mxu0 0
  %1221 = vmatprep.subr.bf16.mxu0 0
  %1222 = vmatpush1.bf16.msra.mxu0 0
  %1223 = vmatprep.subr.bf16.mxu0 0
  %1224 = vmatpush1.bf16.msra.mxu0 0
  %1225 = vmatprep.subr.bf16.mxu0 0
  %1226 = vmatpush1.bf16.msra.mxu0 0
  %1227 = vmatprep.subr.bf16.mxu0 0
  %1228 = vmatpush1.bf16.msra.mxu0 0
  %1229 = vmatprep.subr.bf16.mxu0 0
  %1230 = vmatpush1.bf16.msra.mxu0 0
  %1231 = vmatprep.subr.bf16.mxu0 0
  %1232 = vmatpush1.bf16.msra.mxu0 0
  %1233 = vmatprep.mubr.bf16.mxu0 0
  %1234 = vmatmul.mubr.bf16.gmra.mrb[0].mxu0 %v896
  %v1235 = vpop.f32.mrb[0].mxu0
  %v1236 = vadd.f32 %v993, %v1235
  %v1237 = vpop.f32.mrb[0].mxu0
  %v1238 = vadd.f32 %v995, %v1237
  %v1239 = vpop.f32.mrb[0].mxu0
  %v1240 = vadd.f32 %v997, %v1239
  %v1241 = vpop.f32.mrb[0].mxu0
  %v1242 = vadd.f32 %v999, %v1241
  %1243 = vmatprep.mubr.bf16.mxu0 0
  %1244 = vmatmul.mubr.bf16.gmra.mrb[0].mxu0 %v899
  %v1245 = vpop.f32.mrb[0].mxu0
  %v1246 = vadd.f32 %v1003, %v1245
  %v1247 = vpop.f32.mrb[0].mxu0
  %v1248 = vadd.f32 %v1005, %v1247
  %v1249 = vpop.f32.mrb[0].mxu0
  %v1250 = vadd.f32 %v1007, %v1249
  %v1251 = vpop.f32.mrb[0].mxu0
  %v1252 = vadd.f32 %v1009, %v1251
  %1253 = vmatprep.mubr.bf16.mxu0 0
  %1254 = vmatmul.mubr.bf16.gmra.mrb[0].mxu0 %v902
  %v1255 = vpop.f32.mrb[0].mxu0
  %v1256 = vadd.f32 %v1013, %v1255
  %v1257 = vpop.f32.mrb[0].mxu0
  %v1258 = vadd.f32 %v1015, %v1257
  %v1259 = vpop.f32.mrb[0].mxu0
  %v1260 = vadd.f32 %v1017, %v1259
  %v1261 = vpop.f32.mrb[0].mxu0
  %v1262 = vadd.f32 %v1019, %v1261
  %1263 = vmatprep.mubr.bf16.mxu0 0
  %1264 = vmatmul.mubr.bf16.gmra.mrb[0].mxu0 %v905
  %v1265 = vpop.f32.mrb[0].mxu0
  %v1266 = vadd.f32 %v1023, %v1265
  %v1267 = vpop.f32.mrb[0].mxu0
  %v1268 = vadd.f32 %v1025, %v1267
  %v1269 = vpop.f32.mrb[0].mxu0
  %v1270 = vadd.f32 %v1027, %v1269
  %v1271 = vpop.f32.mrb[0].mxu0
  %v1272 = vadd.f32 %v1029, %v1271
  %1273 = vmatprep.mubr.bf16.mxu0 0
  %1274 = vmatmul.mubr.bf16.gmra.mrb[0].mxu0 %v908
  %v1275 = vpop.f32.mrb[0].mxu0
  %v1276 = vadd.f32 %v1033, %v1275
  %v1277 = vpop.f32.mrb[0].mxu0
  %v1278 = vadd.f32 %v1035, %v1277
  %v1279 = vpop.f32.mrb[0].mxu0
  %v1280 = vadd.f32 %v1037, %v1279
  %v1281 = vpop.f32.mrb[0].mxu0
  %v1282 = vadd.f32 %v1039, %v1281
  %1283 = vmatprep.mubr.bf16.mxu0 0
  %1284 = vmatmul.mubr.bf16.gmra.mrb[0].mxu0 %v911
  %v1285 = vpop.f32.mrb[0].mxu0
  %v1286 = vadd.f32 %v1043, %v1285
  %v1287 = vpop.f32.mrb[0].mxu0
  %v1288 = vadd.f32 %v1045, %v1287
  %v1289 = vpop.f32.mrb[0].mxu0
  %v1290 = vadd.f32 %v1047, %v1289
  %v1291 = vpop.f32.mrb[0].mxu0
  %v1292 = vadd.f32 %v1049, %v1291
  %1293 = vmatprep.mubr.bf16.mxu0 0
  %1294 = vmatmul.mubr.bf16.gmra.mrb[0].mxu0 %v914
  %v1295 = vpop.f32.mrb[0].mxu0
  %v1296 = vadd.f32 %v1053, %v1295
  %v1297 = vpop.f32.mrb[0].mxu0
  %v1298 = vadd.f32 %v1055, %v1297
  %v1299 = vpop.f32.mrb[0].mxu0
  %v1300 = vadd.f32 %v1057, %v1299
  %v1301 = vpop.f32.mrb[0].mxu0
  %v1302 = vadd.f32 %v1059, %v1301
  %1303 = vmatprep.mubr.bf16.mxu0 0
  %1304 = vmatmul.mubr.bf16.gmra.mrb[0].mxu0 %v917
  %v1305 = vpop.f32.mrb[0].mxu0
  %v1306 = vadd.f32 %v1063, %v1305
  %v1307 = vpop.f32.mrb[0].mxu0
  %v1308 = vadd.f32 %v1065, %v1307
  %v1309 = vpop.f32.mrb[0].mxu0
  %v1310 = vadd.f32 %v1067, %v1309
  %v1311 = vpop.f32.mrb[0].mxu0
  %v1312 = vadd.f32 %v1069, %v1311
  %1313 = vmatprep.mubr.bf16.mxu0 0
  %1314 = vmatmul.mubr.bf16.gmra.mrb[0].mxu0 %v920
  %v1315 = vpop.f32.mrb[0].mxu0
  %v1316 = vadd.f32 %v1073, %v1315
  %v1317 = vpop.f32.mrb[0].mxu0
  %v1318 = vadd.f32 %v1075, %v1317
  %v1319 = vpop.f32.mrb[0].mxu0
  %v1320 = vadd.f32 %v1077, %v1319
  %v1321 = vpop.f32.mrb[0].mxu0
  %v1322 = vadd.f32 %v1079, %v1321
  %1323 = vmatprep.mubr.bf16.mxu0 0
  %1324 = vmatmul.mubr.bf16.gmra.mrb[0].mxu0 %v923
  %v1325 = vpop.f32.mrb[0].mxu0
  %v1326 = vadd.f32 %v1083, %v1325
  %v1327 = vpop.f32.mrb[0].mxu0
  %v1328 = vadd.f32 %v1085, %v1327
  %v1329 = vpop.f32.mrb[0].mxu0
  %v1330 = vadd.f32 %v1087, %v1329
  %v1331 = vpop.f32.mrb[0].mxu0
  %v1332 = vadd.f32 %v1089, %v1331
  %1333 = vmatprep.mubr.bf16.mxu0 0
  %1334 = vmatmul.mubr.bf16.gmra.mrb[0].mxu0 %v926
  %v1335 = vpop.f32.mrb[0].mxu0
  %v1336 = vadd.f32 %v1093, %v1335
  %v1337 = vpop.f32.mrb[0].mxu0
  %v1338 = vadd.f32 %v1095, %v1337
  %v1339 = vpop.f32.mrb[0].mxu0
  %v1340 = vadd.f32 %v1097, %v1339
  %v1341 = vpop.f32.mrb[0].mxu0
  %v1342 = vadd.f32 %v1099, %v1341
  %1343 = vmatprep.mubr.bf16.mxu0 0
  %1344 = vmatmul.mubr.bf16.gmra.mrb[0].mxu0 %v929
  %v1345 = vpop.f32.mrb[0].mxu0
  %v1346 = vadd.f32 %v1103, %v1345
  %v1347 = vpop.f32.mrb[0].mxu0
  %v1348 = vadd.f32 %v1105, %v1347
  %v1349 = vpop.f32.mrb[0].mxu0
  %v1350 = vadd.f32 %v1107, %v1349
  %v1351 = vpop.f32.mrb[0].mxu0
  %v1352 = vadd.f32 %v1109, %v1351
  %1353 = vmatprep.mubr.bf16.mxu0 0
  %1354 = vmatmul.mubr.bf16.gmra.mrb[0].mxu0 %v932
  %v1355 = vpop.f32.mrb[0].mxu0
  %v1356 = vadd.f32 %v1113, %v1355
  %v1357 = vpop.f32.mrb[0].mxu0
  %v1358 = vadd.f32 %v1115, %v1357
  %v1359 = vpop.f32.mrb[0].mxu0
  %v1360 = vadd.f32 %v1117, %v1359
  %v1361 = vpop.f32.mrb[0].mxu0
  %v1362 = vadd.f32 %v1119, %v1361
  %1363 = vmatprep.mubr.bf16.mxu0 0
  %1364 = vmatmul.mubr.bf16.gmra.mrb[0].mxu0 %v935
  %v1365 = vpop.f32.mrb[0].mxu0
  %v1366 = vadd.f32 %v1123, %v1365
  %v1367 = vpop.f32.mrb[0].mxu0
  %v1368 = vadd.f32 %v1125, %v1367
  %v1369 = vpop.f32.mrb[0].mxu0
  %v1370 = vadd.f32 %v1127, %v1369
  %v1371 = vpop.f32.mrb[0].mxu0
  %v1372 = vadd.f32 %v1129, %v1371
  %1373 = vmatprep.mubr.bf16.mxu0 0
  %1374 = vmatmul.mubr.bf16.gmra.mrb[0].mxu0 %v938
  %v1375 = vpop.f32.mrb[0].mxu0
  %v1376 = vadd.f32 %v1133, %v1375
  %v1377 = vpop.f32.mrb[0].mxu0
  %v1378 = vadd.f32 %v1135, %v1377
  %v1379 = vpop.f32.mrb[0].mxu0
  %v1380 = vadd.f32 %v1137, %v1379
  %v1381 = vpop.f32.mrb[0].mxu0
  %v1382 = vadd.f32 %v1139, %v1381
  %1383 = vmatprep.mubr.bf16.mxu0 0
  %1384 = vmatmul.mubr.bf16.gmra.mrb[0].mxu0 %v941
  %v1385 = vpop.f32.mrb[0].mxu0
  %v1386 = vadd.f32 %v1143, %v1385
  %v1387 = vpop.f32.mrb[0].mxu0
  %v1388 = vadd.f32 %v1145, %v1387
  %v1389 = vpop.f32.mrb[0].mxu0
  %v1390 = vadd.f32 %v1147, %v1389
  %v1391 = vpop.f32.mrb[0].mxu0
  %v1392 = vadd.f32 %v1149, %v1391
  %1393 = vmatprep.mubr.bf16.mxu0 0
  %1394 = vmatmul.mubr.bf16.gmra.mrb[0].mxu0 %v944
  %v1395 = vpop.f32.mrb[0].mxu0
  %v1396 = vadd.f32 %v1153, %v1395
  %v1397 = vpop.f32.mrb[0].mxu0
  %v1398 = vadd.f32 %v1155, %v1397
  %v1399 = vpop.f32.mrb[0].mxu0
  %v1400 = vadd.f32 %v1157, %v1399
  %v1401 = vpop.f32.mrb[0].mxu0
  %v1402 = vadd.f32 %v1159, %v1401
  %1403 = vmatprep.mubr.bf16.mxu0 0
  %1404 = vmatmul.mubr.bf16.gmra.mrb[0].mxu0 %v947
  %v1405 = vpop.f32.mrb[0].mxu0
  %v1406 = vadd.f32 %v1163, %v1405
  %v1407 = vpop.f32.mrb[0].mxu0
  %v1408 = vadd.f32 %v1165, %v1407
  %v1409 = vpop.f32.mrb[0].mxu0
  %v1410 = vadd.f32 %v1167, %v1409
  %v1411 = vpop.f32.mrb[0].mxu0
  %v1412 = vadd.f32 %v1169, %v1411
  %1413 = vmatprep.mubr.bf16.mxu0 0
  %1414 = vmatmul.mubr.bf16.gmra.mrb[0].mxu0 %v950
  %v1415 = vpop.f32.mrb[0].mxu0
  %v1416 = vadd.f32 %v1173, %v1415
  %v1417 = vpop.f32.mrb[0].mxu0
  %v1418 = vadd.f32 %v1175, %v1417
  %v1419 = vpop.f32.mrb[0].mxu0
  %v1420 = vadd.f32 %v1177, %v1419
  %v1421 = vpop.f32.mrb[0].mxu0
  %v1422 = vadd.f32 %v1179, %v1421
  %1423 = vmatprep.mubr.bf16.mxu0 0
  %1424 = vmatmul.mubr.bf16.gmra.mrb[0].mxu0 %v953
  %v1425 = vpop.f32.mrb[0].mxu0
  %v1426 = vadd.f32 %v1183, %v1425
  %v1427 = vpop.f32.mrb[0].mxu0
  %v1428 = vadd.f32 %v1185, %v1427
  %v1429 = vpop.f32.mrb[0].mxu0
  %v1430 = vadd.f32 %v1187, %v1429
  %v1431 = vpop.f32.mrb[0].mxu0
  %v1432 = vadd.f32 %v1189, %v1431
  %1433 = vmatprep.mubr.bf16.mxu0 0
  %1434 = vmatmul.mubr.bf16.gmra.mrb[0].mxu0 %v956
  %v1435 = vpop.f32.mrb[0].mxu0
  %v1436 = vadd.f32 %v1193, %v1435
  %v1437 = vpop.f32.mrb[0].mxu0
  %v1438 = vadd.f32 %v1195, %v1437
  %v1439 = vpop.f32.mrb[0].mxu0
  %v1440 = vadd.f32 %v1197, %v1439
  %v1441 = vpop.f32.mrb[0].mxu0
  %v1442 = vadd.f32 %v1199, %v1441
  %1443 = vdwg.mxu0
  %vm1444 = vcmask 556032
  %v1445 = vsel %vm1444, %v1238, 0.0
  %v1446 = vadd.f32 %v1236, %v1445
  %1447 = vadd.xlane.f32.xlu0 %v1446
  %v1448 = vpop.xlane.xlu0 %1447
  %v1449 = vsel %vm1444, %v1242, 0.0
  %v1450 = vadd.f32 %v1240, %v1449
  %1451 = vadd.xlane.f32.xlu0 %v1450
  %v1452 = vpop.xlane.xlu0 %1451
  %v1453 = vsel %vm1444, %v1248, 0.0
  %v1454 = vadd.f32 %v1246, %v1453
  %1455 = vadd.xlane.f32.xlu0 %v1454
  %v1456 = vpop.xlane.xlu0 %1455
  %v1457 = vsel %vm1444, %v1252, 0.0
  %v1458 = vadd.f32 %v1250, %v1457
  %1459 = vadd.xlane.f32.xlu0 %v1458
  %v1460 = vpop.xlane.xlu0 %1459
  %v1461 = vsel %vm1444, %v1258, 0.0
  %v1462 = vadd.f32 %v1256, %v1461
  %1463 = vadd.xlane.f32.xlu0 %v1462
  %v1464 = vpop.xlane.xlu0 %1463
  %v1465 = vsel %vm1444, %v1262, 0.0
  %v1466 = vadd.f32 %v1260, %v1465
  %1467 = vadd.xlane.f32.xlu0 %v1466
  %v1468 = vpop.xlane.xlu0 %1467
  %v1469 = vsel %vm1444, %v1268, 0.0
  %v1470 = vadd.f32 %v1266, %v1469
  %1471 = vadd.xlane.f32.xlu0 %v1470
  %v1472 = vpop.xlane.xlu0 %1471
  %v1473 = vsel %vm1444, %v1272, 0.0
  %v1474 = vadd.f32 %v1270, %v1473
  %1475 = vadd.xlane.f32.xlu0 %v1474
  %v1476 = vpop.xlane.xlu0 %1475
  %v1477 = vsel %vm1444, %v1278, 0.0
  %v1478 = vadd.f32 %v1276, %v1477
  %1479 = vadd.xlane.f32.xlu0 %v1478
  %v1480 = vpop.xlane.xlu0 %1479
  %v1481 = vsel %vm1444, %v1282, 0.0
  %v1482 = vadd.f32 %v1280, %v1481
  %1483 = vadd.xlane.f32.xlu0 %v1482
  %v1484 = vpop.xlane.xlu0 %1483
  %v1485 = vsel %vm1444, %v1288, 0.0
  %v1486 = vadd.f32 %v1286, %v1485
  %1487 = vadd.xlane.f32.xlu0 %v1486
  %v1488 = vpop.xlane.xlu0 %1487
  %v1489 = vsel %vm1444, %v1292, 0.0
  %v1490 = vadd.f32 %v1290, %v1489
  %1491 = vadd.xlane.f32.xlu0 %v1490
  %v1492 = vpop.xlane.xlu0 %1491
  %v1493 = vsel %vm1444, %v1298, 0.0
  %v1494 = vadd.f32 %v1296, %v1493
  %1495 = vadd.xlane.f32.xlu0 %v1494
  %v1496 = vpop.xlane.xlu0 %1495
  %v1497 = vsel %vm1444, %v1302, 0.0
  %v1498 = vadd.f32 %v1300, %v1497
  %1499 = vadd.xlane.f32.xlu0 %v1498
  %v1500 = vpop.xlane.xlu0 %1499
  %v1501 = vsel %vm1444, %v1308, 0.0
  %v1502 = vadd.f32 %v1306, %v1501
  %1503 = vadd.xlane.f32.xlu0 %v1502
  %v1504 = vpop.xlane.xlu0 %1503
  %v1505 = vsel %vm1444, %v1312, 0.0
  %v1506 = vadd.f32 %v1310, %v1505
  %1507 = vadd.xlane.f32.xlu0 %v1506
  %v1508 = vpop.xlane.xlu0 %1507
  %v1509 = vsel %vm1444, %v1318, 0.0
  %v1510 = vadd.f32 %v1316, %v1509
  %1511 = vadd.xlane.f32.xlu0 %v1510
  %v1512 = vpop.xlane.xlu0 %1511
  %v1513 = vsel %vm1444, %v1322, 0.0
  %v1514 = vadd.f32 %v1320, %v1513
  %1515 = vadd.xlane.f32.xlu0 %v1514
  %v1516 = vpop.xlane.xlu0 %1515
  %v1517 = vsel %vm1444, %v1328, 0.0
  %v1518 = vadd.f32 %v1326, %v1517
  %1519 = vadd.xlane.f32.xlu0 %v1518
  %v1520 = vpop.xlane.xlu0 %1519
  %v1521 = vsel %vm1444, %v1332, 0.0
  %v1522 = vadd.f32 %v1330, %v1521
  %1523 = vadd.xlane.f32.xlu0 %v1522
  %v1524 = vpop.xlane.xlu0 %1523
  %v1525 = vsel %vm1444, %v1338, 0.0
  %v1526 = vadd.f32 %v1336, %v1525
  %1527 = vadd.xlane.f32.xlu0 %v1526
  %v1528 = vpop.xlane.xlu0 %1527
  %v1529 = vsel %vm1444, %v1342, 0.0
  %v1530 = vadd.f32 %v1340, %v1529
  %1531 = vadd.xlane.f32.xlu0 %v1530
  %v1532 = vpop.xlane.xlu0 %1531
  %v1533 = vsel %vm1444, %v1348, 0.0
  %v1534 = vadd.f32 %v1346, %v1533
  %1535 = vadd.xlane.f32.xlu0 %v1534
  %v1536 = vpop.xlane.xlu0 %1535
  %v1537 = vsel %vm1444, %v1352, 0.0
  %v1538 = vadd.f32 %v1350, %v1537
  %1539 = vadd.xlane.f32.xlu0 %v1538
  %v1540 = vpop.xlane.xlu0 %1539
  %v1541 = vsel %vm1444, %v1358, 0.0
  %v1542 = vadd.f32 %v1356, %v1541
  %1543 = vadd.xlane.f32.xlu0 %v1542
  %v1544 = vpop.xlane.xlu0 %1543
  %v1545 = vsel %vm1444, %v1362, 0.0
  %v1546 = vadd.f32 %v1360, %v1545
  %1547 = vadd.xlane.f32.xlu0 %v1546
  %v1548 = vpop.xlane.xlu0 %1547
  %v1549 = vsel %vm1444, %v1368, 0.0
  %v1550 = vadd.f32 %v1366, %v1549
  %1551 = vadd.xlane.f32.xlu0 %v1550
  %v1552 = vpop.xlane.xlu0 %1551
  %v1553 = vsel %vm1444, %v1372, 0.0
  %v1554 = vadd.f32 %v1370, %v1553
  %1555 = vadd.xlane.f32.xlu0 %v1554
  %v1556 = vpop.xlane.xlu0 %1555
  %v1557 = vsel %vm1444, %v1378, 0.0
  %v1558 = vadd.f32 %v1376, %v1557
  %1559 = vadd.xlane.f32.xlu0 %v1558
  %v1560 = vpop.xlane.xlu0 %1559
  %v1561 = vsel %vm1444, %v1382, 0.0
  %v1562 = vadd.f32 %v1380, %v1561
  %1563 = vadd.xlane.f32.xlu0 %v1562
  %v1564 = vpop.xlane.xlu0 %1563
  %v1565 = vsel %vm1444, %v1388, 0.0
  %v1566 = vadd.f32 %v1386, %v1565
  %1567 = vadd.xlane.f32.xlu0 %v1566
  %v1568 = vpop.xlane.xlu0 %1567
  %v1569 = vsel %vm1444, %v1392, 0.0
  %v1570 = vadd.f32 %v1390, %v1569
  %1571 = vadd.xlane.f32.xlu0 %v1570
  %v1572 = vpop.xlane.xlu0 %1571
  %v1573 = vsel %vm1444, %v1398, 0.0
  %v1574 = vadd.f32 %v1396, %v1573
  %1575 = vadd.xlane.f32.xlu0 %v1574
  %v1576 = vpop.xlane.xlu0 %1575
  %v1577 = vsel %vm1444, %v1402, 0.0
  %v1578 = vadd.f32 %v1400, %v1577
  %1579 = vadd.xlane.f32.xlu0 %v1578
  %v1580 = vpop.xlane.xlu0 %1579
  %v1581 = vsel %vm1444, %v1408, 0.0
  %v1582 = vadd.f32 %v1406, %v1581
  %1583 = vadd.xlane.f32.xlu0 %v1582
  %v1584 = vpop.xlane.xlu0 %1583
  %v1585 = vsel %vm1444, %v1412, 0.0
  %v1586 = vadd.f32 %v1410, %v1585
  %1587 = vadd.xlane.f32.xlu0 %v1586
  %v1588 = vpop.xlane.xlu0 %1587
  %v1589 = vsel %vm1444, %v1418, 0.0
  %v1590 = vadd.f32 %v1416, %v1589
  %1591 = vadd.xlane.f32.xlu0 %v1590
  %v1592 = vpop.xlane.xlu0 %1591
  %v1593 = vsel %vm1444, %v1422, 0.0
  %v1594 = vadd.f32 %v1420, %v1593
  %1595 = vadd.xlane.f32.xlu0 %v1594
  %v1596 = vpop.xlane.xlu0 %1595
  %v1597 = vsel %vm1444, %v1428, 0.0
  %v1598 = vadd.f32 %v1426, %v1597
  %1599 = vadd.xlane.f32.xlu0 %v1598
  %v1600 = vpop.xlane.xlu0 %1599
  %v1601 = vsel %vm1444, %v1432, 0.0
  %v1602 = vadd.f32 %v1430, %v1601
  %1603 = vadd.xlane.f32.xlu0 %v1602
  %v1604 = vpop.xlane.xlu0 %1603
  %v1605 = vsel %vm1444, %v1438, 0.0
  %v1606 = vadd.f32 %v1436, %v1605
  %1607 = vadd.xlane.f32.xlu0 %v1606
  %v1608 = vpop.xlane.xlu0 %1607
  %v1609 = vsel %vm1444, %v1442, 0.0
  %v1610 = vadd.f32 %v1440, %v1609
  %1611 = vadd.xlane.f32.xlu0 %v1610
  %v1612 = vpop.xlane.xlu0 %1611
  %v1613 = vmul.f32 %v1236, %v1236
  %v1614 = vmul.f32 %v1238, %v1238
  %v1615 = vmul.f32 %v1240, %v1240
  %v1616 = vmul.f32 %v1242, %v1242
  %v1617 = vmul.f32 %v1246, %v1246
  %v1618 = vmul.f32 %v1248, %v1248
  %v1619 = vmul.f32 %v1250, %v1250
  %v1620 = vmul.f32 %v1252, %v1252
  %v1621 = vmul.f32 %v1256, %v1256
  %v1622 = vmul.f32 %v1258, %v1258
  %v1623 = vmul.f32 %v1260, %v1260
  %v1624 = vmul.f32 %v1262, %v1262
  %v1625 = vmul.f32 %v1266, %v1266
  %v1626 = vmul.f32 %v1268, %v1268
  %v1627 = vmul.f32 %v1270, %v1270
  %v1628 = vmul.f32 %v1272, %v1272
  %v1629 = vmul.f32 %v1276, %v1276
  %v1630 = vmul.f32 %v1278, %v1278
  %v1631 = vmul.f32 %v1280, %v1280
  %v1632 = vmul.f32 %v1282, %v1282
  %v1633 = vmul.f32 %v1286, %v1286
  %v1634 = vmul.f32 %v1288, %v1288
  %v1635 = vmul.f32 %v1290, %v1290
  %v1636 = vmul.f32 %v1292, %v1292
  %v1637 = vmul.f32 %v1296, %v1296
  %v1638 = vmul.f32 %v1298, %v1298
  %v1639 = vmul.f32 %v1300, %v1300
  %v1640 = vmul.f32 %v1302, %v1302
  %v1641 = vmul.f32 %v1306, %v1306
  %v1642 = vmul.f32 %v1308, %v1308
  %v1643 = vmul.f32 %v1310, %v1310
  %v1644 = vmul.f32 %v1312, %v1312
  %v1645 = vmul.f32 %v1316, %v1316
  %v1646 = vmul.f32 %v1318, %v1318
  %v1647 = vmul.f32 %v1320, %v1320
  %v1648 = vmul.f32 %v1322, %v1322
  %v1649 = vmul.f32 %v1326, %v1326
  %v1650 = vmul.f32 %v1328, %v1328
  %v1651 = vmul.f32 %v1330, %v1330
  %v1652 = vmul.f32 %v1332, %v1332
  %v1653 = vmul.f32 %v1336, %v1336
  %v1654 = vmul.f32 %v1338, %v1338
  %v1655 = vmul.f32 %v1340, %v1340
  %v1656 = vmul.f32 %v1342, %v1342
  %v1657 = vmul.f32 %v1346, %v1346
  %v1658 = vmul.f32 %v1348, %v1348
  %v1659 = vmul.f32 %v1350, %v1350
  %v1660 = vmul.f32 %v1352, %v1352
  %v1661 = vmul.f32 %v1356, %v1356
  %v1662 = vmul.f32 %v1358, %v1358
  %v1663 = vmul.f32 %v1360, %v1360
  %v1664 = vmul.f32 %v1362, %v1362
  %v1665 = vmul.f32 %v1366, %v1366
  %v1666 = vmul.f32 %v1368, %v1368
  %v1667 = vmul.f32 %v1370, %v1370
  %v1668 = vmul.f32 %v1372, %v1372
  %v1669 = vmul.f32 %v1376, %v1376
  %v1670 = vmul.f32 %v1378, %v1378
  %v1671 = vmul.f32 %v1380, %v1380
  %v1672 = vmul.f32 %v1382, %v1382
  %v1673 = vmul.f32 %v1386, %v1386
  %v1674 = vmul.f32 %v1388, %v1388
  %v1675 = vmul.f32 %v1390, %v1390
  %v1676 = vmul.f32 %v1392, %v1392
  %v1677 = vmul.f32 %v1396, %v1396
  %v1678 = vmul.f32 %v1398, %v1398
  %v1679 = vmul.f32 %v1400, %v1400
  %v1680 = vmul.f32 %v1402, %v1402
  %v1681 = vmul.f32 %v1406, %v1406
  %v1682 = vmul.f32 %v1408, %v1408
  %v1683 = vmul.f32 %v1410, %v1410
  %v1684 = vmul.f32 %v1412, %v1412
  %v1685 = vmul.f32 %v1416, %v1416
  %v1686 = vmul.f32 %v1418, %v1418
  %v1687 = vmul.f32 %v1420, %v1420
  %v1688 = vmul.f32 %v1422, %v1422
  %v1689 = vmul.f32 %v1426, %v1426
  %v1690 = vmul.f32 %v1428, %v1428
  %v1691 = vmul.f32 %v1430, %v1430
  %v1692 = vmul.f32 %v1432, %v1432
  %v1693 = vmul.f32 %v1436, %v1436
  %v1694 = vmul.f32 %v1438, %v1438
  %v1695 = vmul.f32 %v1440, %v1440
  %v1696 = vmul.f32 %v1442, %v1442
  %v1697 = vsel %vm1444, %v1614, 0.0
  %v1698 = vadd.f32 %v1613, %v1697
  %1699 = vadd.xlane.f32.xlu0 %v1698
  %v1700 = vpop.xlane.xlu0 %1699
  %v1701 = vsel %vm1444, %v1616, 0.0
  %v1702 = vadd.f32 %v1615, %v1701
  %1703 = vadd.xlane.f32.xlu0 %v1702
  %v1704 = vpop.xlane.xlu0 %1703
  %v1705 = vsel %vm1444, %v1618, 0.0
  %v1706 = vadd.f32 %v1617, %v1705
  %1707 = vadd.xlane.f32.xlu0 %v1706
  %v1708 = vpop.xlane.xlu0 %1707
  %v1709 = vsel %vm1444, %v1620, 0.0
  %v1710 = vadd.f32 %v1619, %v1709
  %1711 = vadd.xlane.f32.xlu0 %v1710
  %v1712 = vpop.xlane.xlu0 %1711
  %v1713 = vsel %vm1444, %v1622, 0.0
  %v1714 = vadd.f32 %v1621, %v1713
  %1715 = vadd.xlane.f32.xlu0 %v1714
  %v1716 = vpop.xlane.xlu0 %1715
  %v1717 = vsel %vm1444, %v1624, 0.0
  %v1718 = vadd.f32 %v1623, %v1717
  %1719 = vadd.xlane.f32.xlu0 %v1718
  %v1720 = vpop.xlane.xlu0 %1719
  %v1721 = vsel %vm1444, %v1626, 0.0
  %v1722 = vadd.f32 %v1625, %v1721
  %1723 = vadd.xlane.f32.xlu0 %v1722
  %v1724 = vpop.xlane.xlu0 %1723
  %v1725 = vsel %vm1444, %v1628, 0.0
  %v1726 = vadd.f32 %v1627, %v1725
  %1727 = vadd.xlane.f32.xlu0 %v1726
  %v1728 = vpop.xlane.xlu0 %1727
  %v1729 = vsel %vm1444, %v1630, 0.0
  %v1730 = vadd.f32 %v1629, %v1729
  %1731 = vadd.xlane.f32.xlu0 %v1730
  %v1732 = vpop.xlane.xlu0 %1731
  %v1733 = vsel %vm1444, %v1632, 0.0
  %v1734 = vadd.f32 %v1631, %v1733
  %1735 = vadd.xlane.f32.xlu0 %v1734
  %v1736 = vpop.xlane.xlu0 %1735
  %v1737 = vsel %vm1444, %v1634, 0.0
  %v1738 = vadd.f32 %v1633, %v1737
  %1739 = vadd.xlane.f32.xlu0 %v1738
  %v1740 = vpop.xlane.xlu0 %1739
  %v1741 = vsel %vm1444, %v1636, 0.0
  %v1742 = vadd.f32 %v1635, %v1741
  %1743 = vadd.xlane.f32.xlu0 %v1742
  %v1744 = vpop.xlane.xlu0 %1743
  %v1745 = vsel %vm1444, %v1638, 0.0
  %v1746 = vadd.f32 %v1637, %v1745
  %1747 = vadd.xlane.f32.xlu0 %v1746
  %v1748 = vpop.xlane.xlu0 %1747
  %v1749 = vsel %vm1444, %v1640, 0.0
  %v1750 = vadd.f32 %v1639, %v1749
  %1751 = vadd.xlane.f32.xlu0 %v1750
  %v1752 = vpop.xlane.xlu0 %1751
  %v1753 = vsel %vm1444, %v1642, 0.0
  %v1754 = vadd.f32 %v1641, %v1753
  %1755 = vadd.xlane.f32.xlu0 %v1754
  %v1756 = vpop.xlane.xlu0 %1755
  %v1757 = vsel %vm1444, %v1644, 0.0
  %v1758 = vadd.f32 %v1643, %v1757
  %1759 = vadd.xlane.f32.xlu0 %v1758
  %v1760 = vpop.xlane.xlu0 %1759
  %v1761 = vsel %vm1444, %v1646, 0.0
  %v1762 = vadd.f32 %v1645, %v1761
  %1763 = vadd.xlane.f32.xlu0 %v1762
  %v1764 = vpop.xlane.xlu0 %1763
  %v1765 = vsel %vm1444, %v1648, 0.0
  %v1766 = vadd.f32 %v1647, %v1765
  %1767 = vadd.xlane.f32.xlu0 %v1766
  %v1768 = vpop.xlane.xlu0 %1767
  %v1769 = vsel %vm1444, %v1650, 0.0
  %v1770 = vadd.f32 %v1649, %v1769
  %1771 = vadd.xlane.f32.xlu0 %v1770
  %v1772 = vpop.xlane.xlu0 %1771
  %v1773 = vsel %vm1444, %v1652, 0.0
  %v1774 = vadd.f32 %v1651, %v1773
  %1775 = vadd.xlane.f32.xlu0 %v1774
  %v1776 = vpop.xlane.xlu0 %1775
  %v1777 = vsel %vm1444, %v1654, 0.0
  %v1778 = vadd.f32 %v1653, %v1777
  %1779 = vadd.xlane.f32.xlu0 %v1778
  %v1780 = vpop.xlane.xlu0 %1779
  %v1781 = vsel %vm1444, %v1656, 0.0
  %v1782 = vadd.f32 %v1655, %v1781
  %1783 = vadd.xlane.f32.xlu0 %v1782
  %v1784 = vpop.xlane.xlu0 %1783
  %v1785 = vsel %vm1444, %v1658, 0.0
  %v1786 = vadd.f32 %v1657, %v1785
  %1787 = vadd.xlane.f32.xlu0 %v1786
  %v1788 = vpop.xlane.xlu0 %1787
  %v1789 = vsel %vm1444, %v1660, 0.0
  %v1790 = vadd.f32 %v1659, %v1789
  %1791 = vadd.xlane.f32.xlu0 %v1790
  %v1792 = vpop.xlane.xlu0 %1791
  %v1793 = vsel %vm1444, %v1662, 0.0
  %v1794 = vadd.f32 %v1661, %v1793
  %1795 = vadd.xlane.f32.xlu0 %v1794
  %v1796 = vpop.xlane.xlu0 %1795
  %v1797 = vsel %vm1444, %v1664, 0.0
  %v1798 = vadd.f32 %v1663, %v1797
  %1799 = vadd.xlane.f32.xlu0 %v1798
  %v1800 = vpop.xlane.xlu0 %1799
  %v1801 = vsel %vm1444, %v1666, 0.0
  %v1802 = vadd.f32 %v1665, %v1801
  %1803 = vadd.xlane.f32.xlu0 %v1802
  %v1804 = vpop.xlane.xlu0 %1803
  %v1805 = vsel %vm1444, %v1668, 0.0
  %v1806 = vadd.f32 %v1667, %v1805
  %1807 = vadd.xlane.f32.xlu0 %v1806
  %v1808 = vpop.xlane.xlu0 %1807
  %v1809 = vsel %vm1444, %v1670, 0.0
  %v1810 = vadd.f32 %v1669, %v1809
  %1811 = vadd.xlane.f32.xlu0 %v1810
  %v1812 = vpop.xlane.xlu0 %1811
  %v1813 = vsel %vm1444, %v1672, 0.0
  %v1814 = vadd.f32 %v1671, %v1813
  %1815 = vadd.xlane.f32.xlu0 %v1814
  %v1816 = vpop.xlane.xlu0 %1815
  %v1817 = vsel %vm1444, %v1674, 0.0
  %v1818 = vadd.f32 %v1673, %v1817
  %1819 = vadd.xlane.f32.xlu0 %v1818
  %v1820 = vpop.xlane.xlu0 %1819
  %v1821 = vsel %vm1444, %v1676, 0.0
  %v1822 = vadd.f32 %v1675, %v1821
  %1823 = vadd.xlane.f32.xlu0 %v1822
  %v1824 = vpop.xlane.xlu0 %1823
  %v1825 = vsel %vm1444, %v1678, 0.0
  %v1826 = vadd.f32 %v1677, %v1825
  %1827 = vadd.xlane.f32.xlu0 %v1826
  %v1828 = vpop.xlane.xlu0 %1827
  %v1829 = vsel %vm1444, %v1680, 0.0
  %v1830 = vadd.f32 %v1679, %v1829
  %1831 = vadd.xlane.f32.xlu0 %v1830
  %v1832 = vpop.xlane.xlu0 %1831
  %v1833 = vsel %vm1444, %v1682, 0.0
  %v1834 = vadd.f32 %v1681, %v1833
  %1835 = vadd.xlane.f32.xlu0 %v1834
  %v1836 = vpop.xlane.xlu0 %1835
  %v1837 = vsel %vm1444, %v1684, 0.0
  %v1838 = vadd.f32 %v1683, %v1837
  %1839 = vadd.xlane.f32.xlu0 %v1838
  %v1840 = vpop.xlane.xlu0 %1839
  %v1841 = vsel %vm1444, %v1686, 0.0
  %v1842 = vadd.f32 %v1685, %v1841
  %1843 = vadd.xlane.f32.xlu0 %v1842
  %v1844 = vpop.xlane.xlu0 %1843
  %v1845 = vsel %vm1444, %v1688, 0.0
  %v1846 = vadd.f32 %v1687, %v1845
  %1847 = vadd.xlane.f32.xlu0 %v1846
  %v1848 = vpop.xlane.xlu0 %1847
  %v1849 = vsel %vm1444, %v1690, 0.0
  %v1850 = vadd.f32 %v1689, %v1849
  %1851 = vadd.xlane.f32.xlu0 %v1850
  %v1852 = vpop.xlane.xlu0 %1851
  %v1853 = vsel %vm1444, %v1692, 0.0
  %v1854 = vadd.f32 %v1691, %v1853
  %1855 = vadd.xlane.f32.xlu0 %v1854
  %v1856 = vpop.xlane.xlu0 %1855
  %v1857 = vsel %vm1444, %v1694, 0.0
  %v1858 = vadd.f32 %v1693, %v1857
  %1859 = vadd.xlane.f32.xlu0 %v1858
  %v1860 = vpop.xlane.xlu0 %1859
  %v1861 = vsel %vm1444, %v1696, 0.0
  %v1862 = vadd.f32 %v1695, %v1861
  %1863 = vadd.xlane.f32.xlu0 %v1862
  %v1864 = vpop.xlane.xlu0 %1863
  %v1865 = vmul.f32 %v1448, 0.0051020407
  %v1866 = vmul.f32 %v1452, 0.0051020407
  %v1867 = vmul.f32 %v1456, 0.0051020407
  %v1868 = vmul.f32 %v1460, 0.0051020407
  %v1869 = vmul.f32 %v1464, 0.0051020407
  %v1870 = vmul.f32 %v1468, 0.0051020407
  %v1871 = vmul.f32 %v1472, 0.0051020407
  %v1872 = vmul.f32 %v1476, 0.0051020407
  %v1873 = vmul.f32 %v1480, 0.0051020407
  %v1874 = vmul.f32 %v1484, 0.0051020407
  %v1875 = vmul.f32 %v1488, 0.0051020407
  %v1876 = vmul.f32 %v1492, 0.0051020407
  %v1877 = vmul.f32 %v1496, 0.0051020407
  %v1878 = vmul.f32 %v1500, 0.0051020407
  %v1879 = vmul.f32 %v1504, 0.0051020407
  %v1880 = vmul.f32 %v1508, 0.0051020407
  %v1881 = vmul.f32 %v1512, 0.0051020407
  %v1882 = vmul.f32 %v1516, 0.0051020407
  %v1883 = vmul.f32 %v1520, 0.0051020407
  %v1884 = vmul.f32 %v1524, 0.0051020407
  %v1885 = vmul.f32 %v1528, 0.0051020407
  %v1886 = vmul.f32 %v1532, 0.0051020407
  %v1887 = vmul.f32 %v1536, 0.0051020407
  %v1888 = vmul.f32 %v1540, 0.0051020407
  %v1889 = vmul.f32 %v1544, 0.0051020407
  %v1890 = vmul.f32 %v1548, 0.0051020407
  %v1891 = vmul.f32 %v1552, 0.0051020407
  %v1892 = vmul.f32 %v1556, 0.0051020407
  %v1893 = vmul.f32 %v1560, 0.0051020407
  %v1894 = vmul.f32 %v1564, 0.0051020407
  %v1895 = vmul.f32 %v1568, 0.0051020407
  %v1896 = vmul.f32 %v1572, 0.0051020407
  %v1897 = vmul.f32 %v1576, 0.0051020407
  %v1898 = vmul.f32 %v1580, 0.0051020407
  %v1899 = vmul.f32 %v1584, 0.0051020407
  %v1900 = vmul.f32 %v1588, 0.0051020407
  %v1901 = vmul.f32 %v1592, 0.0051020407
  %v1902 = vmul.f32 %v1596, 0.0051020407
  %v1903 = vmul.f32 %v1600, 0.0051020407
  %v1904 = vmul.f32 %v1604, 0.0051020407
  %v1905 = vmul.f32 %v1608, 0.0051020407
  %v1906 = vmul.f32 %v1612, 0.0051020407
  %v1907 = vmul.f32 %v1700, 0.0051020407
  %v1908 = vmul.f32 %v1704, 0.0051020407
  %v1909 = vmul.f32 %v1708, 0.0051020407
  %v1910 = vmul.f32 %v1712, 0.0051020407
  %v1911 = vmul.f32 %v1716, 0.0051020407
  %v1912 = vmul.f32 %v1720, 0.0051020407
  %v1913 = vmul.f32 %v1724, 0.0051020407
  %v1914 = vmul.f32 %v1728, 0.0051020407
  %v1915 = vmul.f32 %v1732, 0.0051020407
  %v1916 = vmul.f32 %v1736, 0.0051020407
  %v1917 = vmul.f32 %v1740, 0.0051020407
  %v1918 = vmul.f32 %v1744, 0.0051020407
  %v1919 = vmul.f32 %v1748, 0.0051020407
  %v1920 = vmul.f32 %v1752, 0.0051020407
  %v1921 = vmul.f32 %v1756, 0.0051020407
  %v1922 = vmul.f32 %v1760, 0.0051020407
  %v1923 = vmul.f32 %v1764, 0.0051020407
  %v1924 = vmul.f32 %v1768, 0.0051020407
  %v1925 = vmul.f32 %v1772, 0.0051020407
  %v1926 = vmul.f32 %v1776, 0.0051020407
  %v1927 = vmul.f32 %v1780, 0.0051020407
  %v1928 = vmul.f32 %v1784, 0.0051020407
  %v1929 = vmul.f32 %v1788, 0.0051020407
  %v1930 = vmul.f32 %v1792, 0.0051020407
  %v1931 = vmul.f32 %v1796, 0.0051020407
  %v1932 = vmul.f32 %v1800, 0.0051020407
  %v1933 = vmul.f32 %v1804, 0.0051020407
  %v1934 = vmul.f32 %v1808, 0.0051020407
  %v1935 = vmul.f32 %v1812, 0.0051020407
  %v1936 = vmul.f32 %v1816, 0.0051020407
  %v1937 = vmul.f32 %v1820, 0.0051020407
  %v1938 = vmul.f32 %v1824, 0.0051020407
  %v1939 = vmul.f32 %v1828, 0.0051020407
  %v1940 = vmul.f32 %v1832, 0.0051020407
  %v1941 = vmul.f32 %v1836, 0.0051020407
  %v1942 = vmul.f32 %v1840, 0.0051020407
  %v1943 = vmul.f32 %v1844, 0.0051020407
  %v1944 = vmul.f32 %v1848, 0.0051020407
  %v1945 = vmul.f32 %v1852, 0.0051020407
  %v1946 = vmul.f32 %v1856, 0.0051020407
  %v1947 = vmul.f32 %v1860, 0.0051020407
  %v1948 = vmul.f32 %v1864, 0.0051020407
  %v1949 = vmul.f32 %v1865, %v1865
  %v1950 = vmul.f32 %v1866, %v1866
  %v1951 = vmul.f32 %v1867, %v1867
  %v1952 = vmul.f32 %v1868, %v1868
  %v1953 = vmul.f32 %v1869, %v1869
  %v1954 = vmul.f32 %v1870, %v1870
  %v1955 = vmul.f32 %v1871, %v1871
  %v1956 = vmul.f32 %v1872, %v1872
  %v1957 = vmul.f32 %v1873, %v1873
  %v1958 = vmul.f32 %v1874, %v1874
  %v1959 = vmul.f32 %v1875, %v1875
  %v1960 = vmul.f32 %v1876, %v1876
  %v1961 = vmul.f32 %v1877, %v1877
  %v1962 = vmul.f32 %v1878, %v1878
  %v1963 = vmul.f32 %v1879, %v1879
  %v1964 = vmul.f32 %v1880, %v1880
  %v1965 = vmul.f32 %v1881, %v1881
  %v1966 = vmul.f32 %v1882, %v1882
  %v1967 = vmul.f32 %v1883, %v1883
  %v1968 = vmul.f32 %v1884, %v1884
  %v1969 = vmul.f32 %v1885, %v1885
  %v1970 = vmul.f32 %v1886, %v1886
  %v1971 = vmul.f32 %v1887, %v1887
  %v1972 = vmul.f32 %v1888, %v1888
  %v1973 = vmul.f32 %v1889, %v1889
  %v1974 = vmul.f32 %v1890, %v1890
  %v1975 = vmul.f32 %v1891, %v1891
  %v1976 = vmul.f32 %v1892, %v1892
  %v1977 = vmul.f32 %v1893, %v1893
  %v1978 = vmul.f32 %v1894, %v1894
  %v1979 = vmul.f32 %v1895, %v1895
  %v1980 = vmul.f32 %v1896, %v1896
  %v1981 = vmul.f32 %v1897, %v1897
  %v1982 = vmul.f32 %v1898, %v1898
  %v1983 = vmul.f32 %v1899, %v1899
  %v1984 = vmul.f32 %v1900, %v1900
  %v1985 = vmul.f32 %v1901, %v1901
  %v1986 = vmul.f32 %v1902, %v1902
  %v1987 = vmul.f32 %v1903, %v1903
  %v1988 = vmul.f32 %v1904, %v1904
  %v1989 = vmul.f32 %v1905, %v1905
  %v1990 = vmul.f32 %v1906, %v1906
  %v1991 = vsub.f32 %v1907, %v1949
  %v1992 = vsub.f32 %v1908, %v1950
  %v1993 = vsub.f32 %v1909, %v1951
  %v1994 = vsub.f32 %v1910, %v1952
  %v1995 = vsub.f32 %v1911, %v1953
  %v1996 = vsub.f32 %v1912, %v1954
  %v1997 = vsub.f32 %v1913, %v1955
  %v1998 = vsub.f32 %v1914, %v1956
  %v1999 = vsub.f32 %v1915, %v1957
  %v2000 = vsub.f32 %v1916, %v1958
  %v2001 = vsub.f32 %v1917, %v1959
  %v2002 = vsub.f32 %v1918, %v1960
  %v2003 = vsub.f32 %v1919, %v1961
  %v2004 = vsub.f32 %v1920, %v1962
  %v2005 = vsub.f32 %v1921, %v1963
  %v2006 = vsub.f32 %v1922, %v1964
  %v2007 = vsub.f32 %v1923, %v1965
  %v2008 = vsub.f32 %v1924, %v1966
  %v2009 = vsub.f32 %v1925, %v1967
  %v2010 = vsub.f32 %v1926, %v1968
  %v2011 = vsub.f32 %v1927, %v1969
  %v2012 = vsub.f32 %v1928, %v1970
  %v2013 = vsub.f32 %v1929, %v1971
  %v2014 = vsub.f32 %v1930, %v1972
  %v2015 = vsub.f32 %v1931, %v1973
  %v2016 = vsub.f32 %v1932, %v1974
  %v2017 = vsub.f32 %v1933, %v1975
  %v2018 = vsub.f32 %v1934, %v1976
  %v2019 = vsub.f32 %v1935, %v1977
  %v2020 = vsub.f32 %v1936, %v1978
  %v2021 = vsub.f32 %v1937, %v1979
  %v2022 = vsub.f32 %v1938, %v1980
  %v2023 = vsub.f32 %v1939, %v1981
  %v2024 = vsub.f32 %v1940, %v1982
  %v2025 = vsub.f32 %v1941, %v1983
  %v2026 = vsub.f32 %v1942, %v1984
  %v2027 = vsub.f32 %v1943, %v1985
  %v2028 = vsub.f32 %v1944, %v1986
  %v2029 = vsub.f32 %v1945, %v1987
  %v2030 = vsub.f32 %v1946, %v1988
  %v2031 = vsub.f32 %v1947, %v1989
  %v2032 = vsub.f32 %v1948, %v1990
  %v2033 = vld [vmem:[%s4] sm:$0xff]
  %v2034 = vld [vmem:[%s4 + $0x8] sm:$0xff]
  %v2035 = vld [vmem:[%s4 + $0x10] sm:$0xff]
  %v2036 = vld [vmem:[%s4 + $0x18] sm:$0xff]
  %v2037 = vld [vmem:[%s4 + $0x20] sm:$0xff]
  %v2038 = vld [vmem:[%s4 + $0x28] sm:$0xff]
  %v2039 = vld [vmem:[%s4 + $0x30] sm:$0xff]
  %v2040 = vld [vmem:[%s4 + $0x38] sm:$0xff]
  %v2041 = vld [vmem:[%s4 + $0x40] sm:$0xff]
  %v2042 = vld [vmem:[%s4 + $0x48] sm:$0xff]
  %v2043 = vld [vmem:[%s4 + $0x50] sm:$0xff]
  %v2044 = vld [vmem:[%s4 + $0x58] sm:$0xff]
  %v2045 = vld [vmem:[%s4 + $0x60] sm:$0xff]
  %v2046 = vld [vmem:[%s4 + $0x68] sm:$0xff]
  %v2047 = vld [vmem:[%s4 + $0x70] sm:$0xff]
  %v2048 = vld [vmem:[%s4 + $0x78] sm:$0xff]
  %v2049 = vld [vmem:[%s4 + $0x80] sm:$0xff]
  %v2050 = vld [vmem:[%s4 + $0x88] sm:$0xff]
  %v2051 = vld [vmem:[%s4 + $0x90] sm:$0xff]
  %v2052 = vld [vmem:[%s4 + $0x98] sm:$0xff]
  %v2053 = vld [vmem:[%s4 + $0xa0] sm:$0xff]
  %v2054 = vld [vmem:[%s4 + $0xa8] sm:$0xff]
  %v2055 = vld [vmem:[%s4 + $0xb0] sm:$0xff]
  %v2056 = vld [vmem:[%s4 + $0xb8] sm:$0xff]
  %v2057 = vld [vmem:[%s4 + $0xc0] sm:$0xff]
  %v2058 = vld [vmem:[%s4 + $0xc8] sm:$0xff]
  %v2059 = vld [vmem:[%s4 + $0xd0] sm:$0xff]
  %v2060 = vld [vmem:[%s4 + $0xd8] sm:$0xff]
  %v2061 = vld [vmem:[%s4 + $0xe0] sm:$0xff]
  %v2062 = vld [vmem:[%s4 + $0xe8] sm:$0xff]
  %v2063 = vld [vmem:[%s4 + $0xf0] sm:$0xff]
  %v2064 = vld [vmem:[%s4 + $0xf8] sm:$0xff]
  %v2065 = vld [vmem:[%s4 + $0x100] sm:$0xff]
  %v2066 = vld [vmem:[%s4 + $0x108] sm:$0xff]
  %v2067 = vld [vmem:[%s4 + $0x110] sm:$0xff]
  %v2068 = vld [vmem:[%s4 + $0x118] sm:$0xff]
  %v2069 = vld [vmem:[%s4 + $0x120] sm:$0xff]
  %v2070 = vld [vmem:[%s4 + $0x128] sm:$0xff]
  %v2071 = vld [vmem:[%s4 + $0x130] sm:$0xff]
  %v2072 = vld [vmem:[%s4 + $0x138] sm:$0xff]
  %v2073 = vld [vmem:[%s4 + $0x140] sm:$0xff]
  %v2074 = vld [vmem:[%s4 + $0x148] sm:$0xff]
  %v2075 = vadd.f32 %v1991, 1e-05
  %v2076 = vadd.f32 %v1992, 1e-05
  %v2077 = vadd.f32 %v1993, 1e-05
  %v2078 = vadd.f32 %v1994, 1e-05
  %v2079 = vadd.f32 %v1995, 1e-05
  %v2080 = vadd.f32 %v1996, 1e-05
  %v2081 = vadd.f32 %v1997, 1e-05
  %v2082 = vadd.f32 %v1998, 1e-05
  %v2083 = vadd.f32 %v1999, 1e-05
  %v2084 = vadd.f32 %v2000, 1e-05
  %v2085 = vadd.f32 %v2001, 1e-05
  %v2086 = vadd.f32 %v2002, 1e-05
  %v2087 = vadd.f32 %v2003, 1e-05
  %v2088 = vadd.f32 %v2004, 1e-05
  %v2089 = vadd.f32 %v2005, 1e-05
  %v2090 = vadd.f32 %v2006, 1e-05
  %v2091 = vadd.f32 %v2007, 1e-05
  %v2092 = vadd.f32 %v2008, 1e-05
  %v2093 = vadd.f32 %v2009, 1e-05
  %v2094 = vadd.f32 %v2010, 1e-05
  %v2095 = vadd.f32 %v2011, 1e-05
  %v2096 = vadd.f32 %v2012, 1e-05
  %v2097 = vadd.f32 %v2013, 1e-05
  %v2098 = vadd.f32 %v2014, 1e-05
  %v2099 = vadd.f32 %v2015, 1e-05
  %v2100 = vadd.f32 %v2016, 1e-05
  %v2101 = vadd.f32 %v2017, 1e-05
  %v2102 = vadd.f32 %v2018, 1e-05
  %v2103 = vadd.f32 %v2019, 1e-05
  %v2104 = vadd.f32 %v2020, 1e-05
  %v2105 = vadd.f32 %v2021, 1e-05
  %v2106 = vadd.f32 %v2022, 1e-05
  %v2107 = vadd.f32 %v2023, 1e-05
  %v2108 = vadd.f32 %v2024, 1e-05
  %v2109 = vadd.f32 %v2025, 1e-05
  %v2110 = vadd.f32 %v2026, 1e-05
  %v2111 = vadd.f32 %v2027, 1e-05
  %v2112 = vadd.f32 %v2028, 1e-05
  %v2113 = vadd.f32 %v2029, 1e-05
  %v2114 = vadd.f32 %v2030, 1e-05
  %v2115 = vadd.f32 %v2031, 1e-05
  %v2116 = vadd.f32 %v2032, 1e-05
  %v2117 = vrsqrt.pop %v2075
  %v2118 = vrsqrt.pop %v2076
  %v2119 = vrsqrt.pop %v2077
  %v2120 = vrsqrt.pop %v2078
  %v2121 = vrsqrt.pop %v2079
  %v2122 = vrsqrt.pop %v2080
  %v2123 = vrsqrt.pop %v2081
  %v2124 = vrsqrt.pop %v2082
  %v2125 = vrsqrt.pop %v2083
  %v2126 = vrsqrt.pop %v2084
  %v2127 = vrsqrt.pop %v2085
  %v2128 = vrsqrt.pop %v2086
  %v2129 = vrsqrt.pop %v2087
  %v2130 = vrsqrt.pop %v2088
  %v2131 = vrsqrt.pop %v2089
  %v2132 = vrsqrt.pop %v2090
  %v2133 = vrsqrt.pop %v2091
  %v2134 = vrsqrt.pop %v2092
  %v2135 = vrsqrt.pop %v2093
  %v2136 = vrsqrt.pop %v2094
  %v2137 = vrsqrt.pop %v2095
  %v2138 = vrsqrt.pop %v2096
  %v2139 = vrsqrt.pop %v2097
  %v2140 = vrsqrt.pop %v2098
  %v2141 = vrsqrt.pop %v2099
  %v2142 = vrsqrt.pop %v2100
  %v2143 = vrsqrt.pop %v2101
  %v2144 = vrsqrt.pop %v2102
  %v2145 = vrsqrt.pop %v2103
  %v2146 = vrsqrt.pop %v2104
  %v2147 = vrsqrt.pop %v2105
  %v2148 = vrsqrt.pop %v2106
  %v2149 = vrsqrt.pop %v2107
  %v2150 = vrsqrt.pop %v2108
  %v2151 = vrsqrt.pop %v2109
  %v2152 = vrsqrt.pop %v2110
  %v2153 = vrsqrt.pop %v2111
  %v2154 = vrsqrt.pop %v2112
  %v2155 = vrsqrt.pop %v2113
  %v2156 = vrsqrt.pop %v2114
  %v2157 = vrsqrt.pop %v2115
  %v2158 = vrsqrt.pop %v2116
  %v2159 = vmul.f32 %v2033, %v2117
  %v2160 = vmul.f32 %v2034, %v2118
  %v2161 = vmul.f32 %v2035, %v2119
  %v2162 = vmul.f32 %v2036, %v2120
  %v2163 = vmul.f32 %v2037, %v2121
  %v2164 = vmul.f32 %v2038, %v2122
  %v2165 = vmul.f32 %v2039, %v2123
  %v2166 = vmul.f32 %v2040, %v2124
  %v2167 = vmul.f32 %v2041, %v2125
  %v2168 = vmul.f32 %v2042, %v2126
  %v2169 = vmul.f32 %v2043, %v2127
  %v2170 = vmul.f32 %v2044, %v2128
  %v2171 = vmul.f32 %v2045, %v2129
  %v2172 = vmul.f32 %v2046, %v2130
  %v2173 = vmul.f32 %v2047, %v2131
  %v2174 = vmul.f32 %v2048, %v2132
  %v2175 = vmul.f32 %v2049, %v2133
  %v2176 = vmul.f32 %v2050, %v2134
  %v2177 = vmul.f32 %v2051, %v2135
  %v2178 = vmul.f32 %v2052, %v2136
  %v2179 = vmul.f32 %v2053, %v2137
  %v2180 = vmul.f32 %v2054, %v2138
  %v2181 = vmul.f32 %v2055, %v2139
  %v2182 = vmul.f32 %v2056, %v2140
  %v2183 = vmul.f32 %v2057, %v2141
  %v2184 = vmul.f32 %v2058, %v2142
  %v2185 = vmul.f32 %v2059, %v2143
  %v2186 = vmul.f32 %v2060, %v2144
  %v2187 = vmul.f32 %v2061, %v2145
  %v2188 = vmul.f32 %v2062, %v2146
  %v2189 = vmul.f32 %v2063, %v2147
  %v2190 = vmul.f32 %v2064, %v2148
  %v2191 = vmul.f32 %v2065, %v2149
  %v2192 = vmul.f32 %v2066, %v2150
  %v2193 = vmul.f32 %v2067, %v2151
  %v2194 = vmul.f32 %v2068, %v2152
  %v2195 = vmul.f32 %v2069, %v2153
  %v2196 = vmul.f32 %v2070, %v2154
  %v2197 = vmul.f32 %v2071, %v2155
  %v2198 = vmul.f32 %v2072, %v2156
  %v2199 = vmul.f32 %v2073, %v2157
  %v2200 = vmul.f32 %v2074, %v2158
  %v2201 = vld [vmem:[%s5] sm:$0xff]
  %v2202 = vld [vmem:[%s5 + $0x8] sm:$0xff]
  %v2203 = vld [vmem:[%s5 + $0x10] sm:$0xff]
  %v2204 = vld [vmem:[%s5 + $0x18] sm:$0xff]
  %v2205 = vld [vmem:[%s5 + $0x20] sm:$0xff]
  %v2206 = vld [vmem:[%s5 + $0x28] sm:$0xff]
  %v2207 = vld [vmem:[%s5 + $0x30] sm:$0xff]
  %v2208 = vld [vmem:[%s5 + $0x38] sm:$0xff]
  %v2209 = vld [vmem:[%s5 + $0x40] sm:$0xff]
  %v2210 = vld [vmem:[%s5 + $0x48] sm:$0xff]
  %v2211 = vld [vmem:[%s5 + $0x50] sm:$0xff]
  %v2212 = vld [vmem:[%s5 + $0x58] sm:$0xff]
  %v2213 = vld [vmem:[%s5 + $0x60] sm:$0xff]
  %v2214 = vld [vmem:[%s5 + $0x68] sm:$0xff]
  %v2215 = vld [vmem:[%s5 + $0x70] sm:$0xff]
  %v2216 = vld [vmem:[%s5 + $0x78] sm:$0xff]
  %v2217 = vld [vmem:[%s5 + $0x80] sm:$0xff]
  %v2218 = vld [vmem:[%s5 + $0x88] sm:$0xff]
  %v2219 = vld [vmem:[%s5 + $0x90] sm:$0xff]
  %v2220 = vld [vmem:[%s5 + $0x98] sm:$0xff]
  %v2221 = vld [vmem:[%s5 + $0xa0] sm:$0xff]
  %v2222 = vld [vmem:[%s5 + $0xa8] sm:$0xff]
  %v2223 = vld [vmem:[%s5 + $0xb0] sm:$0xff]
  %v2224 = vld [vmem:[%s5 + $0xb8] sm:$0xff]
  %v2225 = vld [vmem:[%s5 + $0xc0] sm:$0xff]
  %v2226 = vld [vmem:[%s5 + $0xc8] sm:$0xff]
  %v2227 = vld [vmem:[%s5 + $0xd0] sm:$0xff]
  %v2228 = vld [vmem:[%s5 + $0xd8] sm:$0xff]
  %v2229 = vld [vmem:[%s5 + $0xe0] sm:$0xff]
  %v2230 = vld [vmem:[%s5 + $0xe8] sm:$0xff]
  %v2231 = vld [vmem:[%s5 + $0xf0] sm:$0xff]
  %v2232 = vld [vmem:[%s5 + $0xf8] sm:$0xff]
  %v2233 = vld [vmem:[%s5 + $0x100] sm:$0xff]
  %v2234 = vld [vmem:[%s5 + $0x108] sm:$0xff]
  %v2235 = vld [vmem:[%s5 + $0x110] sm:$0xff]
  %v2236 = vld [vmem:[%s5 + $0x118] sm:$0xff]
  %v2237 = vld [vmem:[%s5 + $0x120] sm:$0xff]
  %v2238 = vld [vmem:[%s5 + $0x128] sm:$0xff]
  %v2239 = vld [vmem:[%s5 + $0x130] sm:$0xff]
  %v2240 = vld [vmem:[%s5 + $0x138] sm:$0xff]
  %v2241 = vld [vmem:[%s5 + $0x140] sm:$0xff]
  %v2242 = vld [vmem:[%s5 + $0x148] sm:$0xff]
  %v2243 = vmul.f32 %v1865, %v2159
  %v2244 = vmul.f32 %v1866, %v2160
  %v2245 = vmul.f32 %v1867, %v2161
  %v2246 = vmul.f32 %v1868, %v2162
  %v2247 = vmul.f32 %v1869, %v2163
  %v2248 = vmul.f32 %v1870, %v2164
  %v2249 = vmul.f32 %v1871, %v2165
  %v2250 = vmul.f32 %v1872, %v2166
  %v2251 = vmul.f32 %v1873, %v2167
  %v2252 = vmul.f32 %v1874, %v2168
  %v2253 = vmul.f32 %v1875, %v2169
  %v2254 = vmul.f32 %v1876, %v2170
  %v2255 = vmul.f32 %v1877, %v2171
  %v2256 = vmul.f32 %v1878, %v2172
  %v2257 = vmul.f32 %v1879, %v2173
  %v2258 = vmul.f32 %v1880, %v2174
  %v2259 = vmul.f32 %v1881, %v2175
  %v2260 = vmul.f32 %v1882, %v2176
  %v2261 = vmul.f32 %v1883, %v2177
  %v2262 = vmul.f32 %v1884, %v2178
  %v2263 = vmul.f32 %v1885, %v2179
  %v2264 = vmul.f32 %v1886, %v2180
  %v2265 = vmul.f32 %v1887, %v2181
  %v2266 = vmul.f32 %v1888, %v2182
  %v2267 = vmul.f32 %v1889, %v2183
  %v2268 = vmul.f32 %v1890, %v2184
  %v2269 = vmul.f32 %v1891, %v2185
  %v2270 = vmul.f32 %v1892, %v2186
  %v2271 = vmul.f32 %v1893, %v2187
  %v2272 = vmul.f32 %v1894, %v2188
  %v2273 = vmul.f32 %v1895, %v2189
  %v2274 = vmul.f32 %v1896, %v2190
  %v2275 = vmul.f32 %v1897, %v2191
  %v2276 = vmul.f32 %v1898, %v2192
  %v2277 = vmul.f32 %v1899, %v2193
  %v2278 = vmul.f32 %v1900, %v2194
  %v2279 = vmul.f32 %v1901, %v2195
  %v2280 = vmul.f32 %v1902, %v2196
  %v2281 = vmul.f32 %v1903, %v2197
  %v2282 = vmul.f32 %v1904, %v2198
  %v2283 = vmul.f32 %v1905, %v2199
  %v2284 = vmul.f32 %v1906, %v2200
  %v2285 = vsub.f32 %v2201, %v2243
  %v2286 = vsub.f32 %v2202, %v2244
  %v2287 = vsub.f32 %v2203, %v2245
  %v2288 = vsub.f32 %v2204, %v2246
  %v2289 = vsub.f32 %v2205, %v2247
  %v2290 = vsub.f32 %v2206, %v2248
  %v2291 = vsub.f32 %v2207, %v2249
  %v2292 = vsub.f32 %v2208, %v2250
  %v2293 = vsub.f32 %v2209, %v2251
  %v2294 = vsub.f32 %v2210, %v2252
  %v2295 = vsub.f32 %v2211, %v2253
  %v2296 = vsub.f32 %v2212, %v2254
  %v2297 = vsub.f32 %v2213, %v2255
  %v2298 = vsub.f32 %v2214, %v2256
  %v2299 = vsub.f32 %v2215, %v2257
  %v2300 = vsub.f32 %v2216, %v2258
  %v2301 = vsub.f32 %v2217, %v2259
  %v2302 = vsub.f32 %v2218, %v2260
  %v2303 = vsub.f32 %v2219, %v2261
  %v2304 = vsub.f32 %v2220, %v2262
  %v2305 = vsub.f32 %v2221, %v2263
  %v2306 = vsub.f32 %v2222, %v2264
  %v2307 = vsub.f32 %v2223, %v2265
  %v2308 = vsub.f32 %v2224, %v2266
  %v2309 = vsub.f32 %v2225, %v2267
  %v2310 = vsub.f32 %v2226, %v2268
  %v2311 = vsub.f32 %v2227, %v2269
  %v2312 = vsub.f32 %v2228, %v2270
  %v2313 = vsub.f32 %v2229, %v2271
  %v2314 = vsub.f32 %v2230, %v2272
  %v2315 = vsub.f32 %v2231, %v2273
  %v2316 = vsub.f32 %v2232, %v2274
  %v2317 = vsub.f32 %v2233, %v2275
  %v2318 = vsub.f32 %v2234, %v2276
  %v2319 = vsub.f32 %v2235, %v2277
  %v2320 = vsub.f32 %v2236, %v2278
  %v2321 = vsub.f32 %v2237, %v2279
  %v2322 = vsub.f32 %v2238, %v2280
  %v2323 = vsub.f32 %v2239, %v2281
  %v2324 = vsub.f32 %v2240, %v2282
  %v2325 = vsub.f32 %v2241, %v2283
  %v2326 = vsub.f32 %v2242, %v2284
  %v2327 = vld [vmem:[%s1] sm:$0xff]
  %v2328 = vld [vmem:[%s1 + $0x8] sm:$0xff]
  %v2329 = vld [vmem:[%s1 + $0x10] sm:$0xff]
  %v2330 = vld [vmem:[%s1 + $0x18] sm:$0xff]
  %v2331 = vld [vmem:[%s1 + $0x20] sm:$0xff]
  %v2332 = vld [vmem:[%s1 + $0x28] sm:$0xff]
  %v2333 = vld [vmem:[%s1 + $0x30] sm:$0xff]
  %v2334 = vld [vmem:[%s1 + $0x38] sm:$0xff]
  %v2335 = vld [vmem:[%s1 + $0x40] sm:$0xff]
  %v2336 = vld [vmem:[%s1 + $0x48] sm:$0xff]
  %v2337 = vld [vmem:[%s1 + $0x50] sm:$0xff]
  %v2338 = vld [vmem:[%s1 + $0x58] sm:$0xff]
  %v2339 = vld [vmem:[%s1 + $0x60] sm:$0xff]
  %v2340 = vld [vmem:[%s1 + $0x68] sm:$0xff]
  %v2341 = vld [vmem:[%s1 + $0x70] sm:$0xff]
  %v2342 = vld [vmem:[%s1 + $0x78] sm:$0xff]
  %v2343 = vld [vmem:[%s1 + $0x80] sm:$0xff]
  %v2344 = vld [vmem:[%s1 + $0x88] sm:$0xff]
  %v2345 = vld [vmem:[%s1 + $0x90] sm:$0xff]
  %v2346 = vld [vmem:[%s1 + $0x98] sm:$0xff]
  %v2347 = vld [vmem:[%s1 + $0xa0] sm:$0xff]
  %v2348 = vld [vmem:[%s1 + $0xa8] sm:$0xff]
  %v2349 = vld [vmem:[%s1 + $0xb0] sm:$0xff]
  %v2350 = vld [vmem:[%s1 + $0xb8] sm:$0xff]
  %v2351 = vld [vmem:[%s1 + $0xc0] sm:$0xff]
  %v2352 = vld [vmem:[%s1 + $0xc8] sm:$0xff]
  %v2353 = vld [vmem:[%s1 + $0xd0] sm:$0xff]
  %v2354 = vld [vmem:[%s1 + $0xd8] sm:$0xff]
  %v2355 = vld [vmem:[%s1 + $0xe0] sm:$0xff]
  %v2356 = vld [vmem:[%s1 + $0xe8] sm:$0xff]
  %v2357 = vld [vmem:[%s1 + $0xf0] sm:$0xff]
  %v2358 = vld [vmem:[%s1 + $0xf8] sm:$0xff]
  %v2359 = vld [vmem:[%s1 + $0x100] sm:$0xff]
  %v2360 = vld [vmem:[%s1 + $0x108] sm:$0xff]
  %v2361 = vld [vmem:[%s1 + $0x110] sm:$0xff]
  %v2362 = vld [vmem:[%s1 + $0x118] sm:$0xff]
  %v2363 = vld [vmem:[%s1 + $0x120] sm:$0xff]
  %v2364 = vld [vmem:[%s1 + $0x128] sm:$0xff]
  %v2365 = vld [vmem:[%s1 + $0x130] sm:$0xff]
  %v2366 = vld [vmem:[%s1 + $0x138] sm:$0xff]
  %v2367 = vld [vmem:[%s1 + $0x140] sm:$0xff]
  %v2368 = vld [vmem:[%s1 + $0x148] sm:$0xff]
  %v2369 = vld [vmem:[%s1 + $0x150] sm:$0xff]
  %v2370 = vld [vmem:[%s1 + $0x158] sm:$0xff]
  %v2371 = vld [vmem:[%s1 + $0x160] sm:$0xff]
  %v2372 = vld [vmem:[%s1 + $0x168] sm:$0xff]
  %v2373 = vld [vmem:[%s1 + $0x170] sm:$0xff]
  %v2374 = vld [vmem:[%s1 + $0x178] sm:$0xff]
  %v2375 = vld [vmem:[%s1 + $0x180] sm:$0xff]
  %v2376 = vld [vmem:[%s1 + $0x188] sm:$0xff]
  %v2377 = vld [vmem:[%s1 + $0x190] sm:$0xff]
  %v2378 = vld [vmem:[%s1 + $0x198] sm:$0xff]
  %v2379 = vld [vmem:[%s1 + $0x1a0] sm:$0xff]
  %v2380 = vld [vmem:[%s1 + $0x1a8] sm:$0xff]
  %v2381 = vld [vmem:[%s1 + $0x1b0] sm:$0xff]
  %v2382 = vld [vmem:[%s1 + $0x1b8] sm:$0xff]
  %v2383 = vld [vmem:[%s1 + $0x1c0] sm:$0xff]
  %v2384 = vld [vmem:[%s1 + $0x1c8] sm:$0xff]
  %v2385 = vld [vmem:[%s1 + $0x1d0] sm:$0xff]
  %v2386 = vld [vmem:[%s1 + $0x1d8] sm:$0xff]
  %v2387 = vld [vmem:[%s1 + $0x1e0] sm:$0xff]
  %v2388 = vld [vmem:[%s1 + $0x1e8] sm:$0xff]
  %v2389 = vld [vmem:[%s1 + $0x1f0] sm:$0xff]
  %v2390 = vld [vmem:[%s1 + $0x1f8] sm:$0xff]
  %v2391 = vld [vmem:[%s1 + $0x200] sm:$0xff]
  %v2392 = vld [vmem:[%s1 + $0x208] sm:$0xff]
  %v2393 = vld [vmem:[%s1 + $0x210] sm:$0xff]
  %v2394 = vld [vmem:[%s1 + $0x218] sm:$0xff]
  %v2395 = vld [vmem:[%s1 + $0x220] sm:$0xff]
  %v2396 = vld [vmem:[%s1 + $0x228] sm:$0xff]
  %v2397 = vld [vmem:[%s1 + $0x230] sm:$0xff]
  %v2398 = vld [vmem:[%s1 + $0x238] sm:$0xff]
  %v2399 = vld [vmem:[%s1 + $0x240] sm:$0xff]
  %v2400 = vld [vmem:[%s1 + $0x248] sm:$0xff]
  %v2401 = vld [vmem:[%s1 + $0x250] sm:$0xff]
  %v2402 = vld [vmem:[%s1 + $0x258] sm:$0xff]
  %v2403 = vld [vmem:[%s1 + $0x260] sm:$0xff]
  %v2404 = vld [vmem:[%s1 + $0x268] sm:$0xff]
  %v2405 = vld [vmem:[%s1 + $0x270] sm:$0xff]
  %v2406 = vld [vmem:[%s1 + $0x278] sm:$0xff]
  %v2407 = vld [vmem:[%s1 + $0x280] sm:$0xff]
  %v2408 = vld [vmem:[%s1 + $0x288] sm:$0xff]
  %v2409 = vld [vmem:[%s1 + $0x290] sm:$0xff]
  %v2410 = vld [vmem:[%s1 + $0x298] sm:$0xff]
  %2412 = vset.pattern.permute.xlu0 0
  %2413 = vperm.xlu0 %2412, %v2159
  %v2414 = vpop.permute.xlu0 %2413
  %2417 = vset.pattern.permute.xlu0 0
  %2418 = vperm.xlu0 %2417, %v2160
  %v2419 = vpop.permute.xlu0 %2418
  %2422 = vset.pattern.permute.xlu0 0
  %2423 = vperm.xlu0 %2422, %v2161
  %v2424 = vpop.permute.xlu0 %2423
  %2427 = vset.pattern.permute.xlu0 0
  %2428 = vperm.xlu0 %2427, %v2162
  %v2429 = vpop.permute.xlu0 %2428
  %2432 = vset.pattern.permute.xlu0 0
  %2433 = vperm.xlu0 %2432, %v2163
  %v2434 = vpop.permute.xlu0 %2433
  %2437 = vset.pattern.permute.xlu0 0
  %2438 = vperm.xlu0 %2437, %v2164
  %v2439 = vpop.permute.xlu0 %2438
  %2442 = vset.pattern.permute.xlu0 0
  %2443 = vperm.xlu0 %2442, %v2165
  %v2444 = vpop.permute.xlu0 %2443
  %2447 = vset.pattern.permute.xlu0 0
  %2448 = vperm.xlu0 %2447, %v2166
  %v2449 = vpop.permute.xlu0 %2448
  %2452 = vset.pattern.permute.xlu0 0
  %2453 = vperm.xlu0 %2452, %v2167
  %v2454 = vpop.permute.xlu0 %2453
  %2457 = vset.pattern.permute.xlu0 0
  %2458 = vperm.xlu0 %2457, %v2168
  %v2459 = vpop.permute.xlu0 %2458
  %2462 = vset.pattern.permute.xlu0 0
  %2463 = vperm.xlu0 %2462, %v2169
  %v2464 = vpop.permute.xlu0 %2463
  %2467 = vset.pattern.permute.xlu0 0
  %2468 = vperm.xlu0 %2467, %v2170
  %v2469 = vpop.permute.xlu0 %2468
  %2472 = vset.pattern.permute.xlu0 0
  %2473 = vperm.xlu0 %2472, %v2171
  %v2474 = vpop.permute.xlu0 %2473
  %2477 = vset.pattern.permute.xlu0 0
  %2478 = vperm.xlu0 %2477, %v2172
  %v2479 = vpop.permute.xlu0 %2478
  %2482 = vset.pattern.permute.xlu0 0
  %2483 = vperm.xlu0 %2482, %v2173
  %v2484 = vpop.permute.xlu0 %2483
  %2487 = vset.pattern.permute.xlu0 0
  %2488 = vperm.xlu0 %2487, %v2174
  %v2489 = vpop.permute.xlu0 %2488
  %2492 = vset.pattern.permute.xlu0 0
  %2493 = vperm.xlu0 %2492, %v2175
  %v2494 = vpop.permute.xlu0 %2493
  %2497 = vset.pattern.permute.xlu0 0
  %2498 = vperm.xlu0 %2497, %v2176
  %v2499 = vpop.permute.xlu0 %2498
  %2502 = vset.pattern.permute.xlu0 0
  %2503 = vperm.xlu0 %2502, %v2177
  %v2504 = vpop.permute.xlu0 %2503
  %2507 = vset.pattern.permute.xlu0 0
  %2508 = vperm.xlu0 %2507, %v2178
  %v2509 = vpop.permute.xlu0 %2508
  %2512 = vset.pattern.permute.xlu0 0
  %2513 = vperm.xlu0 %2512, %v2179
  %v2514 = vpop.permute.xlu0 %2513
  %2517 = vset.pattern.permute.xlu0 0
  %2518 = vperm.xlu0 %2517, %v2180
  %v2519 = vpop.permute.xlu0 %2518
  %2522 = vset.pattern.permute.xlu0 0
  %2523 = vperm.xlu0 %2522, %v2181
  %v2524 = vpop.permute.xlu0 %2523
  %2527 = vset.pattern.permute.xlu0 0
  %2528 = vperm.xlu0 %2527, %v2182
  %v2529 = vpop.permute.xlu0 %2528
  %2532 = vset.pattern.permute.xlu0 0
  %2533 = vperm.xlu0 %2532, %v2183
  %v2534 = vpop.permute.xlu0 %2533
  %2537 = vset.pattern.permute.xlu0 0
  %2538 = vperm.xlu0 %2537, %v2184
  %v2539 = vpop.permute.xlu0 %2538
  %2542 = vset.pattern.permute.xlu0 0
  %2543 = vperm.xlu0 %2542, %v2185
  %v2544 = vpop.permute.xlu0 %2543
  %2547 = vset.pattern.permute.xlu0 0
  %2548 = vperm.xlu0 %2547, %v2186
  %v2549 = vpop.permute.xlu0 %2548
  %2552 = vset.pattern.permute.xlu0 0
  %2553 = vperm.xlu0 %2552, %v2187
  %v2554 = vpop.permute.xlu0 %2553
  %2557 = vset.pattern.permute.xlu0 0
  %2558 = vperm.xlu0 %2557, %v2188
  %v2559 = vpop.permute.xlu0 %2558
  %2562 = vset.pattern.permute.xlu0 0
  %2563 = vperm.xlu0 %2562, %v2189
  %v2564 = vpop.permute.xlu0 %2563
  %2567 = vset.pattern.permute.xlu0 0
  %2568 = vperm.xlu0 %2567, %v2190
  %v2569 = vpop.permute.xlu0 %2568
  %2572 = vset.pattern.permute.xlu0 0
  %2573 = vperm.xlu0 %2572, %v2191
  %v2574 = vpop.permute.xlu0 %2573
  %2577 = vset.pattern.permute.xlu0 0
  %2578 = vperm.xlu0 %2577, %v2192
  %v2579 = vpop.permute.xlu0 %2578
  %2582 = vset.pattern.permute.xlu0 0
  %2583 = vperm.xlu0 %2582, %v2193
  %v2584 = vpop.permute.xlu0 %2583
  %2587 = vset.pattern.permute.xlu0 0
  %2588 = vperm.xlu0 %2587, %v2194
  %v2589 = vpop.permute.xlu0 %2588
  %2592 = vset.pattern.permute.xlu0 0
  %2593 = vperm.xlu0 %2592, %v2195
  %v2594 = vpop.permute.xlu0 %2593
  %2597 = vset.pattern.permute.xlu0 0
  %2598 = vperm.xlu0 %2597, %v2196
  %v2599 = vpop.permute.xlu0 %2598
  %2602 = vset.pattern.permute.xlu0 0
  %2603 = vperm.xlu0 %2602, %v2197
  %v2604 = vpop.permute.xlu0 %2603
  %2607 = vset.pattern.permute.xlu0 0
  %2608 = vperm.xlu0 %2607, %v2198
  %v2609 = vpop.permute.xlu0 %2608
  %2612 = vset.pattern.permute.xlu0 0
  %2613 = vperm.xlu0 %2612, %v2199
  %v2614 = vpop.permute.xlu0 %2613
  %2617 = vset.pattern.permute.xlu0 0
  %2618 = vperm.xlu0 %2617, %v2200
  %v2619 = vpop.permute.xlu0 %2618
  %v2621 = vmul.f32 %v1236, %v2414
  %v2622 = vmul.f32 %v1238, %v2414
  %v2623 = vmul.f32 %v1240, %v2419
  %v2624 = vmul.f32 %v1242, %v2419
  %v2625 = vmul.f32 %v1246, %v2424
  %v2626 = vmul.f32 %v1248, %v2424
  %v2627 = vmul.f32 %v1250, %v2429
  %v2628 = vmul.f32 %v1252, %v2429
  %v2629 = vmul.f32 %v1256, %v2434
  %v2630 = vmul.f32 %v1258, %v2434
  %v2631 = vmul.f32 %v1260, %v2439
  %v2632 = vmul.f32 %v1262, %v2439
  %v2633 = vmul.f32 %v1266, %v2444
  %v2634 = vmul.f32 %v1268, %v2444
  %v2635 = vmul.f32 %v1270, %v2449
  %v2636 = vmul.f32 %v1272, %v2449
  %v2637 = vmul.f32 %v1276, %v2454
  %v2638 = vmul.f32 %v1278, %v2454
  %v2639 = vmul.f32 %v1280, %v2459
  %v2640 = vmul.f32 %v1282, %v2459
  %v2641 = vmul.f32 %v1286, %v2464
  %v2642 = vmul.f32 %v1288, %v2464
  %v2643 = vmul.f32 %v1290, %v2469
  %v2644 = vmul.f32 %v1292, %v2469
  %v2645 = vmul.f32 %v1296, %v2474
  %v2646 = vmul.f32 %v1298, %v2474
  %v2647 = vmul.f32 %v1300, %v2479
  %v2648 = vmul.f32 %v1302, %v2479
  %v2649 = vmul.f32 %v1306, %v2484
  %v2650 = vmul.f32 %v1308, %v2484
  %v2651 = vmul.f32 %v1310, %v2489
  %v2652 = vmul.f32 %v1312, %v2489
  %v2653 = vmul.f32 %v1316, %v2494
  %v2654 = vmul.f32 %v1318, %v2494
  %v2655 = vmul.f32 %v1320, %v2499
  %v2656 = vmul.f32 %v1322, %v2499
  %v2657 = vmul.f32 %v1326, %v2504
  %v2658 = vmul.f32 %v1328, %v2504
  %v2659 = vmul.f32 %v1330, %v2509
  %v2660 = vmul.f32 %v1332, %v2509
  %v2661 = vmul.f32 %v1336, %v2514
  %v2662 = vmul.f32 %v1338, %v2514
  %v2663 = vmul.f32 %v1340, %v2519
  %v2664 = vmul.f32 %v1342, %v2519
  %v2665 = vmul.f32 %v1346, %v2524
  %v2666 = vmul.f32 %v1348, %v2524
  %v2667 = vmul.f32 %v1350, %v2529
  %v2668 = vmul.f32 %v1352, %v2529
  %v2669 = vmul.f32 %v1356, %v2534
  %v2670 = vmul.f32 %v1358, %v2534
  %v2671 = vmul.f32 %v1360, %v2539
  %v2672 = vmul.f32 %v1362, %v2539
  %v2673 = vmul.f32 %v1366, %v2544
  %v2674 = vmul.f32 %v1368, %v2544
  %v2675 = vmul.f32 %v1370, %v2549
  %v2676 = vmul.f32 %v1372, %v2549
  %v2677 = vmul.f32 %v1376, %v2554
  %v2678 = vmul.f32 %v1378, %v2554
  %v2679 = vmul.f32 %v1380, %v2559
  %v2680 = vmul.f32 %v1382, %v2559
  %v2681 = vmul.f32 %v1386, %v2564
  %v2682 = vmul.f32 %v1388, %v2564
  %v2683 = vmul.f32 %v1390, %v2569
  %v2684 = vmul.f32 %v1392, %v2569
  %v2685 = vmul.f32 %v1396, %v2574
  %v2686 = vmul.f32 %v1398, %v2574
  %v2687 = vmul.f32 %v1400, %v2579
  %v2688 = vmul.f32 %v1402, %v2579
  %v2689 = vmul.f32 %v1406, %v2584
  %v2690 = vmul.f32 %v1408, %v2584
  %v2691 = vmul.f32 %v1410, %v2589
  %v2692 = vmul.f32 %v1412, %v2589
  %v2693 = vmul.f32 %v1416, %v2594
  %v2694 = vmul.f32 %v1418, %v2594
  %v2695 = vmul.f32 %v1420, %v2599
  %v2696 = vmul.f32 %v1422, %v2599
  %v2697 = vmul.f32 %v1426, %v2604
  %v2698 = vmul.f32 %v1428, %v2604
  %v2699 = vmul.f32 %v1430, %v2609
  %v2700 = vmul.f32 %v1432, %v2609
  %v2701 = vmul.f32 %v1436, %v2614
  %v2702 = vmul.f32 %v1438, %v2614
  %v2703 = vmul.f32 %v1440, %v2619
  %v2704 = vmul.f32 %v1442, %v2619
  %2706 = vset.pattern.permute.xlu0 0
  %2707 = vperm.xlu0 %2706, %v2285
  %v2708 = vpop.permute.xlu0 %2707
  %2711 = vset.pattern.permute.xlu0 0
  %2712 = vperm.xlu0 %2711, %v2286
  %v2713 = vpop.permute.xlu0 %2712
  %2716 = vset.pattern.permute.xlu0 0
  %2717 = vperm.xlu0 %2716, %v2287
  %v2718 = vpop.permute.xlu0 %2717
  %2721 = vset.pattern.permute.xlu0 0
  %2722 = vperm.xlu0 %2721, %v2288
  %v2723 = vpop.permute.xlu0 %2722
  %2726 = vset.pattern.permute.xlu0 0
  %2727 = vperm.xlu0 %2726, %v2289
  %v2728 = vpop.permute.xlu0 %2727
  %2731 = vset.pattern.permute.xlu0 0
  %2732 = vperm.xlu0 %2731, %v2290
  %v2733 = vpop.permute.xlu0 %2732
  %2736 = vset.pattern.permute.xlu0 0
  %2737 = vperm.xlu0 %2736, %v2291
  %v2738 = vpop.permute.xlu0 %2737
  %2741 = vset.pattern.permute.xlu0 0
  %2742 = vperm.xlu0 %2741, %v2292
  %v2743 = vpop.permute.xlu0 %2742
  %2746 = vset.pattern.permute.xlu0 0
  %2747 = vperm.xlu0 %2746, %v2293
  %v2748 = vpop.permute.xlu0 %2747
  %2751 = vset.pattern.permute.xlu0 0
  %2752 = vperm.xlu0 %2751, %v2294
  %v2753 = vpop.permute.xlu0 %2752
  %2756 = vset.pattern.permute.xlu0 0
  %2757 = vperm.xlu0 %2756, %v2295
  %v2758 = vpop.permute.xlu0 %2757
  %2761 = vset.pattern.permute.xlu0 0
  %2762 = vperm.xlu0 %2761, %v2296
  %v2763 = vpop.permute.xlu0 %2762
  %2766 = vset.pattern.permute.xlu0 0
  %2767 = vperm.xlu0 %2766, %v2297
  %v2768 = vpop.permute.xlu0 %2767
  %2771 = vset.pattern.permute.xlu0 0
  %2772 = vperm.xlu0 %2771, %v2298
  %v2773 = vpop.permute.xlu0 %2772
  %2776 = vset.pattern.permute.xlu0 0
  %2777 = vperm.xlu0 %2776, %v2299
  %v2778 = vpop.permute.xlu0 %2777
  %2781 = vset.pattern.permute.xlu0 0
  %2782 = vperm.xlu0 %2781, %v2300
  %v2783 = vpop.permute.xlu0 %2782
  %2786 = vset.pattern.permute.xlu0 0
  %2787 = vperm.xlu0 %2786, %v2301
  %v2788 = vpop.permute.xlu0 %2787
  %2791 = vset.pattern.permute.xlu0 0
  %2792 = vperm.xlu0 %2791, %v2302
  %v2793 = vpop.permute.xlu0 %2792
  %2796 = vset.pattern.permute.xlu0 0
  %2797 = vperm.xlu0 %2796, %v2303
  %v2798 = vpop.permute.xlu0 %2797
  %2801 = vset.pattern.permute.xlu0 0
  %2802 = vperm.xlu0 %2801, %v2304
  %v2803 = vpop.permute.xlu0 %2802
  %2806 = vset.pattern.permute.xlu0 0
  %2807 = vperm.xlu0 %2806, %v2305
  %v2808 = vpop.permute.xlu0 %2807
  %2811 = vset.pattern.permute.xlu0 0
  %2812 = vperm.xlu0 %2811, %v2306
  %v2813 = vpop.permute.xlu0 %2812
  %2816 = vset.pattern.permute.xlu0 0
  %2817 = vperm.xlu0 %2816, %v2307
  %v2818 = vpop.permute.xlu0 %2817
  %2821 = vset.pattern.permute.xlu0 0
  %2822 = vperm.xlu0 %2821, %v2308
  %v2823 = vpop.permute.xlu0 %2822
  %2826 = vset.pattern.permute.xlu0 0
  %2827 = vperm.xlu0 %2826, %v2309
  %v2828 = vpop.permute.xlu0 %2827
  %2831 = vset.pattern.permute.xlu0 0
  %2832 = vperm.xlu0 %2831, %v2310
  %v2833 = vpop.permute.xlu0 %2832
  %2836 = vset.pattern.permute.xlu0 0
  %2837 = vperm.xlu0 %2836, %v2311
  %v2838 = vpop.permute.xlu0 %2837
  %2841 = vset.pattern.permute.xlu0 0
  %2842 = vperm.xlu0 %2841, %v2312
  %v2843 = vpop.permute.xlu0 %2842
  %2846 = vset.pattern.permute.xlu0 0
  %2847 = vperm.xlu0 %2846, %v2313
  %v2848 = vpop.permute.xlu0 %2847
  %2851 = vset.pattern.permute.xlu0 0
  %2852 = vperm.xlu0 %2851, %v2314
  %v2853 = vpop.permute.xlu0 %2852
  %2856 = vset.pattern.permute.xlu0 0
  %2857 = vperm.xlu0 %2856, %v2315
  %v2858 = vpop.permute.xlu0 %2857
  %2861 = vset.pattern.permute.xlu0 0
  %2862 = vperm.xlu0 %2861, %v2316
  %v2863 = vpop.permute.xlu0 %2862
  %2866 = vset.pattern.permute.xlu0 0
  %2867 = vperm.xlu0 %2866, %v2317
  %v2868 = vpop.permute.xlu0 %2867
  %2871 = vset.pattern.permute.xlu0 0
  %2872 = vperm.xlu0 %2871, %v2318
  %v2873 = vpop.permute.xlu0 %2872
  %2876 = vset.pattern.permute.xlu0 0
  %2877 = vperm.xlu0 %2876, %v2319
  %v2878 = vpop.permute.xlu0 %2877
  %2881 = vset.pattern.permute.xlu0 0
  %2882 = vperm.xlu0 %2881, %v2320
  %v2883 = vpop.permute.xlu0 %2882
  %2886 = vset.pattern.permute.xlu0 0
  %2887 = vperm.xlu0 %2886, %v2321
  %v2888 = vpop.permute.xlu0 %2887
  %2891 = vset.pattern.permute.xlu0 0
  %2892 = vperm.xlu0 %2891, %v2322
  %v2893 = vpop.permute.xlu0 %2892
  %2896 = vset.pattern.permute.xlu0 0
  %2897 = vperm.xlu0 %2896, %v2323
  %v2898 = vpop.permute.xlu0 %2897
  %2901 = vset.pattern.permute.xlu0 0
  %2902 = vperm.xlu0 %2901, %v2324
  %v2903 = vpop.permute.xlu0 %2902
  %2906 = vset.pattern.permute.xlu0 0
  %2907 = vperm.xlu0 %2906, %v2325
  %v2908 = vpop.permute.xlu0 %2907
  %2911 = vset.pattern.permute.xlu0 0
  %2912 = vperm.xlu0 %2911, %v2326
  %v2913 = vpop.permute.xlu0 %2912
  %v2915 = vadd.f32 %v2621, %v2708
  %v2916 = vadd.f32 %v2622, %v2708
  %v2917 = vadd.f32 %v2623, %v2713
  %v2918 = vadd.f32 %v2624, %v2713
  %v2919 = vadd.f32 %v2625, %v2718
  %v2920 = vadd.f32 %v2626, %v2718
  %v2921 = vadd.f32 %v2627, %v2723
  %v2922 = vadd.f32 %v2628, %v2723
  %v2923 = vadd.f32 %v2629, %v2728
  %v2924 = vadd.f32 %v2630, %v2728
  %v2925 = vadd.f32 %v2631, %v2733
  %v2926 = vadd.f32 %v2632, %v2733
  %v2927 = vadd.f32 %v2633, %v2738
  %v2928 = vadd.f32 %v2634, %v2738
  %v2929 = vadd.f32 %v2635, %v2743
  %v2930 = vadd.f32 %v2636, %v2743
  %v2931 = vadd.f32 %v2637, %v2748
  %v2932 = vadd.f32 %v2638, %v2748
  %v2933 = vadd.f32 %v2639, %v2753
  %v2934 = vadd.f32 %v2640, %v2753
  %v2935 = vadd.f32 %v2641, %v2758
  %v2936 = vadd.f32 %v2642, %v2758
  %v2937 = vadd.f32 %v2643, %v2763
  %v2938 = vadd.f32 %v2644, %v2763
  %v2939 = vadd.f32 %v2645, %v2768
  %v2940 = vadd.f32 %v2646, %v2768
  %v2941 = vadd.f32 %v2647, %v2773
  %v2942 = vadd.f32 %v2648, %v2773
  %v2943 = vadd.f32 %v2649, %v2778
  %v2944 = vadd.f32 %v2650, %v2778
  %v2945 = vadd.f32 %v2651, %v2783
  %v2946 = vadd.f32 %v2652, %v2783
  %v2947 = vadd.f32 %v2653, %v2788
  %v2948 = vadd.f32 %v2654, %v2788
  %v2949 = vadd.f32 %v2655, %v2793
  %v2950 = vadd.f32 %v2656, %v2793
  %v2951 = vadd.f32 %v2657, %v2798
  %v2952 = vadd.f32 %v2658, %v2798
  %v2953 = vadd.f32 %v2659, %v2803
  %v2954 = vadd.f32 %v2660, %v2803
  %v2955 = vadd.f32 %v2661, %v2808
  %v2956 = vadd.f32 %v2662, %v2808
  %v2957 = vadd.f32 %v2663, %v2813
  %v2958 = vadd.f32 %v2664, %v2813
  %v2959 = vadd.f32 %v2665, %v2818
  %v2960 = vadd.f32 %v2666, %v2818
  %v2961 = vadd.f32 %v2667, %v2823
  %v2962 = vadd.f32 %v2668, %v2823
  %v2963 = vadd.f32 %v2669, %v2828
  %v2964 = vadd.f32 %v2670, %v2828
  %v2965 = vadd.f32 %v2671, %v2833
  %v2966 = vadd.f32 %v2672, %v2833
  %v2967 = vadd.f32 %v2673, %v2838
  %v2968 = vadd.f32 %v2674, %v2838
  %v2969 = vadd.f32 %v2675, %v2843
  %v2970 = vadd.f32 %v2676, %v2843
  %v2971 = vadd.f32 %v2677, %v2848
  %v2972 = vadd.f32 %v2678, %v2848
  %v2973 = vadd.f32 %v2679, %v2853
  %v2974 = vadd.f32 %v2680, %v2853
  %v2975 = vadd.f32 %v2681, %v2858
  %v2976 = vadd.f32 %v2682, %v2858
  %v2977 = vadd.f32 %v2683, %v2863
  %v2978 = vadd.f32 %v2684, %v2863
  %v2979 = vadd.f32 %v2685, %v2868
  %v2980 = vadd.f32 %v2686, %v2868
  %v2981 = vadd.f32 %v2687, %v2873
  %v2982 = vadd.f32 %v2688, %v2873
  %v2983 = vadd.f32 %v2689, %v2878
  %v2984 = vadd.f32 %v2690, %v2878
  %v2985 = vadd.f32 %v2691, %v2883
  %v2986 = vadd.f32 %v2692, %v2883
  %v2987 = vadd.f32 %v2693, %v2888
  %v2988 = vadd.f32 %v2694, %v2888
  %v2989 = vadd.f32 %v2695, %v2893
  %v2990 = vadd.f32 %v2696, %v2893
  %v2991 = vadd.f32 %v2697, %v2898
  %v2992 = vadd.f32 %v2698, %v2898
  %v2993 = vadd.f32 %v2699, %v2903
  %v2994 = vadd.f32 %v2700, %v2903
  %v2995 = vadd.f32 %v2701, %v2908
  %v2996 = vadd.f32 %v2702, %v2908
  %v2997 = vadd.f32 %v2703, %v2913
  %v2998 = vadd.f32 %v2704, %v2913
  %v2999 = vadd.f32 %v2327, %v2915
  %v3000 = vadd.f32 %v2328, %v2916
  %v3001 = vadd.f32 %v2329, %v2917
  %v3002 = vadd.f32 %v2330, %v2918
  %v3003 = vadd.f32 %v2331, %v2919
  %v3004 = vadd.f32 %v2332, %v2920
  %v3005 = vadd.f32 %v2333, %v2921
  %v3006 = vadd.f32 %v2334, %v2922
  %v3007 = vadd.f32 %v2335, %v2923
  %v3008 = vadd.f32 %v2336, %v2924
  %v3009 = vadd.f32 %v2337, %v2925
  %v3010 = vadd.f32 %v2338, %v2926
  %v3011 = vadd.f32 %v2339, %v2927
  %v3012 = vadd.f32 %v2340, %v2928
  %v3013 = vadd.f32 %v2341, %v2929
  %v3014 = vadd.f32 %v2342, %v2930
  %v3015 = vadd.f32 %v2343, %v2931
  %v3016 = vadd.f32 %v2344, %v2932
  %v3017 = vadd.f32 %v2345, %v2933
  %v3018 = vadd.f32 %v2346, %v2934
  %v3019 = vadd.f32 %v2347, %v2935
  %v3020 = vadd.f32 %v2348, %v2936
  %v3021 = vadd.f32 %v2349, %v2937
  %v3022 = vadd.f32 %v2350, %v2938
  %v3023 = vadd.f32 %v2351, %v2939
  %v3024 = vadd.f32 %v2352, %v2940
  %v3025 = vadd.f32 %v2353, %v2941
  %v3026 = vadd.f32 %v2354, %v2942
  %v3027 = vadd.f32 %v2355, %v2943
  %v3028 = vadd.f32 %v2356, %v2944
  %v3029 = vadd.f32 %v2357, %v2945
  %v3030 = vadd.f32 %v2358, %v2946
  %v3031 = vadd.f32 %v2359, %v2947
  %v3032 = vadd.f32 %v2360, %v2948
  %v3033 = vadd.f32 %v2361, %v2949
  %v3034 = vadd.f32 %v2362, %v2950
  %v3035 = vadd.f32 %v2363, %v2951
  %v3036 = vadd.f32 %v2364, %v2952
  %v3037 = vadd.f32 %v2365, %v2953
  %v3038 = vadd.f32 %v2366, %v2954
  %v3039 = vadd.f32 %v2367, %v2955
  %v3040 = vadd.f32 %v2368, %v2956
  %v3041 = vadd.f32 %v2369, %v2957
  %v3042 = vadd.f32 %v2370, %v2958
  %v3043 = vadd.f32 %v2371, %v2959
  %v3044 = vadd.f32 %v2372, %v2960
  %v3045 = vadd.f32 %v2373, %v2961
  %v3046 = vadd.f32 %v2374, %v2962
  %v3047 = vadd.f32 %v2375, %v2963
  %v3048 = vadd.f32 %v2376, %v2964
  %v3049 = vadd.f32 %v2377, %v2965
  %v3050 = vadd.f32 %v2378, %v2966
  %v3051 = vadd.f32 %v2379, %v2967
  %v3052 = vadd.f32 %v2380, %v2968
  %v3053 = vadd.f32 %v2381, %v2969
  %v3054 = vadd.f32 %v2382, %v2970
  %v3055 = vadd.f32 %v2383, %v2971
  %v3056 = vadd.f32 %v2384, %v2972
  %v3057 = vadd.f32 %v2385, %v2973
  %v3058 = vadd.f32 %v2386, %v2974
  %v3059 = vadd.f32 %v2387, %v2975
  %v3060 = vadd.f32 %v2388, %v2976
  %v3061 = vadd.f32 %v2389, %v2977
  %v3062 = vadd.f32 %v2390, %v2978
  %v3063 = vadd.f32 %v2391, %v2979
  %v3064 = vadd.f32 %v2392, %v2980
  %v3065 = vadd.f32 %v2393, %v2981
  %v3066 = vadd.f32 %v2394, %v2982
  %v3067 = vadd.f32 %v2395, %v2983
  %v3068 = vadd.f32 %v2396, %v2984
  %v3069 = vadd.f32 %v2397, %v2985
  %v3070 = vadd.f32 %v2398, %v2986
  %v3071 = vadd.f32 %v2399, %v2987
  %v3072 = vadd.f32 %v2400, %v2988
  %v3073 = vadd.f32 %v2401, %v2989
  %v3074 = vadd.f32 %v2402, %v2990
  %v3075 = vadd.f32 %v2403, %v2991
  %v3076 = vadd.f32 %v2404, %v2992
  %v3077 = vadd.f32 %v2405, %v2993
  %v3078 = vadd.f32 %v2406, %v2994
  %v3079 = vadd.f32 %v2407, %v2995
  %v3080 = vadd.f32 %v2408, %v2996
  %v3081 = vadd.f32 %v2409, %v2997
  %v3082 = vadd.f32 %v2410, %v2998
  %v3083 = vmax.f32 %v2999, 0.0
  %v3084 = vmax.f32 %v3000, 0.0
  %v3085 = vmax.f32 %v3001, 0.0
  %v3086 = vmax.f32 %v3002, 0.0
  %v3087 = vmax.f32 %v3003, 0.0
  %v3088 = vmax.f32 %v3004, 0.0
  %v3089 = vmax.f32 %v3005, 0.0
  %v3090 = vmax.f32 %v3006, 0.0
  %v3091 = vmax.f32 %v3007, 0.0
  %v3092 = vmax.f32 %v3008, 0.0
  %v3093 = vmax.f32 %v3009, 0.0
  %v3094 = vmax.f32 %v3010, 0.0
  %v3095 = vmax.f32 %v3011, 0.0
  %v3096 = vmax.f32 %v3012, 0.0
  %v3097 = vmax.f32 %v3013, 0.0
  %v3098 = vmax.f32 %v3014, 0.0
  %v3099 = vmax.f32 %v3015, 0.0
  %v3100 = vmax.f32 %v3016, 0.0
  %v3101 = vmax.f32 %v3017, 0.0
  %v3102 = vmax.f32 %v3018, 0.0
  %v3103 = vmax.f32 %v3019, 0.0
  %v3104 = vmax.f32 %v3020, 0.0
  %v3105 = vmax.f32 %v3021, 0.0
  %v3106 = vmax.f32 %v3022, 0.0
  %v3107 = vmax.f32 %v3023, 0.0
  %v3108 = vmax.f32 %v3024, 0.0
  %v3109 = vmax.f32 %v3025, 0.0
  %v3110 = vmax.f32 %v3026, 0.0
  %v3111 = vmax.f32 %v3027, 0.0
  %v3112 = vmax.f32 %v3028, 0.0
  %v3113 = vmax.f32 %v3029, 0.0
  %v3114 = vmax.f32 %v3030, 0.0
  %v3115 = vmax.f32 %v3031, 0.0
  %v3116 = vmax.f32 %v3032, 0.0
  %v3117 = vmax.f32 %v3033, 0.0
  %v3118 = vmax.f32 %v3034, 0.0
  %v3119 = vmax.f32 %v3035, 0.0
  %v3120 = vmax.f32 %v3036, 0.0
  %v3121 = vmax.f32 %v3037, 0.0
  %v3122 = vmax.f32 %v3038, 0.0
  %v3123 = vmax.f32 %v3039, 0.0
  %v3124 = vmax.f32 %v3040, 0.0
  %v3125 = vmax.f32 %v3041, 0.0
  %v3126 = vmax.f32 %v3042, 0.0
  %v3127 = vmax.f32 %v3043, 0.0
  %v3128 = vmax.f32 %v3044, 0.0
  %v3129 = vmax.f32 %v3045, 0.0
  %v3130 = vmax.f32 %v3046, 0.0
  %v3131 = vmax.f32 %v3047, 0.0
  %v3132 = vmax.f32 %v3048, 0.0
  %v3133 = vmax.f32 %v3049, 0.0
  %v3134 = vmax.f32 %v3050, 0.0
  %v3135 = vmax.f32 %v3051, 0.0
  %v3136 = vmax.f32 %v3052, 0.0
  %v3137 = vmax.f32 %v3053, 0.0
  %v3138 = vmax.f32 %v3054, 0.0
  %v3139 = vmax.f32 %v3055, 0.0
  %v3140 = vmax.f32 %v3056, 0.0
  %v3141 = vmax.f32 %v3057, 0.0
  %v3142 = vmax.f32 %v3058, 0.0
  %v3143 = vmax.f32 %v3059, 0.0
  %v3144 = vmax.f32 %v3060, 0.0
  %v3145 = vmax.f32 %v3061, 0.0
  %v3146 = vmax.f32 %v3062, 0.0
  %v3147 = vmax.f32 %v3063, 0.0
  %v3148 = vmax.f32 %v3064, 0.0
  %v3149 = vmax.f32 %v3065, 0.0
  %v3150 = vmax.f32 %v3066, 0.0
  %v3151 = vmax.f32 %v3067, 0.0
  %v3152 = vmax.f32 %v3068, 0.0
  %v3153 = vmax.f32 %v3069, 0.0
  %v3154 = vmax.f32 %v3070, 0.0
  %v3155 = vmax.f32 %v3071, 0.0
  %v3156 = vmax.f32 %v3072, 0.0
  %v3157 = vmax.f32 %v3073, 0.0
  %v3158 = vmax.f32 %v3074, 0.0
  %v3159 = vmax.f32 %v3075, 0.0
  %v3160 = vmax.f32 %v3076, 0.0
  %v3161 = vmax.f32 %v3077, 0.0
  %v3162 = vmax.f32 %v3078, 0.0
  %v3163 = vmax.f32 %v3079, 0.0
  %v3164 = vmax.f32 %v3080, 0.0
  %v3165 = vmax.f32 %v3081, 0.0
  %v3166 = vmax.f32 %v3082, 0.0
  %v3167 = vld [vmem:[%s6] sm:$0xff]
  %v3168 = vld [vmem:[%s6 + $0x8] sm:$0xf]
  %v3169 = vld [vmem:[%s6 + $0xc] sm:$0xff]
  %v3170 = vld [vmem:[%s6 + $0x14] sm:$0xf]
  %v3171 = vld [vmem:[%s6 + $0x18] sm:$0xff]
  %v3172 = vld [vmem:[%s6 + $0x20] sm:$0xf]
  %v3173 = vld [vmem:[%s6 + $0x24] sm:$0xff]
  %v3174 = vld [vmem:[%s6 + $0x2c] sm:$0xf]
  %v3175 = vld [vmem:[%s6 + $0x30] sm:$0xff]
  %v3176 = vld [vmem:[%s6 + $0x38] sm:$0xf]
  %v3177 = vld [vmem:[%s6 + $0x3c] sm:$0xff]
  %v3178 = vld [vmem:[%s6 + $0x44] sm:$0xf]
  %v3179 = vld [vmem:[%s6 + $0x48] sm:$0xff]
  %v3180 = vld [vmem:[%s6 + $0x50] sm:$0xf]
  %v3181 = vld [vmem:[%s6 + $0x54] sm:$0xff]
  %v3182 = vld [vmem:[%s6 + $0x5c] sm:$0xf]
  %v3183 = vld [vmem:[%s6 + $0x60] sm:$0xff]
  %v3184 = vld [vmem:[%s6 + $0x68] sm:$0xf]
  %v3185 = vld [vmem:[%s6 + $0x6c] sm:$0xff]
  %v3186 = vld [vmem:[%s6 + $0x74] sm:$0xf]
  %v3187 = vld [vmem:[%s6 + $0x78] sm:$0xff]
  %v3188 = vld [vmem:[%s6 + $0x80] sm:$0xf]
  %v3189 = vld [vmem:[%s6 + $0x84] sm:$0xff]
  %v3190 = vld [vmem:[%s6 + $0x8c] sm:$0xf]
  %v3191 = vld [vmem:[%s6 + $0x90] sm:$0xff]
  %v3192 = vld [vmem:[%s6 + $0x98] sm:$0xf]
  %v3193 = vld [vmem:[%s6 + $0x9c] sm:$0xff]
  %v3194 = vld [vmem:[%s6 + $0xa4] sm:$0xf]
  %v3195 = vld [vmem:[%s6 + $0xa8] sm:$0xff]
  %v3196 = vld [vmem:[%s6 + $0xb0] sm:$0xf]
  %v3197 = vld [vmem:[%s6 + $0xb4] sm:$0xff]
  %v3198 = vld [vmem:[%s6 + $0xbc] sm:$0xf]
  %v3199 = vld [vmem:[%s6 + $0xc0] sm:$0xff]
  %v3200 = vld [vmem:[%s6 + $0xc8] sm:$0xf]
  %v3201 = vld [vmem:[%s6 + $0xcc] sm:$0xff]
  %v3202 = vld [vmem:[%s6 + $0xd4] sm:$0xf]
  %v3203 = vld [vmem:[%s6 + $0xd8] sm:$0xff]
  %v3204 = vld [vmem:[%s6 + $0xe0] sm:$0xf]
  %v3205 = vld [vmem:[%s6 + $0xe4] sm:$0xff]
  %v3206 = vld [vmem:[%s6 + $0xec] sm:$0xf]
  %v3207 = vld [vmem:[%s6 + $0xf0] sm:$0xff]
  %v3208 = vld [vmem:[%s6 + $0xf8] sm:$0xf]
  %v3209 = vld [vmem:[%s6 + $0xfc] sm:$0xff]
  %v3210 = vld [vmem:[%s6 + $0x104] sm:$0xf]
  %v3211 = vld [vmem:[%s6 + $0x108] sm:$0xff]
  %v3212 = vld [vmem:[%s6 + $0x110] sm:$0xf]
  %v3213 = vld [vmem:[%s6 + $0x114] sm:$0xff]
  %v3214 = vld [vmem:[%s6 + $0x11c] sm:$0xf]
  %v3215 = vld [vmem:[%s6 + $0x120] sm:$0xff]
  %v3216 = vld [vmem:[%s6 + $0x128] sm:$0xf]
  %v3217 = vld [vmem:[%s6 + $0x12c] sm:$0xff]
  %v3218 = vld [vmem:[%s6 + $0x134] sm:$0xf]
  %v3219 = vld [vmem:[%s6 + $0x138] sm:$0xff]
  %v3220 = vld [vmem:[%s6 + $0x140] sm:$0xf]
  %v3221 = vld [vmem:[%s6 + $0x144] sm:$0xff]
  %v3222 = vld [vmem:[%s6 + $0x14c] sm:$0xf]
  %v3223 = vld [vmem:[%s6 + $0x150] sm:$0xff]
  %v3224 = vld [vmem:[%s6 + $0x158] sm:$0xf]
  %v3225 = vld [vmem:[%s6 + $0x15c] sm:$0xff]
  %v3226 = vld [vmem:[%s6 + $0x164] sm:$0xf]
  %v3227 = vld [vmem:[%s6 + $0x168] sm:$0xff]
  %v3228 = vld [vmem:[%s6 + $0x170] sm:$0xf]
  %v3229 = vld [vmem:[%s6 + $0x174] sm:$0xff]
  %v3230 = vld [vmem:[%s6 + $0x17c] sm:$0xf]
  %v3231 = vld [vmem:[%s6 + $0x180] sm:$0xff]
  %v3232 = vld [vmem:[%s6 + $0x188] sm:$0xf]
  %v3233 = vld [vmem:[%s6 + $0x18c] sm:$0xff]
  %v3234 = vld [vmem:[%s6 + $0x194] sm:$0xf]
  %v3235 = vld [vmem:[%s6 + $0x198] sm:$0xff]
  %v3236 = vld [vmem:[%s6 + $0x1a0] sm:$0xf]
  %v3237 = vld [vmem:[%s6 + $0x1a4] sm:$0xff]
  %v3238 = vld [vmem:[%s6 + $0x1ac] sm:$0xf]
  %v3239 = vld [vmem:[%s6 + $0x1b0] sm:$0xff]
  %v3240 = vld [vmem:[%s6 + $0x1b8] sm:$0xf]
  %v3241 = vld [vmem:[%s6 + $0x1bc] sm:$0xff]
  %v3242 = vld [vmem:[%s6 + $0x1c4] sm:$0xf]
  %v3243 = vld [vmem:[%s6 + $0x1c8] sm:$0xff]
  %v3244 = vld [vmem:[%s6 + $0x1d0] sm:$0xf]
  %v3245 = vld [vmem:[%s6 + $0x1d4] sm:$0xff]
  %v3246 = vld [vmem:[%s6 + $0x1dc] sm:$0xf]
  %v3247 = vld [vmem:[%s6 + $0x1e0] sm:$0xff]
  %v3248 = vld [vmem:[%s6 + $0x1e8] sm:$0xf]
  %v3249 = vld [vmem:[%s6 + $0x1ec] sm:$0xff]
  %v3250 = vld [vmem:[%s6 + $0x1f4] sm:$0xf]
  %v3251 = vpack.c.bf16 %v3085, %v3083
  %v3252 = vpack.c.bf16 %v3086, %v3084
  %v3253 = vpack.c.bf16 %v3089, %v3087
  %v3254 = vpack.c.bf16 %v3090, %v3088
  %v3255 = vpack.c.bf16 %v3093, %v3091
  %v3256 = vpack.c.bf16 %v3094, %v3092
  %v3257 = vpack.c.bf16 %v3097, %v3095
  %v3258 = vpack.c.bf16 %v3098, %v3096
  %v3259 = vpack.c.bf16 %v3101, %v3099
  %v3260 = vpack.c.bf16 %v3102, %v3100
  %v3261 = vpack.c.bf16 %v3105, %v3103
  %v3262 = vpack.c.bf16 %v3106, %v3104
  %v3263 = vpack.c.bf16 %v3109, %v3107
  %v3264 = vpack.c.bf16 %v3110, %v3108
  %v3265 = vpack.c.bf16 %v3113, %v3111
  %v3266 = vpack.c.bf16 %v3114, %v3112
  %v3267 = vpack.c.bf16 %v3117, %v3115
  %v3268 = vpack.c.bf16 %v3118, %v3116
  %v3269 = vpack.c.bf16 %v3121, %v3119
  %v3270 = vpack.c.bf16 %v3122, %v3120
  %v3271 = vpack.c.bf16 %v3125, %v3123
  %v3272 = vpack.c.bf16 %v3126, %v3124
  %v3273 = vpack.c.bf16 %v3129, %v3127
  %v3274 = vpack.c.bf16 %v3130, %v3128
  %v3275 = vpack.c.bf16 %v3133, %v3131
  %v3276 = vpack.c.bf16 %v3134, %v3132
  %v3277 = vpack.c.bf16 %v3137, %v3135
  %v3278 = vpack.c.bf16 %v3138, %v3136
  %v3279 = vpack.c.bf16 %v3141, %v3139
  %v3280 = vpack.c.bf16 %v3142, %v3140
  %v3281 = vpack.c.bf16 %v3145, %v3143
  %v3282 = vpack.c.bf16 %v3146, %v3144
  %v3283 = vpack.c.bf16 %v3149, %v3147
  %v3284 = vpack.c.bf16 %v3150, %v3148
  %v3285 = vpack.c.bf16 %v3153, %v3151
  %v3286 = vpack.c.bf16 %v3154, %v3152
  %v3287 = vpack.c.bf16 %v3157, %v3155
  %v3288 = vpack.c.bf16 %v3158, %v3156
  %v3289 = vpack.c.bf16 %v3161, %v3159
  %v3290 = vpack.c.bf16 %v3162, %v3160
  %v3291 = vpack.c.bf16 %v3165, %v3163
  %v3292 = vpack.c.bf16 %v3166, %v3164
  %v3377 = vunpack.c.l.b16 %v3167
  %v3378 = vunpack.c.h.b16 %v3167
  %v3379 = vunpack.c.l.b16 %v3168
  %v3380 = vunpack.c.l.b16 %v3169
  %v3381 = vunpack.c.h.b16 %v3169
  %v3382 = vunpack.c.l.b16 %v3170
  %v3383 = vunpack.c.l.b16 %v3171
  %v3384 = vunpack.c.h.b16 %v3171
  %v3385 = vunpack.c.l.b16 %v3172
  %v3386 = vunpack.c.l.b16 %v3173
  %v3387 = vunpack.c.h.b16 %v3173
  %v3388 = vunpack.c.l.b16 %v3174
  %v3389 = vunpack.c.l.b16 %v3175
  %v3390 = vunpack.c.h.b16 %v3175
  %v3391 = vunpack.c.l.b16 %v3176
  %v3392 = vunpack.c.l.b16 %v3177
  %v3393 = vunpack.c.h.b16 %v3177
  %v3394 = vunpack.c.l.b16 %v3178
  %v3395 = vunpack.c.l.b16 %v3179
  %v3396 = vunpack.c.h.b16 %v3179
  %v3397 = vunpack.c.l.b16 %v3180
  %v3398 = vunpack.c.l.b16 %v3181
  %v3399 = vunpack.c.h.b16 %v3181
  %v3400 = vunpack.c.l.b16 %v3182
  %v3401 = vunpack.c.l.b16 %v3183
  %v3402 = vunpack.c.h.b16 %v3183
  %v3403 = vunpack.c.l.b16 %v3184
  %v3404 = vunpack.c.l.b16 %v3185
  %v3405 = vunpack.c.h.b16 %v3185
  %v3406 = vunpack.c.l.b16 %v3186
  %v3407 = vunpack.c.l.b16 %v3187
  %v3408 = vunpack.c.h.b16 %v3187
  %v3409 = vunpack.c.l.b16 %v3188
  %v3410 = vunpack.c.l.b16 %v3189
  %v3411 = vunpack.c.h.b16 %v3189
  %v3412 = vunpack.c.l.b16 %v3190
  %v3413 = vunpack.c.l.b16 %v3191
  %v3414 = vunpack.c.h.b16 %v3191
  %v3415 = vunpack.c.l.b16 %v3192
  %v3416 = vunpack.c.l.b16 %v3193
  %v3417 = vunpack.c.h.b16 %v3193
  %v3418 = vunpack.c.l.b16 %v3194
  %v3419 = vunpack.c.l.b16 %v3195
  %v3420 = vunpack.c.h.b16 %v3195
  %v3421 = vunpack.c.l.b16 %v3196
  %v3422 = vunpack.c.l.b16 %v3197
  %v3423 = vunpack.c.h.b16 %v3197
  %v3424 = vunpack.c.l.b16 %v3198
  %v3425 = vunpack.c.l.b16 %v3199
  %v3426 = vunpack.c.h.b16 %v3199
  %v3427 = vunpack.c.l.b16 %v3200
  %v3428 = vunpack.c.l.b16 %v3201
  %v3429 = vunpack.c.h.b16 %v3201
  %v3430 = vunpack.c.l.b16 %v3202
  %v3431 = vunpack.c.l.b16 %v3203
  %v3432 = vunpack.c.h.b16 %v3203
  %v3433 = vunpack.c.l.b16 %v3204
  %v3434 = vunpack.c.l.b16 %v3205
  %v3435 = vunpack.c.h.b16 %v3205
  %v3436 = vunpack.c.l.b16 %v3206
  %v3437 = vunpack.c.l.b16 %v3207
  %v3438 = vunpack.c.h.b16 %v3207
  %v3439 = vunpack.c.l.b16 %v3208
  %v3440 = vunpack.c.l.b16 %v3209
  %v3441 = vunpack.c.h.b16 %v3209
  %v3442 = vunpack.c.l.b16 %v3210
  %v3443 = vunpack.c.l.b16 %v3211
  %v3444 = vunpack.c.h.b16 %v3211
  %v3445 = vunpack.c.l.b16 %v3212
  %v3446 = vunpack.c.l.b16 %v3213
  %v3447 = vunpack.c.h.b16 %v3213
  %v3448 = vunpack.c.l.b16 %v3214
  %v3449 = vunpack.c.l.b16 %v3215
  %v3450 = vunpack.c.h.b16 %v3215
  %v3451 = vunpack.c.l.b16 %v3216
  %v3452 = vunpack.c.l.b16 %v3217
  %v3453 = vunpack.c.h.b16 %v3217
  %v3454 = vunpack.c.l.b16 %v3218
  %v3455 = vunpack.c.l.b16 %v3219
  %v3456 = vunpack.c.h.b16 %v3219
  %v3457 = vunpack.c.l.b16 %v3220
  %v3458 = vunpack.c.l.b16 %v3221
  %v3459 = vunpack.c.h.b16 %v3221
  %v3460 = vunpack.c.l.b16 %v3222
  %v3461 = vunpack.c.l.b16 %v3223
  %v3462 = vunpack.c.h.b16 %v3223
  %v3463 = vunpack.c.l.b16 %v3224
  %v3464 = vunpack.c.l.b16 %v3225
  %v3465 = vunpack.c.h.b16 %v3225
  %v3466 = vunpack.c.l.b16 %v3226
  %v3467 = vunpack.c.l.b16 %v3227
  %v3468 = vunpack.c.h.b16 %v3227
  %v3469 = vunpack.c.l.b16 %v3228
  %v3470 = vunpack.c.l.b16 %v3229
  %v3471 = vunpack.c.h.b16 %v3229
  %v3472 = vunpack.c.l.b16 %v3230
  %v3473 = vunpack.c.l.b16 %v3231
  %v3474 = vunpack.c.h.b16 %v3231
  %v3475 = vunpack.c.l.b16 %v3232
  %v3476 = vunpack.c.l.b16 %v3233
  %v3477 = vunpack.c.h.b16 %v3233
  %v3478 = vunpack.c.l.b16 %v3234
  %v3479 = vunpack.c.l.b16 %v3235
  %v3480 = vunpack.c.h.b16 %v3235
  %v3481 = vunpack.c.l.b16 %v3236
  %v3482 = vunpack.c.l.b16 %v3237
  %v3483 = vunpack.c.h.b16 %v3237
  %v3484 = vunpack.c.l.b16 %v3238
  %v3485 = vunpack.c.l.b16 %v3239
  %v3486 = vunpack.c.h.b16 %v3239
  %v3487 = vunpack.c.l.b16 %v3240
  %v3488 = vunpack.c.l.b16 %v3241
  %v3489 = vunpack.c.h.b16 %v3241
  %v3490 = vunpack.c.l.b16 %v3242
  %v3491 = vunpack.c.l.b16 %v3243
  %v3492 = vunpack.c.h.b16 %v3243
  %v3493 = vunpack.c.l.b16 %v3244
  %v3494 = vunpack.c.l.b16 %v3245
  %v3495 = vunpack.c.h.b16 %v3245
  %v3496 = vunpack.c.l.b16 %v3246
  %v3497 = vunpack.c.l.b16 %v3247
  %v3498 = vunpack.c.h.b16 %v3247
  %v3499 = vunpack.c.l.b16 %v3248
  %v3500 = vunpack.c.l.b16 %v3249
  %v3501 = vunpack.c.h.b16 %v3249
  %v3502 = vunpack.c.l.b16 %v3250
  %v3503 = vpack.c.b16 %v3380, %v3377
  %v3504 = vpack.c.b16 %v3381, %v3378
  %v3505 = vpack.c.b16 %v3382, %v3379
  %v3506 = vpack.c.b16 %v3386, %v3383
  %v3507 = vpack.c.b16 %v3387, %v3384
  %v3508 = vpack.c.b16 %v3388, %v3385
  %v3509 = vpack.c.b16 %v3392, %v3389
  %v3510 = vpack.c.b16 %v3393, %v3390
  %v3511 = vpack.c.b16 %v3394, %v3391
  %v3512 = vpack.c.b16 %v3398, %v3395
  %v3513 = vpack.c.b16 %v3399, %v3396
  %v3514 = vpack.c.b16 %v3400, %v3397
  %v3515 = vpack.c.b16 %v3404, %v3401
  %v3516 = vpack.c.b16 %v3405, %v3402
  %v3517 = vpack.c.b16 %v3406, %v3403
  %v3518 = vpack.c.b16 %v3410, %v3407
  %v3519 = vpack.c.b16 %v3411, %v3408
  %v3520 = vpack.c.b16 %v3412, %v3409
  %v3521 = vpack.c.b16 %v3416, %v3413
  %v3522 = vpack.c.b16 %v3417, %v3414
  %v3523 = vpack.c.b16 %v3418, %v3415
  %v3524 = vpack.c.b16 %v3422, %v3419
  %v3525 = vpack.c.b16 %v3423, %v3420
  %v3526 = vpack.c.b16 %v3424, %v3421
  %v3527 = vpack.c.b16 %v3428, %v3425
  %v3528 = vpack.c.b16 %v3429, %v3426
  %v3529 = vpack.c.b16 %v3430, %v3427
  %v3530 = vpack.c.b16 %v3434, %v3431
  %v3531 = vpack.c.b16 %v3435, %v3432
  %v3532 = vpack.c.b16 %v3436, %v3433
  %v3533 = vpack.c.b16 %v3440, %v3437
  %v3534 = vpack.c.b16 %v3441, %v3438
  %v3535 = vpack.c.b16 %v3442, %v3439
  %v3536 = vpack.c.b16 %v3446, %v3443
  %v3537 = vpack.c.b16 %v3447, %v3444
  %v3538 = vpack.c.b16 %v3448, %v3445
  %v3539 = vpack.c.b16 %v3452, %v3449
  %v3540 = vpack.c.b16 %v3453, %v3450
  %v3541 = vpack.c.b16 %v3454, %v3451
  %v3542 = vpack.c.b16 %v3458, %v3455
  %v3543 = vpack.c.b16 %v3459, %v3456
  %v3544 = vpack.c.b16 %v3460, %v3457
  %v3545 = vpack.c.b16 %v3464, %v3461
  %v3546 = vpack.c.b16 %v3465, %v3462
  %v3547 = vpack.c.b16 %v3466, %v3463
  %v3548 = vpack.c.b16 %v3470, %v3467
  %v3549 = vpack.c.b16 %v3471, %v3468
  %v3550 = vpack.c.b16 %v3472, %v3469
  %v3551 = vpack.c.b16 %v3476, %v3473
  %v3552 = vpack.c.b16 %v3477, %v3474
  %v3553 = vpack.c.b16 %v3478, %v3475
  %v3554 = vpack.c.b16 %v3482, %v3479
  %v3555 = vpack.c.b16 %v3483, %v3480
  %v3556 = vpack.c.b16 %v3484, %v3481
  %v3557 = vpack.c.b16 %v3488, %v3485
  %v3558 = vpack.c.b16 %v3489, %v3486
  %v3559 = vpack.c.b16 %v3490, %v3487
  %v3560 = vpack.c.b16 %v3494, %v3491
  %v3561 = vpack.c.b16 %v3495, %v3492
  %v3562 = vpack.c.b16 %v3496, %v3493
  %v3563 = vpack.c.b16 %v3500, %v3497
  %v3564 = vpack.c.b16 %v3501, %v3498
  %v3565 = vpack.c.b16 %v3502, %v3499
  %v3609 = vsel %vm894, %v3505, 0
  %v3612 = vsel %vm894, %v3508, 0
  %v3615 = vsel %vm894, %v3511, 0
  %v3618 = vsel %vm894, %v3514, 0
  %v3621 = vsel %vm894, %v3517, 0
  %v3624 = vsel %vm894, %v3520, 0
  %v3627 = vsel %vm894, %v3523, 0
  %v3630 = vsel %vm894, %v3526, 0
  %v3633 = vsel %vm894, %v3529, 0
  %v3636 = vsel %vm894, %v3532, 0
  %v3639 = vsel %vm894, %v3535, 0
  %v3642 = vsel %vm894, %v3538, 0
  %v3645 = vsel %vm894, %v3541, 0
  %v3648 = vsel %vm894, %v3544, 0
  %v3651 = vsel %vm894, %v3547, 0
  %v3654 = vsel %vm894, %v3550, 0
  %v3657 = vsel %vm894, %v3553, 0
  %v3660 = vsel %vm894, %v3556, 0
  %v3663 = vsel %vm894, %v3559, 0
  %v3666 = vsel %vm894, %v3562, 0
  %v3669 = vsel %vm894, %v3565, 0
  %3671 = vmatprep.subr.bf16.mxu0 %v3252
  %3672 = vmatpush1.bf16.msra.mxu0 %v3251
  %3673 = vmatprep.subr.bf16.mxu0 %v3254
  %3674 = vmatpush1.bf16.msra.mxu0 %v3253
  %3675 = vmatprep.subr.bf16.mxu0 %v3256
  %3676 = vmatpush1.bf16.msra.mxu0 %v3255
  %3677 = vmatprep.subr.bf16.mxu0 %v3258
  %3678 = vmatpush1.bf16.msra.mxu0 %v3257
  %3679 = vmatprep.subr.bf16.mxu0 %v3260
  %3680 = vmatpush1.bf16.msra.mxu0 %v3259
  %3681 = vmatprep.subr.bf16.mxu0 %v3262
  %3682 = vmatpush1.bf16.msra.mxu0 %v3261
  %3683 = vmatprep.subr.bf16.mxu0 %v3264
  %3684 = vmatpush1.bf16.msra.mxu0 %v3263
  %3685 = vmatprep.subr.bf16.mxu0 %v3266
  %3686 = vmatpush1.bf16.msra.mxu0 %v3265
  %3687 = vmatprep.subr.bf16.mxu0 %v3268
  %3688 = vmatpush1.bf16.msra.mxu0 %v3267
  %3689 = vmatprep.subr.bf16.mxu0 %v3270
  %3690 = vmatpush1.bf16.msra.mxu0 %v3269
  %3691 = vmatprep.subr.bf16.mxu0 %v3272
  %3692 = vmatpush1.bf16.msra.mxu0 %v3271
  %3693 = vmatprep.subr.bf16.mxu0 %v3274
  %3694 = vmatpush1.bf16.msra.mxu0 %v3273
  %3695 = vmatprep.subr.bf16.mxu0 %v3276
  %3696 = vmatpush1.bf16.msra.mxu0 %v3275
  %3697 = vmatprep.subr.bf16.mxu0 %v3278
  %3698 = vmatpush1.bf16.msra.mxu0 %v3277
  %3699 = vmatprep.subr.bf16.mxu0 %v3280
  %3700 = vmatpush1.bf16.msra.mxu0 %v3279
  %3701 = vmatprep.subr.bf16.mxu0 %v3282
  %3702 = vmatpush1.bf16.msra.mxu0 %v3281
  %3703 = vmatprep.mubr.bf16.mxu0 %v3504
  %3704 = vmatmul.mubr.bf16.gmra.mrb[0].mxu0 %v3503
  %v3705 = vpop.f32.mrb[0].mxu0
  %v3706 = vadd.f32 0.0, %v3705
  %v3707 = vpop.f32.mrb[0].mxu0
  %v3708 = vadd.f32 0.0, %v3707
  %v3709 = vpop.f32.mrb[0].mxu0
  %v3710 = vadd.f32 0.0, %v3709
  %v3711 = vpop.f32.mrb[0].mxu0
  %v3712 = vadd.f32 0.0, %v3711
  %3713 = vmatprep.mubr.bf16.mxu0 %v3507
  %3714 = vmatmul.mubr.bf16.gmra.mrb[0].mxu0 %v3506
  %v3715 = vpop.f32.mrb[0].mxu0
  %v3716 = vadd.f32 0.0, %v3715
  %v3717 = vpop.f32.mrb[0].mxu0
  %v3718 = vadd.f32 0.0, %v3717
  %v3719 = vpop.f32.mrb[0].mxu0
  %v3720 = vadd.f32 0.0, %v3719
  %v3721 = vpop.f32.mrb[0].mxu0
  %v3722 = vadd.f32 0.0, %v3721
  %3723 = vmatprep.mubr.bf16.mxu0 %v3510
  %3724 = vmatmul.mubr.bf16.gmra.mrb[0].mxu0 %v3509
  %v3725 = vpop.f32.mrb[0].mxu0
  %v3726 = vadd.f32 0.0, %v3725
  %v3727 = vpop.f32.mrb[0].mxu0
  %v3728 = vadd.f32 0.0, %v3727
  %v3729 = vpop.f32.mrb[0].mxu0
  %v3730 = vadd.f32 0.0, %v3729
  %v3731 = vpop.f32.mrb[0].mxu0
  %v3732 = vadd.f32 0.0, %v3731
  %3733 = vmatprep.mubr.bf16.mxu0 %v3513
  %3734 = vmatmul.mubr.bf16.gmra.mrb[0].mxu0 %v3512
  %v3735 = vpop.f32.mrb[0].mxu0
  %v3736 = vadd.f32 0.0, %v3735
  %v3737 = vpop.f32.mrb[0].mxu0
  %v3738 = vadd.f32 0.0, %v3737
  %v3739 = vpop.f32.mrb[0].mxu0
  %v3740 = vadd.f32 0.0, %v3739
  %v3741 = vpop.f32.mrb[0].mxu0
  %v3742 = vadd.f32 0.0, %v3741
  %3743 = vmatprep.mubr.bf16.mxu0 %v3516
  %3744 = vmatmul.mubr.bf16.gmra.mrb[0].mxu0 %v3515
  %v3745 = vpop.f32.mrb[0].mxu0
  %v3746 = vadd.f32 0.0, %v3745
  %v3747 = vpop.f32.mrb[0].mxu0
  %v3748 = vadd.f32 0.0, %v3747
  %v3749 = vpop.f32.mrb[0].mxu0
  %v3750 = vadd.f32 0.0, %v3749
  %v3751 = vpop.f32.mrb[0].mxu0
  %v3752 = vadd.f32 0.0, %v3751
  %3753 = vmatprep.mubr.bf16.mxu0 %v3519
  %3754 = vmatmul.mubr.bf16.gmra.mrb[0].mxu0 %v3518
  %v3755 = vpop.f32.mrb[0].mxu0
  %v3756 = vadd.f32 0.0, %v3755
  %v3757 = vpop.f32.mrb[0].mxu0
  %v3758 = vadd.f32 0.0, %v3757
  %v3759 = vpop.f32.mrb[0].mxu0
  %v3760 = vadd.f32 0.0, %v3759
  %v3761 = vpop.f32.mrb[0].mxu0
  %v3762 = vadd.f32 0.0, %v3761
  %3763 = vmatprep.mubr.bf16.mxu0 %v3522
  %3764 = vmatmul.mubr.bf16.gmra.mrb[0].mxu0 %v3521
  %v3765 = vpop.f32.mrb[0].mxu0
  %v3766 = vadd.f32 0.0, %v3765
  %v3767 = vpop.f32.mrb[0].mxu0
  %v3768 = vadd.f32 0.0, %v3767
  %v3769 = vpop.f32.mrb[0].mxu0
  %v3770 = vadd.f32 0.0, %v3769
  %v3771 = vpop.f32.mrb[0].mxu0
  %v3772 = vadd.f32 0.0, %v3771
  %3773 = vmatprep.mubr.bf16.mxu0 %v3525
  %3774 = vmatmul.mubr.bf16.gmra.mrb[0].mxu0 %v3524
  %v3775 = vpop.f32.mrb[0].mxu0
  %v3776 = vadd.f32 0.0, %v3775
  %v3777 = vpop.f32.mrb[0].mxu0
  %v3778 = vadd.f32 0.0, %v3777
  %v3779 = vpop.f32.mrb[0].mxu0
  %v3780 = vadd.f32 0.0, %v3779
  %v3781 = vpop.f32.mrb[0].mxu0
  %v3782 = vadd.f32 0.0, %v3781
  %3783 = vmatprep.mubr.bf16.mxu0 %v3528
  %3784 = vmatmul.mubr.bf16.gmra.mrb[0].mxu0 %v3527
  %v3785 = vpop.f32.mrb[0].mxu0
  %v3786 = vadd.f32 0.0, %v3785
  %v3787 = vpop.f32.mrb[0].mxu0
  %v3788 = vadd.f32 0.0, %v3787
  %v3789 = vpop.f32.mrb[0].mxu0
  %v3790 = vadd.f32 0.0, %v3789
  %v3791 = vpop.f32.mrb[0].mxu0
  %v3792 = vadd.f32 0.0, %v3791
  %3793 = vmatprep.mubr.bf16.mxu0 %v3531
  %3794 = vmatmul.mubr.bf16.gmra.mrb[0].mxu0 %v3530
  %v3795 = vpop.f32.mrb[0].mxu0
  %v3796 = vadd.f32 0.0, %v3795
  %v3797 = vpop.f32.mrb[0].mxu0
  %v3798 = vadd.f32 0.0, %v3797
  %v3799 = vpop.f32.mrb[0].mxu0
  %v3800 = vadd.f32 0.0, %v3799
  %v3801 = vpop.f32.mrb[0].mxu0
  %v3802 = vadd.f32 0.0, %v3801
  %3803 = vmatprep.mubr.bf16.mxu0 %v3534
  %3804 = vmatmul.mubr.bf16.gmra.mrb[0].mxu0 %v3533
  %v3805 = vpop.f32.mrb[0].mxu0
  %v3806 = vadd.f32 0.0, %v3805
  %v3807 = vpop.f32.mrb[0].mxu0
  %v3808 = vadd.f32 0.0, %v3807
  %v3809 = vpop.f32.mrb[0].mxu0
  %v3810 = vadd.f32 0.0, %v3809
  %v3811 = vpop.f32.mrb[0].mxu0
  %v3812 = vadd.f32 0.0, %v3811
  %3813 = vmatprep.mubr.bf16.mxu0 %v3537
  %3814 = vmatmul.mubr.bf16.gmra.mrb[0].mxu0 %v3536
  %v3815 = vpop.f32.mrb[0].mxu0
  %v3816 = vadd.f32 0.0, %v3815
  %v3817 = vpop.f32.mrb[0].mxu0
  %v3818 = vadd.f32 0.0, %v3817
  %v3819 = vpop.f32.mrb[0].mxu0
  %v3820 = vadd.f32 0.0, %v3819
  %v3821 = vpop.f32.mrb[0].mxu0
  %v3822 = vadd.f32 0.0, %v3821
  %3823 = vmatprep.mubr.bf16.mxu0 %v3540
  %3824 = vmatmul.mubr.bf16.gmra.mrb[0].mxu0 %v3539
  %v3825 = vpop.f32.mrb[0].mxu0
  %v3826 = vadd.f32 0.0, %v3825
  %v3827 = vpop.f32.mrb[0].mxu0
  %v3828 = vadd.f32 0.0, %v3827
  %v3829 = vpop.f32.mrb[0].mxu0
  %v3830 = vadd.f32 0.0, %v3829
  %v3831 = vpop.f32.mrb[0].mxu0
  %v3832 = vadd.f32 0.0, %v3831
  %3833 = vmatprep.mubr.bf16.mxu0 %v3543
  %3834 = vmatmul.mubr.bf16.gmra.mrb[0].mxu0 %v3542
  %v3835 = vpop.f32.mrb[0].mxu0
  %v3836 = vadd.f32 0.0, %v3835
  %v3837 = vpop.f32.mrb[0].mxu0
  %v3838 = vadd.f32 0.0, %v3837
  %v3839 = vpop.f32.mrb[0].mxu0
  %v3840 = vadd.f32 0.0, %v3839
  %v3841 = vpop.f32.mrb[0].mxu0
  %v3842 = vadd.f32 0.0, %v3841
  %3843 = vmatprep.mubr.bf16.mxu0 %v3546
  %3844 = vmatmul.mubr.bf16.gmra.mrb[0].mxu0 %v3545
  %v3845 = vpop.f32.mrb[0].mxu0
  %v3846 = vadd.f32 0.0, %v3845
  %v3847 = vpop.f32.mrb[0].mxu0
  %v3848 = vadd.f32 0.0, %v3847
  %v3849 = vpop.f32.mrb[0].mxu0
  %v3850 = vadd.f32 0.0, %v3849
  %v3851 = vpop.f32.mrb[0].mxu0
  %v3852 = vadd.f32 0.0, %v3851
  %3853 = vmatprep.mubr.bf16.mxu0 %v3549
  %3854 = vmatmul.mubr.bf16.gmra.mrb[0].mxu0 %v3548
  %v3855 = vpop.f32.mrb[0].mxu0
  %v3856 = vadd.f32 0.0, %v3855
  %v3857 = vpop.f32.mrb[0].mxu0
  %v3858 = vadd.f32 0.0, %v3857
  %v3859 = vpop.f32.mrb[0].mxu0
  %v3860 = vadd.f32 0.0, %v3859
  %v3861 = vpop.f32.mrb[0].mxu0
  %v3862 = vadd.f32 0.0, %v3861
  %3863 = vmatprep.mubr.bf16.mxu0 %v3552
  %3864 = vmatmul.mubr.bf16.gmra.mrb[0].mxu0 %v3551
  %v3865 = vpop.f32.mrb[0].mxu0
  %v3866 = vadd.f32 0.0, %v3865
  %v3867 = vpop.f32.mrb[0].mxu0
  %v3868 = vadd.f32 0.0, %v3867
  %v3869 = vpop.f32.mrb[0].mxu0
  %v3870 = vadd.f32 0.0, %v3869
  %v3871 = vpop.f32.mrb[0].mxu0
  %v3872 = vadd.f32 0.0, %v3871
  %3873 = vmatprep.mubr.bf16.mxu0 %v3555
  %3874 = vmatmul.mubr.bf16.gmra.mrb[0].mxu0 %v3554
  %v3875 = vpop.f32.mrb[0].mxu0
  %v3876 = vadd.f32 0.0, %v3875
  %v3877 = vpop.f32.mrb[0].mxu0
  %v3878 = vadd.f32 0.0, %v3877
  %v3879 = vpop.f32.mrb[0].mxu0
  %v3880 = vadd.f32 0.0, %v3879
  %v3881 = vpop.f32.mrb[0].mxu0
  %v3882 = vadd.f32 0.0, %v3881
  %3883 = vmatprep.mubr.bf16.mxu0 %v3558
  %3884 = vmatmul.mubr.bf16.gmra.mrb[0].mxu0 %v3557
  %v3885 = vpop.f32.mrb[0].mxu0
  %v3886 = vadd.f32 0.0, %v3885
  %v3887 = vpop.f32.mrb[0].mxu0
  %v3888 = vadd.f32 0.0, %v3887
  %v3889 = vpop.f32.mrb[0].mxu0
  %v3890 = vadd.f32 0.0, %v3889
  %v3891 = vpop.f32.mrb[0].mxu0
  %v3892 = vadd.f32 0.0, %v3891
  %3893 = vmatprep.mubr.bf16.mxu0 %v3561
  %3894 = vmatmul.mubr.bf16.gmra.mrb[0].mxu0 %v3560
  %v3895 = vpop.f32.mrb[0].mxu0
  %v3896 = vadd.f32 0.0, %v3895
  %v3897 = vpop.f32.mrb[0].mxu0
  %v3898 = vadd.f32 0.0, %v3897
  %v3899 = vpop.f32.mrb[0].mxu0
  %v3900 = vadd.f32 0.0, %v3899
  %v3901 = vpop.f32.mrb[0].mxu0
  %v3902 = vadd.f32 0.0, %v3901
  %3903 = vmatprep.mubr.bf16.mxu0 %v3564
  %3904 = vmatmul.mubr.bf16.gmra.mrb[0].mxu0 %v3563
  %v3905 = vpop.f32.mrb[0].mxu0
  %v3906 = vadd.f32 0.0, %v3905
  %v3907 = vpop.f32.mrb[0].mxu0
  %v3908 = vadd.f32 0.0, %v3907
  %v3909 = vpop.f32.mrb[0].mxu0
  %v3910 = vadd.f32 0.0, %v3909
  %v3911 = vpop.f32.mrb[0].mxu0
  %v3912 = vadd.f32 0.0, %v3911
  %3913 = vdwg.mxu0
  %3914 = vmatprep.subr.bf16.mxu0 %v3284
  %3915 = vmatpush1.bf16.msra.mxu0 %v3283
  %3916 = vmatprep.subr.bf16.mxu0 %v3286
  %3917 = vmatpush1.bf16.msra.mxu0 %v3285
  %3918 = vmatprep.subr.bf16.mxu0 %v3288
  %3919 = vmatpush1.bf16.msra.mxu0 %v3287
  %3920 = vmatprep.subr.bf16.mxu0 %v3290
  %3921 = vmatpush1.bf16.msra.mxu0 %v3289
  %3922 = vmatprep.subr.bf16.mxu0 %v3292
  %3923 = vmatpush1.bf16.msra.mxu0 %v3291
  %3924 = vmatprep.subr.bf16.mxu0 0
  %3925 = vmatpush1.bf16.msra.mxu0 0
  %3926 = vmatprep.subr.bf16.mxu0 0
  %3927 = vmatpush1.bf16.msra.mxu0 0
  %3928 = vmatprep.subr.bf16.mxu0 0
  %3929 = vmatpush1.bf16.msra.mxu0 0
  %3930 = vmatprep.subr.bf16.mxu0 0
  %3931 = vmatpush1.bf16.msra.mxu0 0
  %3932 = vmatprep.subr.bf16.mxu0 0
  %3933 = vmatpush1.bf16.msra.mxu0 0
  %3934 = vmatprep.subr.bf16.mxu0 0
  %3935 = vmatpush1.bf16.msra.mxu0 0
  %3936 = vmatprep.subr.bf16.mxu0 0
  %3937 = vmatpush1.bf16.msra.mxu0 0
  %3938 = vmatprep.subr.bf16.mxu0 0
  %3939 = vmatpush1.bf16.msra.mxu0 0
  %3940 = vmatprep.subr.bf16.mxu0 0
  %3941 = vmatpush1.bf16.msra.mxu0 0
  %3942 = vmatprep.subr.bf16.mxu0 0
  %3943 = vmatpush1.bf16.msra.mxu0 0
  %3944 = vmatprep.subr.bf16.mxu0 0
  %3945 = vmatpush1.bf16.msra.mxu0 0
  %3946 = vmatprep.mubr.bf16.mxu0 0
  %3947 = vmatmul.mubr.bf16.gmra.mrb[0].mxu0 %v3609
  %v3948 = vpop.f32.mrb[0].mxu0
  %v3949 = vadd.f32 %v3706, %v3948
  %v3950 = vpop.f32.mrb[0].mxu0
  %v3951 = vadd.f32 %v3708, %v3950
  %v3952 = vpop.f32.mrb[0].mxu0
  %v3953 = vadd.f32 %v3710, %v3952
  %v3954 = vpop.f32.mrb[0].mxu0
  %v3955 = vadd.f32 %v3712, %v3954
  %3956 = vmatprep.mubr.bf16.mxu0 0
  %3957 = vmatmul.mubr.bf16.gmra.mrb[0].mxu0 %v3612
  %v3958 = vpop.f32.mrb[0].mxu0
  %v3959 = vadd.f32 %v3716, %v3958
  %v3960 = vpop.f32.mrb[0].mxu0
  %v3961 = vadd.f32 %v3718, %v3960
  %v3962 = vpop.f32.mrb[0].mxu0
  %v3963 = vadd.f32 %v3720, %v3962
  %v3964 = vpop.f32.mrb[0].mxu0
  %v3965 = vadd.f32 %v3722, %v3964
  %3966 = vmatprep.mubr.bf16.mxu0 0
  %3967 = vmatmul.mubr.bf16.gmra.mrb[0].mxu0 %v3615
  %v3968 = vpop.f32.mrb[0].mxu0
  %v3969 = vadd.f32 %v3726, %v3968
  %v3970 = vpop.f32.mrb[0].mxu0
  %v3971 = vadd.f32 %v3728, %v3970
  %v3972 = vpop.f32.mrb[0].mxu0
  %v3973 = vadd.f32 %v3730, %v3972
  %v3974 = vpop.f32.mrb[0].mxu0
  %v3975 = vadd.f32 %v3732, %v3974
  %3976 = vmatprep.mubr.bf16.mxu0 0
  %3977 = vmatmul.mubr.bf16.gmra.mrb[0].mxu0 %v3618
  %v3978 = vpop.f32.mrb[0].mxu0
  %v3979 = vadd.f32 %v3736, %v3978
  %v3980 = vpop.f32.mrb[0].mxu0
  %v3981 = vadd.f32 %v3738, %v3980
  %v3982 = vpop.f32.mrb[0].mxu0
  %v3983 = vadd.f32 %v3740, %v3982
  %v3984 = vpop.f32.mrb[0].mxu0
  %v3985 = vadd.f32 %v3742, %v3984
  %3986 = vmatprep.mubr.bf16.mxu0 0
  %3987 = vmatmul.mubr.bf16.gmra.mrb[0].mxu0 %v3621
  %v3988 = vpop.f32.mrb[0].mxu0
  %v3989 = vadd.f32 %v3746, %v3988
  %v3990 = vpop.f32.mrb[0].mxu0
  %v3991 = vadd.f32 %v3748, %v3990
  %v3992 = vpop.f32.mrb[0].mxu0
  %v3993 = vadd.f32 %v3750, %v3992
  %v3994 = vpop.f32.mrb[0].mxu0
  %v3995 = vadd.f32 %v3752, %v3994
  %3996 = vmatprep.mubr.bf16.mxu0 0
  %3997 = vmatmul.mubr.bf16.gmra.mrb[0].mxu0 %v3624
  %v3998 = vpop.f32.mrb[0].mxu0
  %v3999 = vadd.f32 %v3756, %v3998
  %v4000 = vpop.f32.mrb[0].mxu0
  %v4001 = vadd.f32 %v3758, %v4000
  %v4002 = vpop.f32.mrb[0].mxu0
  %v4003 = vadd.f32 %v3760, %v4002
  %v4004 = vpop.f32.mrb[0].mxu0
  %v4005 = vadd.f32 %v3762, %v4004
  %4006 = vmatprep.mubr.bf16.mxu0 0
  %4007 = vmatmul.mubr.bf16.gmra.mrb[0].mxu0 %v3627
  %v4008 = vpop.f32.mrb[0].mxu0
  %v4009 = vadd.f32 %v3766, %v4008
  %v4010 = vpop.f32.mrb[0].mxu0
  %v4011 = vadd.f32 %v3768, %v4010
  %v4012 = vpop.f32.mrb[0].mxu0
  %v4013 = vadd.f32 %v3770, %v4012
  %v4014 = vpop.f32.mrb[0].mxu0
  %v4015 = vadd.f32 %v3772, %v4014
  %4016 = vmatprep.mubr.bf16.mxu0 0
  %4017 = vmatmul.mubr.bf16.gmra.mrb[0].mxu0 %v3630
  %v4018 = vpop.f32.mrb[0].mxu0
  %v4019 = vadd.f32 %v3776, %v4018
  %v4020 = vpop.f32.mrb[0].mxu0
  %v4021 = vadd.f32 %v3778, %v4020
  %v4022 = vpop.f32.mrb[0].mxu0
  %v4023 = vadd.f32 %v3780, %v4022
  %v4024 = vpop.f32.mrb[0].mxu0
  %v4025 = vadd.f32 %v3782, %v4024
  %4026 = vmatprep.mubr.bf16.mxu0 0
  %4027 = vmatmul.mubr.bf16.gmra.mrb[0].mxu0 %v3633
  %v4028 = vpop.f32.mrb[0].mxu0
  %v4029 = vadd.f32 %v3786, %v4028
  %v4030 = vpop.f32.mrb[0].mxu0
  %v4031 = vadd.f32 %v3788, %v4030
  %v4032 = vpop.f32.mrb[0].mxu0
  %v4033 = vadd.f32 %v3790, %v4032
  %v4034 = vpop.f32.mrb[0].mxu0
  %v4035 = vadd.f32 %v3792, %v4034
  %4036 = vmatprep.mubr.bf16.mxu0 0
  %4037 = vmatmul.mubr.bf16.gmra.mrb[0].mxu0 %v3636
  %v4038 = vpop.f32.mrb[0].mxu0
  %v4039 = vadd.f32 %v3796, %v4038
  %v4040 = vpop.f32.mrb[0].mxu0
  %v4041 = vadd.f32 %v3798, %v4040
  %v4042 = vpop.f32.mrb[0].mxu0
  %v4043 = vadd.f32 %v3800, %v4042
  %v4044 = vpop.f32.mrb[0].mxu0
  %v4045 = vadd.f32 %v3802, %v4044
  %4046 = vmatprep.mubr.bf16.mxu0 0
  %4047 = vmatmul.mubr.bf16.gmra.mrb[0].mxu0 %v3639
  %v4048 = vpop.f32.mrb[0].mxu0
  %v4049 = vadd.f32 %v3806, %v4048
  %v4050 = vpop.f32.mrb[0].mxu0
  %v4051 = vadd.f32 %v3808, %v4050
  %v4052 = vpop.f32.mrb[0].mxu0
  %v4053 = vadd.f32 %v3810, %v4052
  %v4054 = vpop.f32.mrb[0].mxu0
  %v4055 = vadd.f32 %v3812, %v4054
  %4056 = vmatprep.mubr.bf16.mxu0 0
  %4057 = vmatmul.mubr.bf16.gmra.mrb[0].mxu0 %v3642
  %v4058 = vpop.f32.mrb[0].mxu0
  %v4059 = vadd.f32 %v3816, %v4058
  %v4060 = vpop.f32.mrb[0].mxu0
  %v4061 = vadd.f32 %v3818, %v4060
  %v4062 = vpop.f32.mrb[0].mxu0
  %v4063 = vadd.f32 %v3820, %v4062
  %v4064 = vpop.f32.mrb[0].mxu0
  %v4065 = vadd.f32 %v3822, %v4064
  %4066 = vmatprep.mubr.bf16.mxu0 0
  %4067 = vmatmul.mubr.bf16.gmra.mrb[0].mxu0 %v3645
  %v4068 = vpop.f32.mrb[0].mxu0
  %v4069 = vadd.f32 %v3826, %v4068
  %v4070 = vpop.f32.mrb[0].mxu0
  %v4071 = vadd.f32 %v3828, %v4070
  %v4072 = vpop.f32.mrb[0].mxu0
  %v4073 = vadd.f32 %v3830, %v4072
  %v4074 = vpop.f32.mrb[0].mxu0
  %v4075 = vadd.f32 %v3832, %v4074
  %4076 = vmatprep.mubr.bf16.mxu0 0
  %4077 = vmatmul.mubr.bf16.gmra.mrb[0].mxu0 %v3648
  %v4078 = vpop.f32.mrb[0].mxu0
  %v4079 = vadd.f32 %v3836, %v4078
  %v4080 = vpop.f32.mrb[0].mxu0
  %v4081 = vadd.f32 %v3838, %v4080
  %v4082 = vpop.f32.mrb[0].mxu0
  %v4083 = vadd.f32 %v3840, %v4082
  %v4084 = vpop.f32.mrb[0].mxu0
  %v4085 = vadd.f32 %v3842, %v4084
  %4086 = vmatprep.mubr.bf16.mxu0 0
  %4087 = vmatmul.mubr.bf16.gmra.mrb[0].mxu0 %v3651
  %v4088 = vpop.f32.mrb[0].mxu0
  %v4089 = vadd.f32 %v3846, %v4088
  %v4090 = vpop.f32.mrb[0].mxu0
  %v4091 = vadd.f32 %v3848, %v4090
  %v4092 = vpop.f32.mrb[0].mxu0
  %v4093 = vadd.f32 %v3850, %v4092
  %v4094 = vpop.f32.mrb[0].mxu0
  %v4095 = vadd.f32 %v3852, %v4094
  %4096 = vmatprep.mubr.bf16.mxu0 0
  %4097 = vmatmul.mubr.bf16.gmra.mrb[0].mxu0 %v3654
  %v4098 = vpop.f32.mrb[0].mxu0
  %v4099 = vadd.f32 %v3856, %v4098
  %v4100 = vpop.f32.mrb[0].mxu0
  %v4101 = vadd.f32 %v3858, %v4100
  %v4102 = vpop.f32.mrb[0].mxu0
  %v4103 = vadd.f32 %v3860, %v4102
  %v4104 = vpop.f32.mrb[0].mxu0
  %v4105 = vadd.f32 %v3862, %v4104
  %4106 = vmatprep.mubr.bf16.mxu0 0
  %4107 = vmatmul.mubr.bf16.gmra.mrb[0].mxu0 %v3657
  %v4108 = vpop.f32.mrb[0].mxu0
  %v4109 = vadd.f32 %v3866, %v4108
  %v4110 = vpop.f32.mrb[0].mxu0
  %v4111 = vadd.f32 %v3868, %v4110
  %v4112 = vpop.f32.mrb[0].mxu0
  %v4113 = vadd.f32 %v3870, %v4112
  %v4114 = vpop.f32.mrb[0].mxu0
  %v4115 = vadd.f32 %v3872, %v4114
  %4116 = vmatprep.mubr.bf16.mxu0 0
  %4117 = vmatmul.mubr.bf16.gmra.mrb[0].mxu0 %v3660
  %v4118 = vpop.f32.mrb[0].mxu0
  %v4119 = vadd.f32 %v3876, %v4118
  %v4120 = vpop.f32.mrb[0].mxu0
  %v4121 = vadd.f32 %v3878, %v4120
  %v4122 = vpop.f32.mrb[0].mxu0
  %v4123 = vadd.f32 %v3880, %v4122
  %v4124 = vpop.f32.mrb[0].mxu0
  %v4125 = vadd.f32 %v3882, %v4124
  %4126 = vmatprep.mubr.bf16.mxu0 0
  %4127 = vmatmul.mubr.bf16.gmra.mrb[0].mxu0 %v3663
  %v4128 = vpop.f32.mrb[0].mxu0
  %v4129 = vadd.f32 %v3886, %v4128
  %v4130 = vpop.f32.mrb[0].mxu0
  %v4131 = vadd.f32 %v3888, %v4130
  %v4132 = vpop.f32.mrb[0].mxu0
  %v4133 = vadd.f32 %v3890, %v4132
  %v4134 = vpop.f32.mrb[0].mxu0
  %v4135 = vadd.f32 %v3892, %v4134
  %4136 = vmatprep.mubr.bf16.mxu0 0
  %4137 = vmatmul.mubr.bf16.gmra.mrb[0].mxu0 %v3666
  %v4138 = vpop.f32.mrb[0].mxu0
  %v4139 = vadd.f32 %v3896, %v4138
  %v4140 = vpop.f32.mrb[0].mxu0
  %v4141 = vadd.f32 %v3898, %v4140
  %v4142 = vpop.f32.mrb[0].mxu0
  %v4143 = vadd.f32 %v3900, %v4142
  %v4144 = vpop.f32.mrb[0].mxu0
  %v4145 = vadd.f32 %v3902, %v4144
  %4146 = vmatprep.mubr.bf16.mxu0 0
  %4147 = vmatmul.mubr.bf16.gmra.mrb[0].mxu0 %v3669
  %v4148 = vpop.f32.mrb[0].mxu0
  %v4149 = vadd.f32 %v3906, %v4148
  %v4150 = vpop.f32.mrb[0].mxu0
  %v4151 = vadd.f32 %v3908, %v4150
  %v4152 = vpop.f32.mrb[0].mxu0
  %v4153 = vadd.f32 %v3910, %v4152
  %v4154 = vpop.f32.mrb[0].mxu0
  %v4155 = vadd.f32 %v3912, %v4154
  %4156 = vdwg.mxu0
  %v4157 = vsel %vm1444, %v3951, 0.0
  %v4158 = vadd.f32 %v3949, %v4157
  %4159 = vadd.xlane.f32.xlu0 %v4158
  %v4160 = vpop.xlane.xlu0 %4159
  %v4161 = vsel %vm1444, %v3955, 0.0
  %v4162 = vadd.f32 %v3953, %v4161
  %4163 = vadd.xlane.f32.xlu0 %v4162
  %v4164 = vpop.xlane.xlu0 %4163
  %v4165 = vsel %vm1444, %v3961, 0.0
  %v4166 = vadd.f32 %v3959, %v4165
  %4167 = vadd.xlane.f32.xlu0 %v4166
  %v4168 = vpop.xlane.xlu0 %4167
  %v4169 = vsel %vm1444, %v3965, 0.0
  %v4170 = vadd.f32 %v3963, %v4169
  %4171 = vadd.xlane.f32.xlu0 %v4170
  %v4172 = vpop.xlane.xlu0 %4171
  %v4173 = vsel %vm1444, %v3971, 0.0
  %v4174 = vadd.f32 %v3969, %v4173
  %4175 = vadd.xlane.f32.xlu0 %v4174
  %v4176 = vpop.xlane.xlu0 %4175
  %v4177 = vsel %vm1444, %v3975, 0.0
  %v4178 = vadd.f32 %v3973, %v4177
  %4179 = vadd.xlane.f32.xlu0 %v4178
  %v4180 = vpop.xlane.xlu0 %4179
  %v4181 = vsel %vm1444, %v3981, 0.0
  %v4182 = vadd.f32 %v3979, %v4181
  %4183 = vadd.xlane.f32.xlu0 %v4182
  %v4184 = vpop.xlane.xlu0 %4183
  %v4185 = vsel %vm1444, %v3985, 0.0
  %v4186 = vadd.f32 %v3983, %v4185
  %4187 = vadd.xlane.f32.xlu0 %v4186
  %v4188 = vpop.xlane.xlu0 %4187
  %v4189 = vsel %vm1444, %v3991, 0.0
  %v4190 = vadd.f32 %v3989, %v4189
  %4191 = vadd.xlane.f32.xlu0 %v4190
  %v4192 = vpop.xlane.xlu0 %4191
  %v4193 = vsel %vm1444, %v3995, 0.0
  %v4194 = vadd.f32 %v3993, %v4193
  %4195 = vadd.xlane.f32.xlu0 %v4194
  %v4196 = vpop.xlane.xlu0 %4195
  %v4197 = vsel %vm1444, %v4001, 0.0
  %v4198 = vadd.f32 %v3999, %v4197
  %4199 = vadd.xlane.f32.xlu0 %v4198
  %v4200 = vpop.xlane.xlu0 %4199
  %v4201 = vsel %vm1444, %v4005, 0.0
  %v4202 = vadd.f32 %v4003, %v4201
  %4203 = vadd.xlane.f32.xlu0 %v4202
  %v4204 = vpop.xlane.xlu0 %4203
  %v4205 = vsel %vm1444, %v4011, 0.0
  %v4206 = vadd.f32 %v4009, %v4205
  %4207 = vadd.xlane.f32.xlu0 %v4206
  %v4208 = vpop.xlane.xlu0 %4207
  %v4209 = vsel %vm1444, %v4015, 0.0
  %v4210 = vadd.f32 %v4013, %v4209
  %4211 = vadd.xlane.f32.xlu0 %v4210
  %v4212 = vpop.xlane.xlu0 %4211
  %v4213 = vsel %vm1444, %v4021, 0.0
  %v4214 = vadd.f32 %v4019, %v4213
  %4215 = vadd.xlane.f32.xlu0 %v4214
  %v4216 = vpop.xlane.xlu0 %4215
  %v4217 = vsel %vm1444, %v4025, 0.0
  %v4218 = vadd.f32 %v4023, %v4217
  %4219 = vadd.xlane.f32.xlu0 %v4218
  %v4220 = vpop.xlane.xlu0 %4219
  %v4221 = vsel %vm1444, %v4031, 0.0
  %v4222 = vadd.f32 %v4029, %v4221
  %4223 = vadd.xlane.f32.xlu0 %v4222
  %v4224 = vpop.xlane.xlu0 %4223
  %v4225 = vsel %vm1444, %v4035, 0.0
  %v4226 = vadd.f32 %v4033, %v4225
  %4227 = vadd.xlane.f32.xlu0 %v4226
  %v4228 = vpop.xlane.xlu0 %4227
  %v4229 = vsel %vm1444, %v4041, 0.0
  %v4230 = vadd.f32 %v4039, %v4229
  %4231 = vadd.xlane.f32.xlu0 %v4230
  %v4232 = vpop.xlane.xlu0 %4231
  %v4233 = vsel %vm1444, %v4045, 0.0
  %v4234 = vadd.f32 %v4043, %v4233
  %4235 = vadd.xlane.f32.xlu0 %v4234
  %v4236 = vpop.xlane.xlu0 %4235
  %v4237 = vsel %vm1444, %v4051, 0.0
  %v4238 = vadd.f32 %v4049, %v4237
  %4239 = vadd.xlane.f32.xlu0 %v4238
  %v4240 = vpop.xlane.xlu0 %4239
  %v4241 = vsel %vm1444, %v4055, 0.0
  %v4242 = vadd.f32 %v4053, %v4241
  %4243 = vadd.xlane.f32.xlu0 %v4242
  %v4244 = vpop.xlane.xlu0 %4243
  %v4245 = vsel %vm1444, %v4061, 0.0
  %v4246 = vadd.f32 %v4059, %v4245
  %4247 = vadd.xlane.f32.xlu0 %v4246
  %v4248 = vpop.xlane.xlu0 %4247
  %v4249 = vsel %vm1444, %v4065, 0.0
  %v4250 = vadd.f32 %v4063, %v4249
  %4251 = vadd.xlane.f32.xlu0 %v4250
  %v4252 = vpop.xlane.xlu0 %4251
  %v4253 = vsel %vm1444, %v4071, 0.0
  %v4254 = vadd.f32 %v4069, %v4253
  %4255 = vadd.xlane.f32.xlu0 %v4254
  %v4256 = vpop.xlane.xlu0 %4255
  %v4257 = vsel %vm1444, %v4075, 0.0
  %v4258 = vadd.f32 %v4073, %v4257
  %4259 = vadd.xlane.f32.xlu0 %v4258
  %v4260 = vpop.xlane.xlu0 %4259
  %v4261 = vsel %vm1444, %v4081, 0.0
  %v4262 = vadd.f32 %v4079, %v4261
  %4263 = vadd.xlane.f32.xlu0 %v4262
  %v4264 = vpop.xlane.xlu0 %4263
  %v4265 = vsel %vm1444, %v4085, 0.0
  %v4266 = vadd.f32 %v4083, %v4265
  %4267 = vadd.xlane.f32.xlu0 %v4266
  %v4268 = vpop.xlane.xlu0 %4267
  %v4269 = vsel %vm1444, %v4091, 0.0
  %v4270 = vadd.f32 %v4089, %v4269
  %4271 = vadd.xlane.f32.xlu0 %v4270
  %v4272 = vpop.xlane.xlu0 %4271
  %v4273 = vsel %vm1444, %v4095, 0.0
  %v4274 = vadd.f32 %v4093, %v4273
  %4275 = vadd.xlane.f32.xlu0 %v4274
  %v4276 = vpop.xlane.xlu0 %4275
  %v4277 = vsel %vm1444, %v4101, 0.0
  %v4278 = vadd.f32 %v4099, %v4277
  %4279 = vadd.xlane.f32.xlu0 %v4278
  %v4280 = vpop.xlane.xlu0 %4279
  %v4281 = vsel %vm1444, %v4105, 0.0
  %v4282 = vadd.f32 %v4103, %v4281
  %4283 = vadd.xlane.f32.xlu0 %v4282
  %v4284 = vpop.xlane.xlu0 %4283
  %v4285 = vsel %vm1444, %v4111, 0.0
  %v4286 = vadd.f32 %v4109, %v4285
  %4287 = vadd.xlane.f32.xlu0 %v4286
  %v4288 = vpop.xlane.xlu0 %4287
  %v4289 = vsel %vm1444, %v4115, 0.0
  %v4290 = vadd.f32 %v4113, %v4289
  %4291 = vadd.xlane.f32.xlu0 %v4290
  %v4292 = vpop.xlane.xlu0 %4291
  %v4293 = vsel %vm1444, %v4121, 0.0
  %v4294 = vadd.f32 %v4119, %v4293
  %4295 = vadd.xlane.f32.xlu0 %v4294
  %v4296 = vpop.xlane.xlu0 %4295
  %v4297 = vsel %vm1444, %v4125, 0.0
  %v4298 = vadd.f32 %v4123, %v4297
  %4299 = vadd.xlane.f32.xlu0 %v4298
  %v4300 = vpop.xlane.xlu0 %4299
  %v4301 = vsel %vm1444, %v4131, 0.0
  %v4302 = vadd.f32 %v4129, %v4301
  %4303 = vadd.xlane.f32.xlu0 %v4302
  %v4304 = vpop.xlane.xlu0 %4303
  %v4305 = vsel %vm1444, %v4135, 0.0
  %v4306 = vadd.f32 %v4133, %v4305
  %4307 = vadd.xlane.f32.xlu0 %v4306
  %v4308 = vpop.xlane.xlu0 %4307
  %v4309 = vsel %vm1444, %v4141, 0.0
  %v4310 = vadd.f32 %v4139, %v4309
  %4311 = vadd.xlane.f32.xlu0 %v4310
  %v4312 = vpop.xlane.xlu0 %4311
  %v4313 = vsel %vm1444, %v4145, 0.0
  %v4314 = vadd.f32 %v4143, %v4313
  %4315 = vadd.xlane.f32.xlu0 %v4314
  %v4316 = vpop.xlane.xlu0 %4315
  %v4317 = vsel %vm1444, %v4151, 0.0
  %v4318 = vadd.f32 %v4149, %v4317
  %4319 = vadd.xlane.f32.xlu0 %v4318
  %v4320 = vpop.xlane.xlu0 %4319
  %v4321 = vsel %vm1444, %v4155, 0.0
  %v4322 = vadd.f32 %v4153, %v4321
  %4323 = vadd.xlane.f32.xlu0 %v4322
  %v4324 = vpop.xlane.xlu0 %4323
  %v4325 = vmul.f32 %v3949, %v3949
  %v4326 = vmul.f32 %v3951, %v3951
  %v4327 = vmul.f32 %v3953, %v3953
  %v4328 = vmul.f32 %v3955, %v3955
  %v4329 = vmul.f32 %v3959, %v3959
  %v4330 = vmul.f32 %v3961, %v3961
  %v4331 = vmul.f32 %v3963, %v3963
  %v4332 = vmul.f32 %v3965, %v3965
  %v4333 = vmul.f32 %v3969, %v3969
  %v4334 = vmul.f32 %v3971, %v3971
  %v4335 = vmul.f32 %v3973, %v3973
  %v4336 = vmul.f32 %v3975, %v3975
  %v4337 = vmul.f32 %v3979, %v3979
  %v4338 = vmul.f32 %v3981, %v3981
  %v4339 = vmul.f32 %v3983, %v3983
  %v4340 = vmul.f32 %v3985, %v3985
  %v4341 = vmul.f32 %v3989, %v3989
  %v4342 = vmul.f32 %v3991, %v3991
  %v4343 = vmul.f32 %v3993, %v3993
  %v4344 = vmul.f32 %v3995, %v3995
  %v4345 = vmul.f32 %v3999, %v3999
  %v4346 = vmul.f32 %v4001, %v4001
  %v4347 = vmul.f32 %v4003, %v4003
  %v4348 = vmul.f32 %v4005, %v4005
  %v4349 = vmul.f32 %v4009, %v4009
  %v4350 = vmul.f32 %v4011, %v4011
  %v4351 = vmul.f32 %v4013, %v4013
  %v4352 = vmul.f32 %v4015, %v4015
  %v4353 = vmul.f32 %v4019, %v4019
  %v4354 = vmul.f32 %v4021, %v4021
  %v4355 = vmul.f32 %v4023, %v4023
  %v4356 = vmul.f32 %v4025, %v4025
  %v4357 = vmul.f32 %v4029, %v4029
  %v4358 = vmul.f32 %v4031, %v4031
  %v4359 = vmul.f32 %v4033, %v4033
  %v4360 = vmul.f32 %v4035, %v4035
  %v4361 = vmul.f32 %v4039, %v4039
  %v4362 = vmul.f32 %v4041, %v4041
  %v4363 = vmul.f32 %v4043, %v4043
  %v4364 = vmul.f32 %v4045, %v4045
  %v4365 = vmul.f32 %v4049, %v4049
  %v4366 = vmul.f32 %v4051, %v4051
  %v4367 = vmul.f32 %v4053, %v4053
  %v4368 = vmul.f32 %v4055, %v4055
  %v4369 = vmul.f32 %v4059, %v4059
  %v4370 = vmul.f32 %v4061, %v4061
  %v4371 = vmul.f32 %v4063, %v4063
  %v4372 = vmul.f32 %v4065, %v4065
  %v4373 = vmul.f32 %v4069, %v4069
  %v4374 = vmul.f32 %v4071, %v4071
  %v4375 = vmul.f32 %v4073, %v4073
  %v4376 = vmul.f32 %v4075, %v4075
  %v4377 = vmul.f32 %v4079, %v4079
  %v4378 = vmul.f32 %v4081, %v4081
  %v4379 = vmul.f32 %v4083, %v4083
  %v4380 = vmul.f32 %v4085, %v4085
  %v4381 = vmul.f32 %v4089, %v4089
  %v4382 = vmul.f32 %v4091, %v4091
  %v4383 = vmul.f32 %v4093, %v4093
  %v4384 = vmul.f32 %v4095, %v4095
  %v4385 = vmul.f32 %v4099, %v4099
  %v4386 = vmul.f32 %v4101, %v4101
  %v4387 = vmul.f32 %v4103, %v4103
  %v4388 = vmul.f32 %v4105, %v4105
  %v4389 = vmul.f32 %v4109, %v4109
  %v4390 = vmul.f32 %v4111, %v4111
  %v4391 = vmul.f32 %v4113, %v4113
  %v4392 = vmul.f32 %v4115, %v4115
  %v4393 = vmul.f32 %v4119, %v4119
  %v4394 = vmul.f32 %v4121, %v4121
  %v4395 = vmul.f32 %v4123, %v4123
  %v4396 = vmul.f32 %v4125, %v4125
  %v4397 = vmul.f32 %v4129, %v4129
  %v4398 = vmul.f32 %v4131, %v4131
  %v4399 = vmul.f32 %v4133, %v4133
  %v4400 = vmul.f32 %v4135, %v4135
  %v4401 = vmul.f32 %v4139, %v4139
  %v4402 = vmul.f32 %v4141, %v4141
  %v4403 = vmul.f32 %v4143, %v4143
  %v4404 = vmul.f32 %v4145, %v4145
  %v4405 = vmul.f32 %v4149, %v4149
  %v4406 = vmul.f32 %v4151, %v4151
  %v4407 = vmul.f32 %v4153, %v4153
  %v4408 = vmul.f32 %v4155, %v4155
  %v4409 = vsel %vm1444, %v4326, 0.0
  %v4410 = vadd.f32 %v4325, %v4409
  %4411 = vadd.xlane.f32.xlu0 %v4410
  %v4412 = vpop.xlane.xlu0 %4411
  %v4413 = vsel %vm1444, %v4328, 0.0
  %v4414 = vadd.f32 %v4327, %v4413
  %4415 = vadd.xlane.f32.xlu0 %v4414
  %v4416 = vpop.xlane.xlu0 %4415
  %v4417 = vsel %vm1444, %v4330, 0.0
  %v4418 = vadd.f32 %v4329, %v4417
  %4419 = vadd.xlane.f32.xlu0 %v4418
  %v4420 = vpop.xlane.xlu0 %4419
  %v4421 = vsel %vm1444, %v4332, 0.0
  %v4422 = vadd.f32 %v4331, %v4421
  %4423 = vadd.xlane.f32.xlu0 %v4422
  %v4424 = vpop.xlane.xlu0 %4423
  %v4425 = vsel %vm1444, %v4334, 0.0
  %v4426 = vadd.f32 %v4333, %v4425
  %4427 = vadd.xlane.f32.xlu0 %v4426
  %v4428 = vpop.xlane.xlu0 %4427
  %v4429 = vsel %vm1444, %v4336, 0.0
  %v4430 = vadd.f32 %v4335, %v4429
  %4431 = vadd.xlane.f32.xlu0 %v4430
  %v4432 = vpop.xlane.xlu0 %4431
  %v4433 = vsel %vm1444, %v4338, 0.0
  %v4434 = vadd.f32 %v4337, %v4433
  %4435 = vadd.xlane.f32.xlu0 %v4434
  %v4436 = vpop.xlane.xlu0 %4435
  %v4437 = vsel %vm1444, %v4340, 0.0
  %v4438 = vadd.f32 %v4339, %v4437
  %4439 = vadd.xlane.f32.xlu0 %v4438
  %v4440 = vpop.xlane.xlu0 %4439
  %v4441 = vsel %vm1444, %v4342, 0.0
  %v4442 = vadd.f32 %v4341, %v4441
  %4443 = vadd.xlane.f32.xlu0 %v4442
  %v4444 = vpop.xlane.xlu0 %4443
  %v4445 = vsel %vm1444, %v4344, 0.0
  %v4446 = vadd.f32 %v4343, %v4445
  %4447 = vadd.xlane.f32.xlu0 %v4446
  %v4448 = vpop.xlane.xlu0 %4447
  %v4449 = vsel %vm1444, %v4346, 0.0
  %v4450 = vadd.f32 %v4345, %v4449
  %4451 = vadd.xlane.f32.xlu0 %v4450
  %v4452 = vpop.xlane.xlu0 %4451
  %v4453 = vsel %vm1444, %v4348, 0.0
  %v4454 = vadd.f32 %v4347, %v4453
  %4455 = vadd.xlane.f32.xlu0 %v4454
  %v4456 = vpop.xlane.xlu0 %4455
  %v4457 = vsel %vm1444, %v4350, 0.0
  %v4458 = vadd.f32 %v4349, %v4457
  %4459 = vadd.xlane.f32.xlu0 %v4458
  %v4460 = vpop.xlane.xlu0 %4459
  %v4461 = vsel %vm1444, %v4352, 0.0
  %v4462 = vadd.f32 %v4351, %v4461
  %4463 = vadd.xlane.f32.xlu0 %v4462
  %v4464 = vpop.xlane.xlu0 %4463
  %v4465 = vsel %vm1444, %v4354, 0.0
  %v4466 = vadd.f32 %v4353, %v4465
  %4467 = vadd.xlane.f32.xlu0 %v4466
  %v4468 = vpop.xlane.xlu0 %4467
  %v4469 = vsel %vm1444, %v4356, 0.0
  %v4470 = vadd.f32 %v4355, %v4469
  %4471 = vadd.xlane.f32.xlu0 %v4470
  %v4472 = vpop.xlane.xlu0 %4471
  %v4473 = vsel %vm1444, %v4358, 0.0
  %v4474 = vadd.f32 %v4357, %v4473
  %4475 = vadd.xlane.f32.xlu0 %v4474
  %v4476 = vpop.xlane.xlu0 %4475
  %v4477 = vsel %vm1444, %v4360, 0.0
  %v4478 = vadd.f32 %v4359, %v4477
  %4479 = vadd.xlane.f32.xlu0 %v4478
  %v4480 = vpop.xlane.xlu0 %4479
  %v4481 = vsel %vm1444, %v4362, 0.0
  %v4482 = vadd.f32 %v4361, %v4481
  %4483 = vadd.xlane.f32.xlu0 %v4482
  %v4484 = vpop.xlane.xlu0 %4483
  %v4485 = vsel %vm1444, %v4364, 0.0
  %v4486 = vadd.f32 %v4363, %v4485
  %4487 = vadd.xlane.f32.xlu0 %v4486
  %v4488 = vpop.xlane.xlu0 %4487
  %v4489 = vsel %vm1444, %v4366, 0.0
  %v4490 = vadd.f32 %v4365, %v4489
  %4491 = vadd.xlane.f32.xlu0 %v4490
  %v4492 = vpop.xlane.xlu0 %4491
  %v4493 = vsel %vm1444, %v4368, 0.0
  %v4494 = vadd.f32 %v4367, %v4493
  %4495 = vadd.xlane.f32.xlu0 %v4494
  %v4496 = vpop.xlane.xlu0 %4495
  %v4497 = vsel %vm1444, %v4370, 0.0
  %v4498 = vadd.f32 %v4369, %v4497
  %4499 = vadd.xlane.f32.xlu0 %v4498
  %v4500 = vpop.xlane.xlu0 %4499
  %v4501 = vsel %vm1444, %v4372, 0.0
  %v4502 = vadd.f32 %v4371, %v4501
  %4503 = vadd.xlane.f32.xlu0 %v4502
  %v4504 = vpop.xlane.xlu0 %4503
  %v4505 = vsel %vm1444, %v4374, 0.0
  %v4506 = vadd.f32 %v4373, %v4505
  %4507 = vadd.xlane.f32.xlu0 %v4506
  %v4508 = vpop.xlane.xlu0 %4507
  %v4509 = vsel %vm1444, %v4376, 0.0
  %v4510 = vadd.f32 %v4375, %v4509
  %4511 = vadd.xlane.f32.xlu0 %v4510
  %v4512 = vpop.xlane.xlu0 %4511
  %v4513 = vsel %vm1444, %v4378, 0.0
  %v4514 = vadd.f32 %v4377, %v4513
  %4515 = vadd.xlane.f32.xlu0 %v4514
  %v4516 = vpop.xlane.xlu0 %4515
  %v4517 = vsel %vm1444, %v4380, 0.0
  %v4518 = vadd.f32 %v4379, %v4517
  %4519 = vadd.xlane.f32.xlu0 %v4518
  %v4520 = vpop.xlane.xlu0 %4519
  %v4521 = vsel %vm1444, %v4382, 0.0
  %v4522 = vadd.f32 %v4381, %v4521
  %4523 = vadd.xlane.f32.xlu0 %v4522
  %v4524 = vpop.xlane.xlu0 %4523
  %v4525 = vsel %vm1444, %v4384, 0.0
  %v4526 = vadd.f32 %v4383, %v4525
  %4527 = vadd.xlane.f32.xlu0 %v4526
  %v4528 = vpop.xlane.xlu0 %4527
  %v4529 = vsel %vm1444, %v4386, 0.0
  %v4530 = vadd.f32 %v4385, %v4529
  %4531 = vadd.xlane.f32.xlu0 %v4530
  %v4532 = vpop.xlane.xlu0 %4531
  %v4533 = vsel %vm1444, %v4388, 0.0
  %v4534 = vadd.f32 %v4387, %v4533
  %4535 = vadd.xlane.f32.xlu0 %v4534
  %v4536 = vpop.xlane.xlu0 %4535
  %v4537 = vsel %vm1444, %v4390, 0.0
  %v4538 = vadd.f32 %v4389, %v4537
  %4539 = vadd.xlane.f32.xlu0 %v4538
  %v4540 = vpop.xlane.xlu0 %4539
  %v4541 = vsel %vm1444, %v4392, 0.0
  %v4542 = vadd.f32 %v4391, %v4541
  %4543 = vadd.xlane.f32.xlu0 %v4542
  %v4544 = vpop.xlane.xlu0 %4543
  %v4545 = vsel %vm1444, %v4394, 0.0
  %v4546 = vadd.f32 %v4393, %v4545
  %4547 = vadd.xlane.f32.xlu0 %v4546
  %v4548 = vpop.xlane.xlu0 %4547
  %v4549 = vsel %vm1444, %v4396, 0.0
  %v4550 = vadd.f32 %v4395, %v4549
  %4551 = vadd.xlane.f32.xlu0 %v4550
  %v4552 = vpop.xlane.xlu0 %4551
  %v4553 = vsel %vm1444, %v4398, 0.0
  %v4554 = vadd.f32 %v4397, %v4553
  %4555 = vadd.xlane.f32.xlu0 %v4554
  %v4556 = vpop.xlane.xlu0 %4555
  %v4557 = vsel %vm1444, %v4400, 0.0
  %v4558 = vadd.f32 %v4399, %v4557
  %4559 = vadd.xlane.f32.xlu0 %v4558
  %v4560 = vpop.xlane.xlu0 %4559
  %v4561 = vsel %vm1444, %v4402, 0.0
  %v4562 = vadd.f32 %v4401, %v4561
  %4563 = vadd.xlane.f32.xlu0 %v4562
  %v4564 = vpop.xlane.xlu0 %4563
  %v4565 = vsel %vm1444, %v4404, 0.0
  %v4566 = vadd.f32 %v4403, %v4565
  %4567 = vadd.xlane.f32.xlu0 %v4566
  %v4568 = vpop.xlane.xlu0 %4567
  %v4569 = vsel %vm1444, %v4406, 0.0
  %v4570 = vadd.f32 %v4405, %v4569
  %4571 = vadd.xlane.f32.xlu0 %v4570
  %v4572 = vpop.xlane.xlu0 %4571
  %v4573 = vsel %vm1444, %v4408, 0.0
  %v4574 = vadd.f32 %v4407, %v4573
  %4575 = vadd.xlane.f32.xlu0 %v4574
  %v4576 = vpop.xlane.xlu0 %4575
  %v4577 = vmul.f32 %v4160, 0.0051020407
  %v4578 = vmul.f32 %v4164, 0.0051020407
  %v4579 = vmul.f32 %v4168, 0.0051020407
  %v4580 = vmul.f32 %v4172, 0.0051020407
  %v4581 = vmul.f32 %v4176, 0.0051020407
  %v4582 = vmul.f32 %v4180, 0.0051020407
  %v4583 = vmul.f32 %v4184, 0.0051020407
  %v4584 = vmul.f32 %v4188, 0.0051020407
  %v4585 = vmul.f32 %v4192, 0.0051020407
  %v4586 = vmul.f32 %v4196, 0.0051020407
  %v4587 = vmul.f32 %v4200, 0.0051020407
  %v4588 = vmul.f32 %v4204, 0.0051020407
  %v4589 = vmul.f32 %v4208, 0.0051020407
  %v4590 = vmul.f32 %v4212, 0.0051020407
  %v4591 = vmul.f32 %v4216, 0.0051020407
  %v4592 = vmul.f32 %v4220, 0.0051020407
  %v4593 = vmul.f32 %v4224, 0.0051020407
  %v4594 = vmul.f32 %v4228, 0.0051020407
  %v4595 = vmul.f32 %v4232, 0.0051020407
  %v4596 = vmul.f32 %v4236, 0.0051020407
  %v4597 = vmul.f32 %v4240, 0.0051020407
  %v4598 = vmul.f32 %v4244, 0.0051020407
  %v4599 = vmul.f32 %v4248, 0.0051020407
  %v4600 = vmul.f32 %v4252, 0.0051020407
  %v4601 = vmul.f32 %v4256, 0.0051020407
  %v4602 = vmul.f32 %v4260, 0.0051020407
  %v4603 = vmul.f32 %v4264, 0.0051020407
  %v4604 = vmul.f32 %v4268, 0.0051020407
  %v4605 = vmul.f32 %v4272, 0.0051020407
  %v4606 = vmul.f32 %v4276, 0.0051020407
  %v4607 = vmul.f32 %v4280, 0.0051020407
  %v4608 = vmul.f32 %v4284, 0.0051020407
  %v4609 = vmul.f32 %v4288, 0.0051020407
  %v4610 = vmul.f32 %v4292, 0.0051020407
  %v4611 = vmul.f32 %v4296, 0.0051020407
  %v4612 = vmul.f32 %v4300, 0.0051020407
  %v4613 = vmul.f32 %v4304, 0.0051020407
  %v4614 = vmul.f32 %v4308, 0.0051020407
  %v4615 = vmul.f32 %v4312, 0.0051020407
  %v4616 = vmul.f32 %v4316, 0.0051020407
  %v4617 = vmul.f32 %v4320, 0.0051020407
  %v4618 = vmul.f32 %v4324, 0.0051020407
  %v4619 = vmul.f32 %v4412, 0.0051020407
  %v4620 = vmul.f32 %v4416, 0.0051020407
  %v4621 = vmul.f32 %v4420, 0.0051020407
  %v4622 = vmul.f32 %v4424, 0.0051020407
  %v4623 = vmul.f32 %v4428, 0.0051020407
  %v4624 = vmul.f32 %v4432, 0.0051020407
  %v4625 = vmul.f32 %v4436, 0.0051020407
  %v4626 = vmul.f32 %v4440, 0.0051020407
  %v4627 = vmul.f32 %v4444, 0.0051020407
  %v4628 = vmul.f32 %v4448, 0.0051020407
  %v4629 = vmul.f32 %v4452, 0.0051020407
  %v4630 = vmul.f32 %v4456, 0.0051020407
  %v4631 = vmul.f32 %v4460, 0.0051020407
  %v4632 = vmul.f32 %v4464, 0.0051020407
  %v4633 = vmul.f32 %v4468, 0.0051020407
  %v4634 = vmul.f32 %v4472, 0.0051020407
  %v4635 = vmul.f32 %v4476, 0.0051020407
  %v4636 = vmul.f32 %v4480, 0.0051020407
  %v4637 = vmul.f32 %v4484, 0.0051020407
  %v4638 = vmul.f32 %v4488, 0.0051020407
  %v4639 = vmul.f32 %v4492, 0.0051020407
  %v4640 = vmul.f32 %v4496, 0.0051020407
  %v4641 = vmul.f32 %v4500, 0.0051020407
  %v4642 = vmul.f32 %v4504, 0.0051020407
  %v4643 = vmul.f32 %v4508, 0.0051020407
  %v4644 = vmul.f32 %v4512, 0.0051020407
  %v4645 = vmul.f32 %v4516, 0.0051020407
  %v4646 = vmul.f32 %v4520, 0.0051020407
  %v4647 = vmul.f32 %v4524, 0.0051020407
  %v4648 = vmul.f32 %v4528, 0.0051020407
  %v4649 = vmul.f32 %v4532, 0.0051020407
  %v4650 = vmul.f32 %v4536, 0.0051020407
  %v4651 = vmul.f32 %v4540, 0.0051020407
  %v4652 = vmul.f32 %v4544, 0.0051020407
  %v4653 = vmul.f32 %v4548, 0.0051020407
  %v4654 = vmul.f32 %v4552, 0.0051020407
  %v4655 = vmul.f32 %v4556, 0.0051020407
  %v4656 = vmul.f32 %v4560, 0.0051020407
  %v4657 = vmul.f32 %v4564, 0.0051020407
  %v4658 = vmul.f32 %v4568, 0.0051020407
  %v4659 = vmul.f32 %v4572, 0.0051020407
  %v4660 = vmul.f32 %v4576, 0.0051020407
  %v4661 = vmul.f32 %v4577, %v4577
  %v4662 = vmul.f32 %v4578, %v4578
  %v4663 = vmul.f32 %v4579, %v4579
  %v4664 = vmul.f32 %v4580, %v4580
  %v4665 = vmul.f32 %v4581, %v4581
  %v4666 = vmul.f32 %v4582, %v4582
  %v4667 = vmul.f32 %v4583, %v4583
  %v4668 = vmul.f32 %v4584, %v4584
  %v4669 = vmul.f32 %v4585, %v4585
  %v4670 = vmul.f32 %v4586, %v4586
  %v4671 = vmul.f32 %v4587, %v4587
  %v4672 = vmul.f32 %v4588, %v4588
  %v4673 = vmul.f32 %v4589, %v4589
  %v4674 = vmul.f32 %v4590, %v4590
  %v4675 = vmul.f32 %v4591, %v4591
  %v4676 = vmul.f32 %v4592, %v4592
  %v4677 = vmul.f32 %v4593, %v4593
  %v4678 = vmul.f32 %v4594, %v4594
  %v4679 = vmul.f32 %v4595, %v4595
  %v4680 = vmul.f32 %v4596, %v4596
  %v4681 = vmul.f32 %v4597, %v4597
  %v4682 = vmul.f32 %v4598, %v4598
  %v4683 = vmul.f32 %v4599, %v4599
  %v4684 = vmul.f32 %v4600, %v4600
  %v4685 = vmul.f32 %v4601, %v4601
  %v4686 = vmul.f32 %v4602, %v4602
  %v4687 = vmul.f32 %v4603, %v4603
  %v4688 = vmul.f32 %v4604, %v4604
  %v4689 = vmul.f32 %v4605, %v4605
  %v4690 = vmul.f32 %v4606, %v4606
  %v4691 = vmul.f32 %v4607, %v4607
  %v4692 = vmul.f32 %v4608, %v4608
  %v4693 = vmul.f32 %v4609, %v4609
  %v4694 = vmul.f32 %v4610, %v4610
  %v4695 = vmul.f32 %v4611, %v4611
  %v4696 = vmul.f32 %v4612, %v4612
  %v4697 = vmul.f32 %v4613, %v4613
  %v4698 = vmul.f32 %v4614, %v4614
  %v4699 = vmul.f32 %v4615, %v4615
  %v4700 = vmul.f32 %v4616, %v4616
  %v4701 = vmul.f32 %v4617, %v4617
  %v4702 = vmul.f32 %v4618, %v4618
  %v4703 = vsub.f32 %v4619, %v4661
  %v4704 = vsub.f32 %v4620, %v4662
  %v4705 = vsub.f32 %v4621, %v4663
  %v4706 = vsub.f32 %v4622, %v4664
  %v4707 = vsub.f32 %v4623, %v4665
  %v4708 = vsub.f32 %v4624, %v4666
  %v4709 = vsub.f32 %v4625, %v4667
  %v4710 = vsub.f32 %v4626, %v4668
  %v4711 = vsub.f32 %v4627, %v4669
  %v4712 = vsub.f32 %v4628, %v4670
  %v4713 = vsub.f32 %v4629, %v4671
  %v4714 = vsub.f32 %v4630, %v4672
  %v4715 = vsub.f32 %v4631, %v4673
  %v4716 = vsub.f32 %v4632, %v4674
  %v4717 = vsub.f32 %v4633, %v4675
  %v4718 = vsub.f32 %v4634, %v4676
  %v4719 = vsub.f32 %v4635, %v4677
  %v4720 = vsub.f32 %v4636, %v4678
  %v4721 = vsub.f32 %v4637, %v4679
  %v4722 = vsub.f32 %v4638, %v4680
  %v4723 = vsub.f32 %v4639, %v4681
  %v4724 = vsub.f32 %v4640, %v4682
  %v4725 = vsub.f32 %v4641, %v4683
  %v4726 = vsub.f32 %v4642, %v4684
  %v4727 = vsub.f32 %v4643, %v4685
  %v4728 = vsub.f32 %v4644, %v4686
  %v4729 = vsub.f32 %v4645, %v4687
  %v4730 = vsub.f32 %v4646, %v4688
  %v4731 = vsub.f32 %v4647, %v4689
  %v4732 = vsub.f32 %v4648, %v4690
  %v4733 = vsub.f32 %v4649, %v4691
  %v4734 = vsub.f32 %v4650, %v4692
  %v4735 = vsub.f32 %v4651, %v4693
  %v4736 = vsub.f32 %v4652, %v4694
  %v4737 = vsub.f32 %v4653, %v4695
  %v4738 = vsub.f32 %v4654, %v4696
  %v4739 = vsub.f32 %v4655, %v4697
  %v4740 = vsub.f32 %v4656, %v4698
  %v4741 = vsub.f32 %v4657, %v4699
  %v4742 = vsub.f32 %v4658, %v4700
  %v4743 = vsub.f32 %v4659, %v4701
  %v4744 = vsub.f32 %v4660, %v4702
  %v4745 = vld [vmem:[%s7] sm:$0xff]
  %v4746 = vld [vmem:[%s7 + $0x8] sm:$0xff]
  %v4747 = vld [vmem:[%s7 + $0x10] sm:$0xff]
  %v4748 = vld [vmem:[%s7 + $0x18] sm:$0xff]
  %v4749 = vld [vmem:[%s7 + $0x20] sm:$0xff]
  %v4750 = vld [vmem:[%s7 + $0x28] sm:$0xff]
  %v4751 = vld [vmem:[%s7 + $0x30] sm:$0xff]
  %v4752 = vld [vmem:[%s7 + $0x38] sm:$0xff]
  %v4753 = vld [vmem:[%s7 + $0x40] sm:$0xff]
  %v4754 = vld [vmem:[%s7 + $0x48] sm:$0xff]
  %v4755 = vld [vmem:[%s7 + $0x50] sm:$0xff]
  %v4756 = vld [vmem:[%s7 + $0x58] sm:$0xff]
  %v4757 = vld [vmem:[%s7 + $0x60] sm:$0xff]
  %v4758 = vld [vmem:[%s7 + $0x68] sm:$0xff]
  %v4759 = vld [vmem:[%s7 + $0x70] sm:$0xff]
  %v4760 = vld [vmem:[%s7 + $0x78] sm:$0xff]
  %v4761 = vld [vmem:[%s7 + $0x80] sm:$0xff]
  %v4762 = vld [vmem:[%s7 + $0x88] sm:$0xff]
  %v4763 = vld [vmem:[%s7 + $0x90] sm:$0xff]
  %v4764 = vld [vmem:[%s7 + $0x98] sm:$0xff]
  %v4765 = vld [vmem:[%s7 + $0xa0] sm:$0xff]
  %v4766 = vld [vmem:[%s7 + $0xa8] sm:$0xff]
  %v4767 = vld [vmem:[%s7 + $0xb0] sm:$0xff]
  %v4768 = vld [vmem:[%s7 + $0xb8] sm:$0xff]
  %v4769 = vld [vmem:[%s7 + $0xc0] sm:$0xff]
  %v4770 = vld [vmem:[%s7 + $0xc8] sm:$0xff]
  %v4771 = vld [vmem:[%s7 + $0xd0] sm:$0xff]
  %v4772 = vld [vmem:[%s7 + $0xd8] sm:$0xff]
  %v4773 = vld [vmem:[%s7 + $0xe0] sm:$0xff]
  %v4774 = vld [vmem:[%s7 + $0xe8] sm:$0xff]
  %v4775 = vld [vmem:[%s7 + $0xf0] sm:$0xff]
  %v4776 = vld [vmem:[%s7 + $0xf8] sm:$0xff]
  %v4777 = vld [vmem:[%s7 + $0x100] sm:$0xff]
  %v4778 = vld [vmem:[%s7 + $0x108] sm:$0xff]
  %v4779 = vld [vmem:[%s7 + $0x110] sm:$0xff]
  %v4780 = vld [vmem:[%s7 + $0x118] sm:$0xff]
  %v4781 = vld [vmem:[%s7 + $0x120] sm:$0xff]
  %v4782 = vld [vmem:[%s7 + $0x128] sm:$0xff]
  %v4783 = vld [vmem:[%s7 + $0x130] sm:$0xff]
  %v4784 = vld [vmem:[%s7 + $0x138] sm:$0xff]
  %v4785 = vld [vmem:[%s7 + $0x140] sm:$0xff]
  %v4786 = vld [vmem:[%s7 + $0x148] sm:$0xff]
  %v4787 = vadd.f32 %v4703, 1e-05
  %v4788 = vadd.f32 %v4704, 1e-05
  %v4789 = vadd.f32 %v4705, 1e-05
  %v4790 = vadd.f32 %v4706, 1e-05
  %v4791 = vadd.f32 %v4707, 1e-05
  %v4792 = vadd.f32 %v4708, 1e-05
  %v4793 = vadd.f32 %v4709, 1e-05
  %v4794 = vadd.f32 %v4710, 1e-05
  %v4795 = vadd.f32 %v4711, 1e-05
  %v4796 = vadd.f32 %v4712, 1e-05
  %v4797 = vadd.f32 %v4713, 1e-05
  %v4798 = vadd.f32 %v4714, 1e-05
  %v4799 = vadd.f32 %v4715, 1e-05
  %v4800 = vadd.f32 %v4716, 1e-05
  %v4801 = vadd.f32 %v4717, 1e-05
  %v4802 = vadd.f32 %v4718, 1e-05
  %v4803 = vadd.f32 %v4719, 1e-05
  %v4804 = vadd.f32 %v4720, 1e-05
  %v4805 = vadd.f32 %v4721, 1e-05
  %v4806 = vadd.f32 %v4722, 1e-05
  %v4807 = vadd.f32 %v4723, 1e-05
  %v4808 = vadd.f32 %v4724, 1e-05
  %v4809 = vadd.f32 %v4725, 1e-05
  %v4810 = vadd.f32 %v4726, 1e-05
  %v4811 = vadd.f32 %v4727, 1e-05
  %v4812 = vadd.f32 %v4728, 1e-05
  %v4813 = vadd.f32 %v4729, 1e-05
  %v4814 = vadd.f32 %v4730, 1e-05
  %v4815 = vadd.f32 %v4731, 1e-05
  %v4816 = vadd.f32 %v4732, 1e-05
  %v4817 = vadd.f32 %v4733, 1e-05
  %v4818 = vadd.f32 %v4734, 1e-05
  %v4819 = vadd.f32 %v4735, 1e-05
  %v4820 = vadd.f32 %v4736, 1e-05
  %v4821 = vadd.f32 %v4737, 1e-05
  %v4822 = vadd.f32 %v4738, 1e-05
  %v4823 = vadd.f32 %v4739, 1e-05
  %v4824 = vadd.f32 %v4740, 1e-05
  %v4825 = vadd.f32 %v4741, 1e-05
  %v4826 = vadd.f32 %v4742, 1e-05
  %v4827 = vadd.f32 %v4743, 1e-05
  %v4828 = vadd.f32 %v4744, 1e-05
  %v4829 = vrsqrt.pop %v4787
  %v4830 = vrsqrt.pop %v4788
  %v4831 = vrsqrt.pop %v4789
  %v4832 = vrsqrt.pop %v4790
  %v4833 = vrsqrt.pop %v4791
  %v4834 = vrsqrt.pop %v4792
  %v4835 = vrsqrt.pop %v4793
  %v4836 = vrsqrt.pop %v4794
  %v4837 = vrsqrt.pop %v4795
  %v4838 = vrsqrt.pop %v4796
  %v4839 = vrsqrt.pop %v4797
  %v4840 = vrsqrt.pop %v4798
  %v4841 = vrsqrt.pop %v4799
  %v4842 = vrsqrt.pop %v4800
  %v4843 = vrsqrt.pop %v4801
  %v4844 = vrsqrt.pop %v4802
  %v4845 = vrsqrt.pop %v4803
  %v4846 = vrsqrt.pop %v4804
  %v4847 = vrsqrt.pop %v4805
  %v4848 = vrsqrt.pop %v4806
  %v4849 = vrsqrt.pop %v4807
  %v4850 = vrsqrt.pop %v4808
  %v4851 = vrsqrt.pop %v4809
  %v4852 = vrsqrt.pop %v4810
  %v4853 = vrsqrt.pop %v4811
  %v4854 = vrsqrt.pop %v4812
  %v4855 = vrsqrt.pop %v4813
  %v4856 = vrsqrt.pop %v4814
  %v4857 = vrsqrt.pop %v4815
  %v4858 = vrsqrt.pop %v4816
  %v4859 = vrsqrt.pop %v4817
  %v4860 = vrsqrt.pop %v4818
  %v4861 = vrsqrt.pop %v4819
  %v4862 = vrsqrt.pop %v4820
  %v4863 = vrsqrt.pop %v4821
  %v4864 = vrsqrt.pop %v4822
  %v4865 = vrsqrt.pop %v4823
  %v4866 = vrsqrt.pop %v4824
  %v4867 = vrsqrt.pop %v4825
  %v4868 = vrsqrt.pop %v4826
  %v4869 = vrsqrt.pop %v4827
  %v4870 = vrsqrt.pop %v4828
  %v4871 = vmul.f32 %v4745, %v4829
  %v4872 = vmul.f32 %v4746, %v4830
  %v4873 = vmul.f32 %v4747, %v4831
  %v4874 = vmul.f32 %v4748, %v4832
  %v4875 = vmul.f32 %v4749, %v4833
  %v4876 = vmul.f32 %v4750, %v4834
  %v4877 = vmul.f32 %v4751, %v4835
  %v4878 = vmul.f32 %v4752, %v4836
  %v4879 = vmul.f32 %v4753, %v4837
  %v4880 = vmul.f32 %v4754, %v4838
  %v4881 = vmul.f32 %v4755, %v4839
  %v4882 = vmul.f32 %v4756, %v4840
  %v4883 = vmul.f32 %v4757, %v4841
  %v4884 = vmul.f32 %v4758, %v4842
  %v4885 = vmul.f32 %v4759, %v4843
  %v4886 = vmul.f32 %v4760, %v4844
  %v4887 = vmul.f32 %v4761, %v4845
  %v4888 = vmul.f32 %v4762, %v4846
  %v4889 = vmul.f32 %v4763, %v4847
  %v4890 = vmul.f32 %v4764, %v4848
  %v4891 = vmul.f32 %v4765, %v4849
  %v4892 = vmul.f32 %v4766, %v4850
  %v4893 = vmul.f32 %v4767, %v4851
  %v4894 = vmul.f32 %v4768, %v4852
  %v4895 = vmul.f32 %v4769, %v4853
  %v4896 = vmul.f32 %v4770, %v4854
  %v4897 = vmul.f32 %v4771, %v4855
  %v4898 = vmul.f32 %v4772, %v4856
  %v4899 = vmul.f32 %v4773, %v4857
  %v4900 = vmul.f32 %v4774, %v4858
  %v4901 = vmul.f32 %v4775, %v4859
  %v4902 = vmul.f32 %v4776, %v4860
  %v4903 = vmul.f32 %v4777, %v4861
  %v4904 = vmul.f32 %v4778, %v4862
  %v4905 = vmul.f32 %v4779, %v4863
  %v4906 = vmul.f32 %v4780, %v4864
  %v4907 = vmul.f32 %v4781, %v4865
  %v4908 = vmul.f32 %v4782, %v4866
  %v4909 = vmul.f32 %v4783, %v4867
  %v4910 = vmul.f32 %v4784, %v4868
  %v4911 = vmul.f32 %v4785, %v4869
  %v4912 = vmul.f32 %v4786, %v4870
  %v4913 = vld [vmem:[%s8] sm:$0xff]
  %v4914 = vld [vmem:[%s8 + $0x8] sm:$0xff]
  %v4915 = vld [vmem:[%s8 + $0x10] sm:$0xff]
  %v4916 = vld [vmem:[%s8 + $0x18] sm:$0xff]
  %v4917 = vld [vmem:[%s8 + $0x20] sm:$0xff]
  %v4918 = vld [vmem:[%s8 + $0x28] sm:$0xff]
  %v4919 = vld [vmem:[%s8 + $0x30] sm:$0xff]
  %v4920 = vld [vmem:[%s8 + $0x38] sm:$0xff]
  %v4921 = vld [vmem:[%s8 + $0x40] sm:$0xff]
  %v4922 = vld [vmem:[%s8 + $0x48] sm:$0xff]
  %v4923 = vld [vmem:[%s8 + $0x50] sm:$0xff]
  %v4924 = vld [vmem:[%s8 + $0x58] sm:$0xff]
  %v4925 = vld [vmem:[%s8 + $0x60] sm:$0xff]
  %v4926 = vld [vmem:[%s8 + $0x68] sm:$0xff]
  %v4927 = vld [vmem:[%s8 + $0x70] sm:$0xff]
  %v4928 = vld [vmem:[%s8 + $0x78] sm:$0xff]
  %v4929 = vld [vmem:[%s8 + $0x80] sm:$0xff]
  %v4930 = vld [vmem:[%s8 + $0x88] sm:$0xff]
  %v4931 = vld [vmem:[%s8 + $0x90] sm:$0xff]
  %v4932 = vld [vmem:[%s8 + $0x98] sm:$0xff]
  %v4933 = vld [vmem:[%s8 + $0xa0] sm:$0xff]
  %v4934 = vld [vmem:[%s8 + $0xa8] sm:$0xff]
  %v4935 = vld [vmem:[%s8 + $0xb0] sm:$0xff]
  %v4936 = vld [vmem:[%s8 + $0xb8] sm:$0xff]
  %v4937 = vld [vmem:[%s8 + $0xc0] sm:$0xff]
  %v4938 = vld [vmem:[%s8 + $0xc8] sm:$0xff]
  %v4939 = vld [vmem:[%s8 + $0xd0] sm:$0xff]
  %v4940 = vld [vmem:[%s8 + $0xd8] sm:$0xff]
  %v4941 = vld [vmem:[%s8 + $0xe0] sm:$0xff]
  %v4942 = vld [vmem:[%s8 + $0xe8] sm:$0xff]
  %v4943 = vld [vmem:[%s8 + $0xf0] sm:$0xff]
  %v4944 = vld [vmem:[%s8 + $0xf8] sm:$0xff]
  %v4945 = vld [vmem:[%s8 + $0x100] sm:$0xff]
  %v4946 = vld [vmem:[%s8 + $0x108] sm:$0xff]
  %v4947 = vld [vmem:[%s8 + $0x110] sm:$0xff]
  %v4948 = vld [vmem:[%s8 + $0x118] sm:$0xff]
  %v4949 = vld [vmem:[%s8 + $0x120] sm:$0xff]
  %v4950 = vld [vmem:[%s8 + $0x128] sm:$0xff]
  %v4951 = vld [vmem:[%s8 + $0x130] sm:$0xff]
  %v4952 = vld [vmem:[%s8 + $0x138] sm:$0xff]
  %v4953 = vld [vmem:[%s8 + $0x140] sm:$0xff]
  %v4954 = vld [vmem:[%s8 + $0x148] sm:$0xff]
  %v4955 = vmul.f32 %v4577, %v4871
  %v4956 = vmul.f32 %v4578, %v4872
  %v4957 = vmul.f32 %v4579, %v4873
  %v4958 = vmul.f32 %v4580, %v4874
  %v4959 = vmul.f32 %v4581, %v4875
  %v4960 = vmul.f32 %v4582, %v4876
  %v4961 = vmul.f32 %v4583, %v4877
  %v4962 = vmul.f32 %v4584, %v4878
  %v4963 = vmul.f32 %v4585, %v4879
  %v4964 = vmul.f32 %v4586, %v4880
  %v4965 = vmul.f32 %v4587, %v4881
  %v4966 = vmul.f32 %v4588, %v4882
  %v4967 = vmul.f32 %v4589, %v4883
  %v4968 = vmul.f32 %v4590, %v4884
  %v4969 = vmul.f32 %v4591, %v4885
  %v4970 = vmul.f32 %v4592, %v4886
  %v4971 = vmul.f32 %v4593, %v4887
  %v4972 = vmul.f32 %v4594, %v4888
  %v4973 = vmul.f32 %v4595, %v4889
  %v4974 = vmul.f32 %v4596, %v4890
  %v4975 = vmul.f32 %v4597, %v4891
  %v4976 = vmul.f32 %v4598, %v4892
  %v4977 = vmul.f32 %v4599, %v4893
  %v4978 = vmul.f32 %v4600, %v4894
  %v4979 = vmul.f32 %v4601, %v4895
  %v4980 = vmul.f32 %v4602, %v4896
  %v4981 = vmul.f32 %v4603, %v4897
  %v4982 = vmul.f32 %v4604, %v4898
  %v4983 = vmul.f32 %v4605, %v4899
  %v4984 = vmul.f32 %v4606, %v4900
  %v4985 = vmul.f32 %v4607, %v4901
  %v4986 = vmul.f32 %v4608, %v4902
  %v4987 = vmul.f32 %v4609, %v4903
  %v4988 = vmul.f32 %v4610, %v4904
  %v4989 = vmul.f32 %v4611, %v4905
  %v4990 = vmul.f32 %v4612, %v4906
  %v4991 = vmul.f32 %v4613, %v4907
  %v4992 = vmul.f32 %v4614, %v4908
  %v4993 = vmul.f32 %v4615, %v4909
  %v4994 = vmul.f32 %v4616, %v4910
  %v4995 = vmul.f32 %v4617, %v4911
  %v4996 = vmul.f32 %v4618, %v4912
  %v4997 = vsub.f32 %v4913, %v4955
  %v4998 = vsub.f32 %v4914, %v4956
  %v4999 = vsub.f32 %v4915, %v4957
  %v5000 = vsub.f32 %v4916, %v4958
  %v5001 = vsub.f32 %v4917, %v4959
  %v5002 = vsub.f32 %v4918, %v4960
  %v5003 = vsub.f32 %v4919, %v4961
  %v5004 = vsub.f32 %v4920, %v4962
  %v5005 = vsub.f32 %v4921, %v4963
  %v5006 = vsub.f32 %v4922, %v4964
  %v5007 = vsub.f32 %v4923, %v4965
  %v5008 = vsub.f32 %v4924, %v4966
  %v5009 = vsub.f32 %v4925, %v4967
  %v5010 = vsub.f32 %v4926, %v4968
  %v5011 = vsub.f32 %v4927, %v4969
  %v5012 = vsub.f32 %v4928, %v4970
  %v5013 = vsub.f32 %v4929, %v4971
  %v5014 = vsub.f32 %v4930, %v4972
  %v5015 = vsub.f32 %v4931, %v4973
  %v5016 = vsub.f32 %v4932, %v4974
  %v5017 = vsub.f32 %v4933, %v4975
  %v5018 = vsub.f32 %v4934, %v4976
  %v5019 = vsub.f32 %v4935, %v4977
  %v5020 = vsub.f32 %v4936, %v4978
  %v5021 = vsub.f32 %v4937, %v4979
  %v5022 = vsub.f32 %v4938, %v4980
  %v5023 = vsub.f32 %v4939, %v4981
  %v5024 = vsub.f32 %v4940, %v4982
  %v5025 = vsub.f32 %v4941, %v4983
  %v5026 = vsub.f32 %v4942, %v4984
  %v5027 = vsub.f32 %v4943, %v4985
  %v5028 = vsub.f32 %v4944, %v4986
  %v5029 = vsub.f32 %v4945, %v4987
  %v5030 = vsub.f32 %v4946, %v4988
  %v5031 = vsub.f32 %v4947, %v4989
  %v5032 = vsub.f32 %v4948, %v4990
  %v5033 = vsub.f32 %v4949, %v4991
  %v5034 = vsub.f32 %v4950, %v4992
  %v5035 = vsub.f32 %v4951, %v4993
  %v5036 = vsub.f32 %v4952, %v4994
  %v5037 = vsub.f32 %v4953, %v4995
  %v5038 = vsub.f32 %v4954, %v4996
  %5040 = vset.pattern.permute.xlu0 0
  %5041 = vperm.xlu0 %5040, %v4871
  %v5042 = vpop.permute.xlu0 %5041
  %5045 = vset.pattern.permute.xlu0 0
  %5046 = vperm.xlu0 %5045, %v4872
  %v5047 = vpop.permute.xlu0 %5046
  %5050 = vset.pattern.permute.xlu0 0
  %5051 = vperm.xlu0 %5050, %v4873
  %v5052 = vpop.permute.xlu0 %5051
  %5055 = vset.pattern.permute.xlu0 0
  %5056 = vperm.xlu0 %5055, %v4874
  %v5057 = vpop.permute.xlu0 %5056
  %5060 = vset.pattern.permute.xlu0 0
  %5061 = vperm.xlu0 %5060, %v4875
  %v5062 = vpop.permute.xlu0 %5061
  %5065 = vset.pattern.permute.xlu0 0
  %5066 = vperm.xlu0 %5065, %v4876
  %v5067 = vpop.permute.xlu0 %5066
  %5070 = vset.pattern.permute.xlu0 0
  %5071 = vperm.xlu0 %5070, %v4877
  %v5072 = vpop.permute.xlu0 %5071
  %5075 = vset.pattern.permute.xlu0 0
  %5076 = vperm.xlu0 %5075, %v4878
  %v5077 = vpop.permute.xlu0 %5076
  %5080 = vset.pattern.permute.xlu0 0
  %5081 = vperm.xlu0 %5080, %v4879
  %v5082 = vpop.permute.xlu0 %5081
  %5085 = vset.pattern.permute.xlu0 0
  %5086 = vperm.xlu0 %5085, %v4880
  %v5087 = vpop.permute.xlu0 %5086
  %5090 = vset.pattern.permute.xlu0 0
  %5091 = vperm.xlu0 %5090, %v4881
  %v5092 = vpop.permute.xlu0 %5091
  %5095 = vset.pattern.permute.xlu0 0
  %5096 = vperm.xlu0 %5095, %v4882
  %v5097 = vpop.permute.xlu0 %5096
  %5100 = vset.pattern.permute.xlu0 0
  %5101 = vperm.xlu0 %5100, %v4883
  %v5102 = vpop.permute.xlu0 %5101
  %5105 = vset.pattern.permute.xlu0 0
  %5106 = vperm.xlu0 %5105, %v4884
  %v5107 = vpop.permute.xlu0 %5106
  %5110 = vset.pattern.permute.xlu0 0
  %5111 = vperm.xlu0 %5110, %v4885
  %v5112 = vpop.permute.xlu0 %5111
  %5115 = vset.pattern.permute.xlu0 0
  %5116 = vperm.xlu0 %5115, %v4886
  %v5117 = vpop.permute.xlu0 %5116
  %5120 = vset.pattern.permute.xlu0 0
  %5121 = vperm.xlu0 %5120, %v4887
  %v5122 = vpop.permute.xlu0 %5121
  %5125 = vset.pattern.permute.xlu0 0
  %5126 = vperm.xlu0 %5125, %v4888
  %v5127 = vpop.permute.xlu0 %5126
  %5130 = vset.pattern.permute.xlu0 0
  %5131 = vperm.xlu0 %5130, %v4889
  %v5132 = vpop.permute.xlu0 %5131
  %5135 = vset.pattern.permute.xlu0 0
  %5136 = vperm.xlu0 %5135, %v4890
  %v5137 = vpop.permute.xlu0 %5136
  %5140 = vset.pattern.permute.xlu0 0
  %5141 = vperm.xlu0 %5140, %v4891
  %v5142 = vpop.permute.xlu0 %5141
  %5145 = vset.pattern.permute.xlu0 0
  %5146 = vperm.xlu0 %5145, %v4892
  %v5147 = vpop.permute.xlu0 %5146
  %5150 = vset.pattern.permute.xlu0 0
  %5151 = vperm.xlu0 %5150, %v4893
  %v5152 = vpop.permute.xlu0 %5151
  %5155 = vset.pattern.permute.xlu0 0
  %5156 = vperm.xlu0 %5155, %v4894
  %v5157 = vpop.permute.xlu0 %5156
  %5160 = vset.pattern.permute.xlu0 0
  %5161 = vperm.xlu0 %5160, %v4895
  %v5162 = vpop.permute.xlu0 %5161
  %5165 = vset.pattern.permute.xlu0 0
  %5166 = vperm.xlu0 %5165, %v4896
  %v5167 = vpop.permute.xlu0 %5166
  %5170 = vset.pattern.permute.xlu0 0
  %5171 = vperm.xlu0 %5170, %v4897
  %v5172 = vpop.permute.xlu0 %5171
  %5175 = vset.pattern.permute.xlu0 0
  %5176 = vperm.xlu0 %5175, %v4898
  %v5177 = vpop.permute.xlu0 %5176
  %5180 = vset.pattern.permute.xlu0 0
  %5181 = vperm.xlu0 %5180, %v4899
  %v5182 = vpop.permute.xlu0 %5181
  %5185 = vset.pattern.permute.xlu0 0
  %5186 = vperm.xlu0 %5185, %v4900
  %v5187 = vpop.permute.xlu0 %5186
  %5190 = vset.pattern.permute.xlu0 0
  %5191 = vperm.xlu0 %5190, %v4901
  %v5192 = vpop.permute.xlu0 %5191
  %5195 = vset.pattern.permute.xlu0 0
  %5196 = vperm.xlu0 %5195, %v4902
  %v5197 = vpop.permute.xlu0 %5196
  %5200 = vset.pattern.permute.xlu0 0
  %5201 = vperm.xlu0 %5200, %v4903
  %v5202 = vpop.permute.xlu0 %5201
  %5205 = vset.pattern.permute.xlu0 0
  %5206 = vperm.xlu0 %5205, %v4904
  %v5207 = vpop.permute.xlu0 %5206
  %5210 = vset.pattern.permute.xlu0 0
  %5211 = vperm.xlu0 %5210, %v4905
  %v5212 = vpop.permute.xlu0 %5211
  %5215 = vset.pattern.permute.xlu0 0
  %5216 = vperm.xlu0 %5215, %v4906
  %v5217 = vpop.permute.xlu0 %5216
  %5220 = vset.pattern.permute.xlu0 0
  %5221 = vperm.xlu0 %5220, %v4907
  %v5222 = vpop.permute.xlu0 %5221
  %5225 = vset.pattern.permute.xlu0 0
  %5226 = vperm.xlu0 %5225, %v4908
  %v5227 = vpop.permute.xlu0 %5226
  %5230 = vset.pattern.permute.xlu0 0
  %5231 = vperm.xlu0 %5230, %v4909
  %v5232 = vpop.permute.xlu0 %5231
  %5235 = vset.pattern.permute.xlu0 0
  %5236 = vperm.xlu0 %5235, %v4910
  %v5237 = vpop.permute.xlu0 %5236
  %5240 = vset.pattern.permute.xlu0 0
  %5241 = vperm.xlu0 %5240, %v4911
  %v5242 = vpop.permute.xlu0 %5241
  %5245 = vset.pattern.permute.xlu0 0
  %5246 = vperm.xlu0 %5245, %v4912
  %v5247 = vpop.permute.xlu0 %5246
  %v5249 = vmul.f32 %v3949, %v5042
  %v5250 = vmul.f32 %v3951, %v5042
  %v5251 = vmul.f32 %v3953, %v5047
  %v5252 = vmul.f32 %v3955, %v5047
  %v5253 = vmul.f32 %v3959, %v5052
  %v5254 = vmul.f32 %v3961, %v5052
  %v5255 = vmul.f32 %v3963, %v5057
  %v5256 = vmul.f32 %v3965, %v5057
  %v5257 = vmul.f32 %v3969, %v5062
  %v5258 = vmul.f32 %v3971, %v5062
  %v5259 = vmul.f32 %v3973, %v5067
  %v5260 = vmul.f32 %v3975, %v5067
  %v5261 = vmul.f32 %v3979, %v5072
  %v5262 = vmul.f32 %v3981, %v5072
  %v5263 = vmul.f32 %v3983, %v5077
  %v5264 = vmul.f32 %v3985, %v5077
  %v5265 = vmul.f32 %v3989, %v5082
  %v5266 = vmul.f32 %v3991, %v5082
  %v5267 = vmul.f32 %v3993, %v5087
  %v5268 = vmul.f32 %v3995, %v5087
  %v5269 = vmul.f32 %v3999, %v5092
  %v5270 = vmul.f32 %v4001, %v5092
  %v5271 = vmul.f32 %v4003, %v5097
  %v5272 = vmul.f32 %v4005, %v5097
  %v5273 = vmul.f32 %v4009, %v5102
  %v5274 = vmul.f32 %v4011, %v5102
  %v5275 = vmul.f32 %v4013, %v5107
  %v5276 = vmul.f32 %v4015, %v5107
  %v5277 = vmul.f32 %v4019, %v5112
  %v5278 = vmul.f32 %v4021, %v5112
  %v5279 = vmul.f32 %v4023, %v5117
  %v5280 = vmul.f32 %v4025, %v5117
  %v5281 = vmul.f32 %v4029, %v5122
  %v5282 = vmul.f32 %v4031, %v5122
  %v5283 = vmul.f32 %v4033, %v5127
  %v5284 = vmul.f32 %v4035, %v5127
  %v5285 = vmul.f32 %v4039, %v5132
  %v5286 = vmul.f32 %v4041, %v5132
  %v5287 = vmul.f32 %v4043, %v5137
  %v5288 = vmul.f32 %v4045, %v5137
  %v5289 = vmul.f32 %v4049, %v5142
  %v5290 = vmul.f32 %v4051, %v5142
  %v5291 = vmul.f32 %v4053, %v5147
  %v5292 = vmul.f32 %v4055, %v5147
  %v5293 = vmul.f32 %v4059, %v5152
  %v5294 = vmul.f32 %v4061, %v5152
  %v5295 = vmul.f32 %v4063, %v5157
  %v5296 = vmul.f32 %v4065, %v5157
  %v5297 = vmul.f32 %v4069, %v5162
  %v5298 = vmul.f32 %v4071, %v5162
  %v5299 = vmul.f32 %v4073, %v5167
  %v5300 = vmul.f32 %v4075, %v5167
  %v5301 = vmul.f32 %v4079, %v5172
  %v5302 = vmul.f32 %v4081, %v5172
  %v5303 = vmul.f32 %v4083, %v5177
  %v5304 = vmul.f32 %v4085, %v5177
  %v5305 = vmul.f32 %v4089, %v5182
  %v5306 = vmul.f32 %v4091, %v5182
  %v5307 = vmul.f32 %v4093, %v5187
  %v5308 = vmul.f32 %v4095, %v5187
  %v5309 = vmul.f32 %v4099, %v5192
  %v5310 = vmul.f32 %v4101, %v5192
  %v5311 = vmul.f32 %v4103, %v5197
  %v5312 = vmul.f32 %v4105, %v5197
  %v5313 = vmul.f32 %v4109, %v5202
  %v5314 = vmul.f32 %v4111, %v5202
  %v5315 = vmul.f32 %v4113, %v5207
  %v5316 = vmul.f32 %v4115, %v5207
  %v5317 = vmul.f32 %v4119, %v5212
  %v5318 = vmul.f32 %v4121, %v5212
  %v5319 = vmul.f32 %v4123, %v5217
  %v5320 = vmul.f32 %v4125, %v5217
  %v5321 = vmul.f32 %v4129, %v5222
  %v5322 = vmul.f32 %v4131, %v5222
  %v5323 = vmul.f32 %v4133, %v5227
  %v5324 = vmul.f32 %v4135, %v5227
  %v5325 = vmul.f32 %v4139, %v5232
  %v5326 = vmul.f32 %v4141, %v5232
  %v5327 = vmul.f32 %v4143, %v5237
  %v5328 = vmul.f32 %v4145, %v5237
  %v5329 = vmul.f32 %v4149, %v5242
  %v5330 = vmul.f32 %v4151, %v5242
  %v5331 = vmul.f32 %v4153, %v5247
  %v5332 = vmul.f32 %v4155, %v5247
  %5334 = vset.pattern.permute.xlu0 0
  %5335 = vperm.xlu0 %5334, %v4997
  %v5336 = vpop.permute.xlu0 %5335
  %5339 = vset.pattern.permute.xlu0 0
  %5340 = vperm.xlu0 %5339, %v4998
  %v5341 = vpop.permute.xlu0 %5340
  %5344 = vset.pattern.permute.xlu0 0
  %5345 = vperm.xlu0 %5344, %v4999
  %v5346 = vpop.permute.xlu0 %5345
  %5349 = vset.pattern.permute.xlu0 0
  %5350 = vperm.xlu0 %5349, %v5000
  %v5351 = vpop.permute.xlu0 %5350
  %5354 = vset.pattern.permute.xlu0 0
  %5355 = vperm.xlu0 %5354, %v5001
  %v5356 = vpop.permute.xlu0 %5355
  %5359 = vset.pattern.permute.xlu0 0
  %5360 = vperm.xlu0 %5359, %v5002
  %v5361 = vpop.permute.xlu0 %5360
  %5364 = vset.pattern.permute.xlu0 0
  %5365 = vperm.xlu0 %5364, %v5003
  %v5366 = vpop.permute.xlu0 %5365
  %5369 = vset.pattern.permute.xlu0 0
  %5370 = vperm.xlu0 %5369, %v5004
  %v5371 = vpop.permute.xlu0 %5370
  %5374 = vset.pattern.permute.xlu0 0
  %5375 = vperm.xlu0 %5374, %v5005
  %v5376 = vpop.permute.xlu0 %5375
  %5379 = vset.pattern.permute.xlu0 0
  %5380 = vperm.xlu0 %5379, %v5006
  %v5381 = vpop.permute.xlu0 %5380
  %5384 = vset.pattern.permute.xlu0 0
  %5385 = vperm.xlu0 %5384, %v5007
  %v5386 = vpop.permute.xlu0 %5385
  %5389 = vset.pattern.permute.xlu0 0
  %5390 = vperm.xlu0 %5389, %v5008
  %v5391 = vpop.permute.xlu0 %5390
  %5394 = vset.pattern.permute.xlu0 0
  %5395 = vperm.xlu0 %5394, %v5009
  %v5396 = vpop.permute.xlu0 %5395
  %5399 = vset.pattern.permute.xlu0 0
  %5400 = vperm.xlu0 %5399, %v5010
  %v5401 = vpop.permute.xlu0 %5400
  %5404 = vset.pattern.permute.xlu0 0
  %5405 = vperm.xlu0 %5404, %v5011
  %v5406 = vpop.permute.xlu0 %5405
  %5409 = vset.pattern.permute.xlu0 0
  %5410 = vperm.xlu0 %5409, %v5012
  %v5411 = vpop.permute.xlu0 %5410
  %5414 = vset.pattern.permute.xlu0 0
  %5415 = vperm.xlu0 %5414, %v5013
  %v5416 = vpop.permute.xlu0 %5415
  %5419 = vset.pattern.permute.xlu0 0
  %5420 = vperm.xlu0 %5419, %v5014
  %v5421 = vpop.permute.xlu0 %5420
  %5424 = vset.pattern.permute.xlu0 0
  %5425 = vperm.xlu0 %5424, %v5015
  %v5426 = vpop.permute.xlu0 %5425
  %5429 = vset.pattern.permute.xlu0 0
  %5430 = vperm.xlu0 %5429, %v5016
  %v5431 = vpop.permute.xlu0 %5430
  %5434 = vset.pattern.permute.xlu0 0
  %5435 = vperm.xlu0 %5434, %v5017
  %v5436 = vpop.permute.xlu0 %5435
  %5439 = vset.pattern.permute.xlu0 0
  %5440 = vperm.xlu0 %5439, %v5018
  %v5441 = vpop.permute.xlu0 %5440
  %5444 = vset.pattern.permute.xlu0 0
  %5445 = vperm.xlu0 %5444, %v5019
  %v5446 = vpop.permute.xlu0 %5445
  %5449 = vset.pattern.permute.xlu0 0
  %5450 = vperm.xlu0 %5449, %v5020
  %v5451 = vpop.permute.xlu0 %5450
  %5454 = vset.pattern.permute.xlu0 0
  %5455 = vperm.xlu0 %5454, %v5021
  %v5456 = vpop.permute.xlu0 %5455
  %5459 = vset.pattern.permute.xlu0 0
  %5460 = vperm.xlu0 %5459, %v5022
  %v5461 = vpop.permute.xlu0 %5460
  %5464 = vset.pattern.permute.xlu0 0
  %5465 = vperm.xlu0 %5464, %v5023
  %v5466 = vpop.permute.xlu0 %5465
  %5469 = vset.pattern.permute.xlu0 0
  %5470 = vperm.xlu0 %5469, %v5024
  %v5471 = vpop.permute.xlu0 %5470
  %5474 = vset.pattern.permute.xlu0 0
  %5475 = vperm.xlu0 %5474, %v5025
  %v5476 = vpop.permute.xlu0 %5475
  %5479 = vset.pattern.permute.xlu0 0
  %5480 = vperm.xlu0 %5479, %v5026
  %v5481 = vpop.permute.xlu0 %5480
  %5484 = vset.pattern.permute.xlu0 0
  %5485 = vperm.xlu0 %5484, %v5027
  %v5486 = vpop.permute.xlu0 %5485
  %5489 = vset.pattern.permute.xlu0 0
  %5490 = vperm.xlu0 %5489, %v5028
  %v5491 = vpop.permute.xlu0 %5490
  %5494 = vset.pattern.permute.xlu0 0
  %5495 = vperm.xlu0 %5494, %v5029
  %v5496 = vpop.permute.xlu0 %5495
  %5499 = vset.pattern.permute.xlu0 0
  %5500 = vperm.xlu0 %5499, %v5030
  %v5501 = vpop.permute.xlu0 %5500
  %5504 = vset.pattern.permute.xlu0 0
  %5505 = vperm.xlu0 %5504, %v5031
  %v5506 = vpop.permute.xlu0 %5505
  %5509 = vset.pattern.permute.xlu0 0
  %5510 = vperm.xlu0 %5509, %v5032
  %v5511 = vpop.permute.xlu0 %5510
  %5514 = vset.pattern.permute.xlu0 0
  %5515 = vperm.xlu0 %5514, %v5033
  %v5516 = vpop.permute.xlu0 %5515
  %5519 = vset.pattern.permute.xlu0 0
  %5520 = vperm.xlu0 %5519, %v5034
  %v5521 = vpop.permute.xlu0 %5520
  %5524 = vset.pattern.permute.xlu0 0
  %5525 = vperm.xlu0 %5524, %v5035
  %v5526 = vpop.permute.xlu0 %5525
  %5529 = vset.pattern.permute.xlu0 0
  %5530 = vperm.xlu0 %5529, %v5036
  %v5531 = vpop.permute.xlu0 %5530
  %5534 = vset.pattern.permute.xlu0 0
  %5535 = vperm.xlu0 %5534, %v5037
  %v5536 = vpop.permute.xlu0 %5535
  %5539 = vset.pattern.permute.xlu0 0
  %5540 = vperm.xlu0 %5539, %v5038
  %v5541 = vpop.permute.xlu0 %5540
  %v5543 = vadd.f32 %v5249, %v5336
  %v5544 = vadd.f32 %v5250, %v5336
  %v5545 = vadd.f32 %v5251, %v5341
  %v5546 = vadd.f32 %v5252, %v5341
  %v5547 = vadd.f32 %v5253, %v5346
  %v5548 = vadd.f32 %v5254, %v5346
  %v5549 = vadd.f32 %v5255, %v5351
  %v5550 = vadd.f32 %v5256, %v5351
  %v5551 = vadd.f32 %v5257, %v5356
  %v5552 = vadd.f32 %v5258, %v5356
  %v5553 = vadd.f32 %v5259, %v5361
  %v5554 = vadd.f32 %v5260, %v5361
  %v5555 = vadd.f32 %v5261, %v5366
  %v5556 = vadd.f32 %v5262, %v5366
  %v5557 = vadd.f32 %v5263, %v5371
  %v5558 = vadd.f32 %v5264, %v5371
  %v5559 = vadd.f32 %v5265, %v5376
  %v5560 = vadd.f32 %v5266, %v5376
  %v5561 = vadd.f32 %v5267, %v5381
  %v5562 = vadd.f32 %v5268, %v5381
  %v5563 = vadd.f32 %v5269, %v5386
  %v5564 = vadd.f32 %v5270, %v5386
  %v5565 = vadd.f32 %v5271, %v5391
  %v5566 = vadd.f32 %v5272, %v5391
  %v5567 = vadd.f32 %v5273, %v5396
  %v5568 = vadd.f32 %v5274, %v5396
  %v5569 = vadd.f32 %v5275, %v5401
  %v5570 = vadd.f32 %v5276, %v5401
  %v5571 = vadd.f32 %v5277, %v5406
  %v5572 = vadd.f32 %v5278, %v5406
  %v5573 = vadd.f32 %v5279, %v5411
  %v5574 = vadd.f32 %v5280, %v5411
  %v5575 = vadd.f32 %v5281, %v5416
  %v5576 = vadd.f32 %v5282, %v5416
  %v5577 = vadd.f32 %v5283, %v5421
  %v5578 = vadd.f32 %v5284, %v5421
  %v5579 = vadd.f32 %v5285, %v5426
  %v5580 = vadd.f32 %v5286, %v5426
  %v5581 = vadd.f32 %v5287, %v5431
  %v5582 = vadd.f32 %v5288, %v5431
  %v5583 = vadd.f32 %v5289, %v5436
  %v5584 = vadd.f32 %v5290, %v5436
  %v5585 = vadd.f32 %v5291, %v5441
  %v5586 = vadd.f32 %v5292, %v5441
  %v5587 = vadd.f32 %v5293, %v5446
  %v5588 = vadd.f32 %v5294, %v5446
  %v5589 = vadd.f32 %v5295, %v5451
  %v5590 = vadd.f32 %v5296, %v5451
  %v5591 = vadd.f32 %v5297, %v5456
  %v5592 = vadd.f32 %v5298, %v5456
  %v5593 = vadd.f32 %v5299, %v5461
  %v5594 = vadd.f32 %v5300, %v5461
  %v5595 = vadd.f32 %v5301, %v5466
  %v5596 = vadd.f32 %v5302, %v5466
  %v5597 = vadd.f32 %v5303, %v5471
  %v5598 = vadd.f32 %v5304, %v5471
  %v5599 = vadd.f32 %v5305, %v5476
  %v5600 = vadd.f32 %v5306, %v5476
  %v5601 = vadd.f32 %v5307, %v5481
  %v5602 = vadd.f32 %v5308, %v5481
  %v5603 = vadd.f32 %v5309, %v5486
  %v5604 = vadd.f32 %v5310, %v5486
  %v5605 = vadd.f32 %v5311, %v5491
  %v5606 = vadd.f32 %v5312, %v5491
  %v5607 = vadd.f32 %v5313, %v5496
  %v5608 = vadd.f32 %v5314, %v5496
  %v5609 = vadd.f32 %v5315, %v5501
  %v5610 = vadd.f32 %v5316, %v5501
  %v5611 = vadd.f32 %v5317, %v5506
  %v5612 = vadd.f32 %v5318, %v5506
  %v5613 = vadd.f32 %v5319, %v5511
  %v5614 = vadd.f32 %v5320, %v5511
  %v5615 = vadd.f32 %v5321, %v5516
  %v5616 = vadd.f32 %v5322, %v5516
  %v5617 = vadd.f32 %v5323, %v5521
  %v5618 = vadd.f32 %v5324, %v5521
  %v5619 = vadd.f32 %v5325, %v5526
  %v5620 = vadd.f32 %v5326, %v5526
  %v5621 = vadd.f32 %v5327, %v5531
  %v5622 = vadd.f32 %v5328, %v5531
  %v5623 = vadd.f32 %v5329, %v5536
  %v5624 = vadd.f32 %v5330, %v5536
  %v5625 = vadd.f32 %v5331, %v5541
  %v5626 = vadd.f32 %v5332, %v5541
  %5627 = vst [vmem:[%s9] sm:$0xff] %v5543
  %5628 = vst.msk [vmem:[%s9 + $0x8] sm:$0xff] %vm1444, %v5544
  %5629 = vst [vmem:[%s9 + $0x10] sm:$0xff] %v5545
  %5630 = vst.msk [vmem:[%s9 + $0x18] sm:$0xff] %vm1444, %v5546
  %5631 = vst [vmem:[%s9 + $0x20] sm:$0xff] %v5547
  %5632 = vst.msk [vmem:[%s9 + $0x28] sm:$0xff] %vm1444, %v5548
  %5633 = vst [vmem:[%s9 + $0x30] sm:$0xff] %v5549
  %5634 = vst.msk [vmem:[%s9 + $0x38] sm:$0xff] %vm1444, %v5550
  %5635 = vst [vmem:[%s9 + $0x40] sm:$0xff] %v5551
  %5636 = vst.msk [vmem:[%s9 + $0x48] sm:$0xff] %vm1444, %v5552
  %5637 = vst [vmem:[%s9 + $0x50] sm:$0xff] %v5553
  %5638 = vst.msk [vmem:[%s9 + $0x58] sm:$0xff] %vm1444, %v5554
  %5639 = vst [vmem:[%s9 + $0x60] sm:$0xff] %v5555
  %5640 = vst.msk [vmem:[%s9 + $0x68] sm:$0xff] %vm1444, %v5556
  %5641 = vst [vmem:[%s9 + $0x70] sm:$0xff] %v5557
  %5642 = vst.msk [vmem:[%s9 + $0x78] sm:$0xff] %vm1444, %v5558
  %5643 = vst [vmem:[%s9 + $0x80] sm:$0xff] %v5559
  %5644 = vst.msk [vmem:[%s9 + $0x88] sm:$0xff] %vm1444, %v5560
  %5645 = vst [vmem:[%s9 + $0x90] sm:$0xff] %v5561
  %5646 = vst.msk [vmem:[%s9 + $0x98] sm:$0xff] %vm1444, %v5562
  %5647 = vst [vmem:[%s9 + $0xa0] sm:$0xff] %v5563
  %5648 = vst.msk [vmem:[%s9 + $0xa8] sm:$0xff] %vm1444, %v5564
  %5649 = vst [vmem:[%s9 + $0xb0] sm:$0xff] %v5565
  %5650 = vst.msk [vmem:[%s9 + $0xb8] sm:$0xff] %vm1444, %v5566
  %5651 = vst [vmem:[%s9 + $0xc0] sm:$0xff] %v5567
  %5652 = vst.msk [vmem:[%s9 + $0xc8] sm:$0xff] %vm1444, %v5568
  %5653 = vst [vmem:[%s9 + $0xd0] sm:$0xff] %v5569
  %5654 = vst.msk [vmem:[%s9 + $0xd8] sm:$0xff] %vm1444, %v5570
  %5655 = vst [vmem:[%s9 + $0xe0] sm:$0xff] %v5571
  %5656 = vst.msk [vmem:[%s9 + $0xe8] sm:$0xff] %vm1444, %v5572
  %5657 = vst [vmem:[%s9 + $0xf0] sm:$0xff] %v5573
  %5658 = vst.msk [vmem:[%s9 + $0xf8] sm:$0xff] %vm1444, %v5574
  %5659 = vst [vmem:[%s9 + $0x100] sm:$0xff] %v5575
  %5660 = vst.msk [vmem:[%s9 + $0x108] sm:$0xff] %vm1444, %v5576
  %5661 = vst [vmem:[%s9 + $0x110] sm:$0xff] %v5577
  %5662 = vst.msk [vmem:[%s9 + $0x118] sm:$0xff] %vm1444, %v5578
  %5663 = vst [vmem:[%s9 + $0x120] sm:$0xff] %v5579
  %5664 = vst.msk [vmem:[%s9 + $0x128] sm:$0xff] %vm1444, %v5580
  %5665 = vst [vmem:[%s9 + $0x130] sm:$0xff] %v5581
  %5666 = vst.msk [vmem:[%s9 + $0x138] sm:$0xff] %vm1444, %v5582
  %5667 = vst [vmem:[%s9 + $0x140] sm:$0xff] %v5583
  %5668 = vst.msk [vmem:[%s9 + $0x148] sm:$0xff] %vm1444, %v5584
  %5669 = vst [vmem:[%s9 + $0x150] sm:$0xff] %v5585
  %5670 = vst.msk [vmem:[%s9 + $0x158] sm:$0xff] %vm1444, %v5586
  %5671 = vst [vmem:[%s9 + $0x160] sm:$0xff] %v5587
  %5672 = vst.msk [vmem:[%s9 + $0x168] sm:$0xff] %vm1444, %v5588
  %5673 = vst [vmem:[%s9 + $0x170] sm:$0xff] %v5589
  %5674 = vst.msk [vmem:[%s9 + $0x178] sm:$0xff] %vm1444, %v5590
  %5675 = vst [vmem:[%s9 + $0x180] sm:$0xff] %v5591
  %5676 = vst.msk [vmem:[%s9 + $0x188] sm:$0xff] %vm1444, %v5592
  %5677 = vst [vmem:[%s9 + $0x190] sm:$0xff] %v5593
  %5678 = vst.msk [vmem:[%s9 + $0x198] sm:$0xff] %vm1444, %v5594
  %5679 = vst [vmem:[%s9 + $0x1a0] sm:$0xff] %v5595
  %5680 = vst.msk [vmem:[%s9 + $0x1a8] sm:$0xff] %vm1444, %v5596
  %5681 = vst [vmem:[%s9 + $0x1b0] sm:$0xff] %v5597
  %5682 = vst.msk [vmem:[%s9 + $0x1b8] sm:$0xff] %vm1444, %v5598
  %5683 = vst [vmem:[%s9 + $0x1c0] sm:$0xff] %v5599
  %5684 = vst.msk [vmem:[%s9 + $0x1c8] sm:$0xff] %vm1444, %v5600
  %5685 = vst [vmem:[%s9 + $0x1d0] sm:$0xff] %v5601
  %5686 = vst.msk [vmem:[%s9 + $0x1d8] sm:$0xff] %vm1444, %v5602
  %5687 = vst [vmem:[%s9 + $0x1e0] sm:$0xff] %v5603
  %5688 = vst.msk [vmem:[%s9 + $0x1e8] sm:$0xff] %vm1444, %v5604
  %5689 = vst [vmem:[%s9 + $0x1f0] sm:$0xff] %v5605
  %5690 = vst.msk [vmem:[%s9 + $0x1f8] sm:$0xff] %vm1444, %v5606
  %5691 = vst [vmem:[%s9 + $0x200] sm:$0xff] %v5607
  %5692 = vst.msk [vmem:[%s9 + $0x208] sm:$0xff] %vm1444, %v5608
  %5693 = vst [vmem:[%s9 + $0x210] sm:$0xff] %v5609
  %5694 = vst.msk [vmem:[%s9 + $0x218] sm:$0xff] %vm1444, %v5610
  %5695 = vst [vmem:[%s9 + $0x220] sm:$0xff] %v5611
  %5696 = vst.msk [vmem:[%s9 + $0x228] sm:$0xff] %vm1444, %v5612
  %5697 = vst [vmem:[%s9 + $0x230] sm:$0xff] %v5613
  %5698 = vst.msk [vmem:[%s9 + $0x238] sm:$0xff] %vm1444, %v5614
  %5699 = vst [vmem:[%s9 + $0x240] sm:$0xff] %v5615
  %5700 = vst.msk [vmem:[%s9 + $0x248] sm:$0xff] %vm1444, %v5616
  %5701 = vst [vmem:[%s9 + $0x250] sm:$0xff] %v5617
  %5702 = vst.msk [vmem:[%s9 + $0x258] sm:$0xff] %vm1444, %v5618
  %5703 = vst [vmem:[%s9 + $0x260] sm:$0xff] %v5619
  %5704 = vst.msk [vmem:[%s9 + $0x268] sm:$0xff] %vm1444, %v5620
  %5705 = vst [vmem:[%s9 + $0x270] sm:$0xff] %v5621
  %5706 = vst.msk [vmem:[%s9 + $0x278] sm:$0xff] %vm1444, %v5622
  %5707 = vst [vmem:[%s9 + $0x280] sm:$0xff] %v5623
  %5708 = vst.msk [vmem:[%s9 + $0x288] sm:$0xff] %vm1444, %v5624
  %5709 = vst [vmem:[%s9 + $0x290] sm:$0xff] %v5625
  %5710 = vst.msk [vmem:[%s9 + $0x298] sm:$0xff] %vm1444, %v5626
  // Predicated region
  $region38: #{fused_forward.1} parent=0 // pred_check
    _
  $region39: #{fused_forward.1} parent=0 // pred_check_branch
    %5712 = sbr.rel (0) target = $region41
  $region40: #{fused_forward.1} parent=0 // pred_region
    _
  $region41: #{fused_forward.1} parent=0 // pred_fallthru
    _
  // Predicated region
  $region42: #{fused_forward.1} parent=0 // pred_check
    _
  $region43: #{fused_forward.1} parent=0 // pred_check_branch
    %5714 = sbr.rel (0) target = $region45
  $region44: #{fused_forward.1} parent=0 // pred_region
    _
  $region45: #{fused_forward.1} parent=0 // pred_fallthru
    _

</llo_original>
